<compile_context>
chip_gen: v7x
topology: tpu7x:2x2x1
jax: 0.10.0
libtpu: 0.0.40
codegen_flags: <defaults>
</compile_context>

<pallas_src>
import functools
import math

import jax
import jax.numpy as jnp
from jax.experimental import pallas as pl
from jax.experimental.pallas import tpu as pltpu  # noqa: F401  (TPU backend)

# ----------------------- tiny-BERT config (synthetic) -----------------------
VOCAB = 100
TYPE_VOCAB = 2
MAX_POS = 16
HIDDEN = 32
N_HEADS = 4
HEAD_DIM = HIDDEN // N_HEADS
INTERMEDIATE = 64
N_LAYERS = 2
NUM_CLASSES = 2
LN_EPS = 1e-12
LOGIT_PAD = 128          # lane-dense classifier output width (sliced to NUM_CLASSES outside)

# bf16 MXU operands (f32 accumulate) for v6e/v7x; set to jnp.float32 for pure-f32 math.
MXU_DTYPE = jnp.bfloat16

# ---- consolidated weight-slab layout (column offsets are 128-lane aligned) ----
QKV_OFF, AO_OFF, INTER_OFF, W32_COLS = 0, 128, 256, 384      # (L, 32, 384) bf16 slab
POOL_OFF, FC_OFF, WHEAD_COLS = 0, 128, 256                   # (32, 256) bf16 slab

# ---- consolidated f32 vector-slab row layout ----
# per-layer slab: (L, 8, 128) f32 -- exactly one (8,128) vreg tile per layer
(ROW_QKV_B, ROW_AO_B, ROW_ALN_G, ROW_ALN_B,
 ROW_I_B, ROW_O_B, ROW_OLN_G, ROW_OLN_B) = range(8)
# head slab: (8, 128) f32
ROW_ELN_G, ROW_ELN_B, ROW_POOL_B, ROW_FC_B = range(4)


# ------------------------------ fused kernel --------------------------------
def _layernorm(x, g, b):
    """Row-wise LayerNorm over the last (hidden) axis, f32 math."""
    mu = jnp.mean(x, axis=-1, keepdims=True)
    var = jnp.mean(jnp.square(x - mu), axis=-1, keepdims=True)
    return (x - mu) * jax.lax.rsqrt(var + LN_EPS) * g + b


def _gelu_exact(x):
    """Exact (erf) GELU, matching torch.nn.functional.gelu default."""
    return 0.5 * x * (1.0 + jax.lax.erf(x * (1.0 / math.sqrt(2.0))))


def _bert_fused_kernel(emb_ref, bias_ref, vecl_ref, vech_ref,
                       w32_ref, w64_ref, whead_ref, out_ref, *, batch, seq):
    """Whole BERT encoder + pooler + fc for one (B*S, H) activation slab."""
    m = batch * seq

    # Additive attention bias already broadcast/tiled to (N_HEADS*B, S, S) on the
    # host (head-major to match the head-stacked batch axis below).  Loaded once:
    # zero in-kernel mask broadcasts.
    bias = bias_ref[...]

    # Head-level f32 vectors (one vreg).
    vh = vech_ref[...]                                           # (8, 128) f32

    # Embedding LayerNorm (all elementwise math stays f32 -- portable to v5e).
    h = _layernorm(emb_ref[...],
                   vh[ROW_ELN_G:ROW_ELN_G + 1, 0:HIDDEN],
                   vh[ROW_ELN_B:ROW_ELN_B + 1, 0:HIDDEN])

    for l in range(N_LAYERS):
        w32_l = w32_ref[l]        # (HIDDEN, 384) bf16: [qkv | attn_out | inter] slab
        w64_l = w64_ref[l]        # (INTERMEDIATE, HIDDEN) bf16: FFN output weight
        vl = vecl_ref[l]          # (8, 128) f32: all per-layer bias / LN vectors

        # ---- fused QKV projection: one (M, H) @ (H, 3H) MXU pass ----
        # (1/sqrt(HEAD_DIM) is folded into the Q weights/bias at pack time.)
        qkv = jnp.dot(h.astype(MXU_DTYPE),
                      w32_l[:, QKV_OFF:QKV_OFF + 3 * HIDDEN],
                      preferred_element_type=jnp.float32) \
            + vl[ROW_QKV_B:ROW_QKV_B + 1, 0:3 * HIDDEN]          # (M, 3H) f32
        qkv = qkv.astype(MXU_DTYPE)                              # single cast per layer

        # ---- stack heads along a LEADING batch axis: one batched einsum pair and
        #      one softmax per layer (instead of the per-head loop).
        q_h, k_h, v_h = [], [], []
        for hd in range(N_HEADS):
            lo = hd * HEAD_DIM
            q_h.append(qkv[:, lo:lo + HEAD_DIM].reshape(batch, seq, HEAD_DIM))
            k_h.append(qkv[:, HIDDEN + lo:HIDDEN + lo + HEAD_DIM]
                       .reshape(batch, seq, HEAD_DIM))
            v_h.append(qkv[:, 2 * HIDDEN + lo:2 * HIDDEN + lo + HEAD_DIM]
                       .reshape(batch, seq, HEAD_DIM))
        q = jnp.concatenate(q_h, axis=0)                         # (NH*B, S, D)
        k = jnp.concatenate(k_h, axis=0)
        v = jnp.concatenate(v_h, axis=0)

        s = jnp.einsum("bqd,bkd->bqk", q, k,
                       preferred_element_type=jnp.float32) + bias            # f32
        s = s - jnp.max(s, axis=-1, keepdims=True)
        p = jnp.exp(s)
        p = p * pl.reciprocal(jnp.sum(p, axis=-1, keepdims=True), approx=True)

        ctx = jnp.einsum("bqk,bkd->bqd", p.astype(MXU_DTYPE), v,
                         preferred_element_type=jnp.float32)     # (NH*B, S, D) f32

        # Re-assemble (M, HIDDEN) and apply the output projection as ONE K=32 matmul.
        ctx2d = jnp.concatenate(
            [ctx[hd * batch:(hd + 1) * batch] for hd in range(N_HEADS)], axis=-1
        ).reshape(m, HIDDEN)                                     # (M, H) f32
        attn = jnp.dot(ctx2d.astype(MXU_DTYPE),
                       w32_l[:, AO_OFF:AO_OFF + HIDDEN],
                       preferred_element_type=jnp.float32) \
             + vl[ROW_AO_B:ROW_AO_B + 1, 0:HIDDEN]
        h = _layernorm(attn + h,
                       vl[ROW_ALN_G:ROW_ALN_G + 1, 0:HIDDEN],
                       vl[ROW_ALN_B:ROW_ALN_B + 1, 0:HIDDEN])

        # ---- feed-forward ----
        inter = jnp.dot(h.astype(MXU_DTYPE),
                        w32_l[:, INTER_OFF:INTER_OFF + INTERMEDIATE],
                        preferred_element_type=jnp.float32) \
              + vl[ROW_I_B:ROW_I_B + 1, 0:INTERMEDIATE]
        inter = _gelu_exact(inter)
        ffn = jnp.dot(inter.astype(MXU_DTYPE), w64_l,
                      preferred_element_type=jnp.float32) \
            + vl[ROW_O_B:ROW_O_B + 1, 0:HIDDEN]
        h = _layernorm(ffn + h,
                       vl[ROW_OLN_G:ROW_OLN_G + 1, 0:HIDDEN],
                       vl[ROW_OLN_B:ROW_OLN_B + 1, 0:HIDDEN])

    # ---- pooler (dense + tanh) and classifier head ----
    # Computed for every row (cheaper than an in-kernel CLS gather at M=16);
    # the [CLS] rows are selected outside the kernel.  Dropout(p=0.1) = identity (eval).
    pooled = jnp.tanh(jnp.dot(h.astype(MXU_DTYPE),
                              whead_ref[:, POOL_OFF:POOL_OFF + HIDDEN],
                              preferred_element_type=jnp.float32)
                      + vh[ROW_POOL_B:ROW_POOL_B + 1, 0:HIDDEN])
    logits = jnp.dot(pooled.astype(MXU_DTYPE),
                     whead_ref[:, FC_OFF:FC_OFF + LOGIT_PAD],
                     preferred_element_type=jnp.float32) \
           + vh[ROW_FC_B:ROW_FC_B + 1, 0:LOGIT_PAD]              # (M, 128)
    out_ref[...] = logits.astype(out_ref.dtype)                  # lane-dense store


# ---------------------------- parameter creation ----------------------------
def init_params(key):
    keys = iter(jax.random.split(key, 8 * N_LAYERS + 16))

    def dense(fan_in, fan_out):
        w = 0.02 * jax.random.normal(next(keys), (fan_in, fan_out), jnp.float32)
        b = jnp.zeros((fan_out,), jnp.float32)
        return w, b

    def ln():
        return jnp.ones((HIDDEN,), jnp.float32), jnp.zeros((HIDDEN,), jnp.float32)

    params = {
        "word_emb": 0.02 * jax.random.normal(next(keys), (VOCAB, HIDDEN), jnp.float32),
        "pos_emb": 0.02 * jax.random.normal(next(keys), (MAX_POS, HIDDEN), jnp.float32),
        "type_emb": 0.02 * jax.random.normal(next(keys), (TYPE_VOCAB, HIDDEN), jnp.float32),
        "emb_ln": ln(),
        "layers": [],
        "pooler": dense(HIDDEN, HIDDEN),
        "fc": dense(HIDDEN, NUM_CLASSES),
    }
    for _ in range(N_LAYERS):
        params["layers"].append({
            "q": dense(HIDDEN, HIDDEN),
            "k": dense(HIDDEN, HIDDEN),
            "v": dense(HIDDEN, HIDDEN),
            "attn_out": dense(HIDDEN, HIDDEN),
            "attn_ln": ln(),
            "inter": dense(HIDDEN, INTERMEDIATE),
            "out": dense(INTERMEDIATE, HIDDEN),
            "out_ln": ln(),
        })
    return params


def _pack_for_kernel(params):
    """Consolidate all weights/vectors into 5 slabs (fewer DMA descriptors)."""
    lyrs = params["layers"]
    L = len(lyrs)
    scale = 1.0 / math.sqrt(HEAD_DIM)   # folded into Q weights/bias in f32

    w32 = jnp.zeros((L, HIDDEN, W32_COLS), jnp.float32)
    w64 = jnp.zeros((L, INTERMEDIATE, HIDDEN), jnp.float32)
    vecl = jnp.zeros((L, 8, 128), jnp.float32)
    for i, lyr in enumerate(lyrs):
        qkv_w = jnp.concatenate([lyr["q"][0] * scale, lyr["k"][0], lyr["v"][0]], axis=1)
        w32 = w32.at[i, :, QKV_OFF:QKV_OFF + 3 * HIDDEN].set(qkv_w)
        w32 = w32.at[i, :, AO_OFF:AO_OFF + HIDDEN].set(lyr["attn_out"][0])
        w32 = w32.at[i, :, INTER_OFF:INTER_OFF + INTERMEDIATE].set(lyr["inter"][0])
        w64 = w64.at[i].set(lyr["out"][0])

        qkv_b = jnp.concatenate([lyr["q"][1] * scale, lyr["k"][1], lyr["v"][1]])
        vecl = vecl.at[i, ROW_QKV_B, :3 * HIDDEN].set(qkv_b)
        vecl = vecl.at[i, ROW_AO_B, :HIDDEN].set(lyr["attn_out"][1])
        vecl = vecl.at[i, ROW_ALN_G, :HIDDEN].set(lyr["attn_ln"][0])
        vecl = vecl.at[i, ROW_ALN_B, :HIDDEN].set(lyr["attn_ln"][1])
        vecl = vecl.at[i, ROW_I_B, :INTERMEDIATE].set(lyr["inter"][1])
        vecl = vecl.at[i, ROW_O_B, :HIDDEN].set(lyr["out"][1])
        vecl = vecl.at[i, ROW_OLN_G, :HIDDEN].set(lyr["out_ln"][0])
        vecl = vecl.at[i, ROW_OLN_B, :HIDDEN].set(lyr["out_ln"][1])

    vech = jnp.zeros((8, 128), jnp.float32)
    vech = vech.at[ROW_ELN_G, :HIDDEN].set(params["emb_ln"][0])
    vech = vech.at[ROW_ELN_B, :HIDDEN].set(params["emb_ln"][1])
    vech = vech.at[ROW_POOL_B, :HIDDEN].set(params["pooler"][1])
    vech = vech.at[ROW_FC_B, :NUM_CLASSES].set(params["fc"][1])

    whead = jnp.zeros((HIDDEN, WHEAD_COLS), jnp.float32)
    whead = whead.at[:, POOL_OFF:POOL_OFF + HIDDEN].set(params["pooler"][0])
    whead = whead.at[:, FC_OFF:FC_OFF + NUM_CLASSES].set(params["fc"][0])

    return (vecl, vech,
            w32.astype(MXU_DTYPE), w64.astype(MXU_DTYPE), whead.astype(MXU_DTYPE))


# ------------------------------- forward pass -------------------------------
def bert_classifier_forward(params, input_ids, attention_mask):
    B, S = input_ids.shape

    # --- embeddings (table gathers stay in plain JAX glue) ---
    pos_ids = jnp.arange(S, dtype=jnp.int32)
    type_ids = jnp.zeros((B, S), dtype=jnp.int32)
    emb = (params["word_emb"][input_ids]
           + params["pos_emb"][pos_ids][None, :, :]
           + params["type_emb"][type_ids])
    emb2d = emb.reshape(B * S, HIDDEN).astype(jnp.float32)

    # --- additive attention mask, pre-broadcast + pre-tiled (head-major) to the
    #     full (N_HEADS*B, S, S) score shape so the kernel never re-broadcasts it ---
    bias = (1.0 - attention_mask.astype(jnp.float32)) * -10000.0            # (B, S)
    bias_full = jnp.tile(jnp.broadcast_to(bias[:, None, :], (B, S, S)),
                         (N_HEADS, 1, 1))                                   # (NH*B, S, S)

    slabs = _pack_for_kernel(params)
    kernel = functools.partial(_bert_fused_kernel, batch=B, seq=S)

    # Single block, no grid: whole model + activations (~100 KiB) resident in VMEM.
    # (Add a batch grid with dimension_semantics=("parallel",) only if B grows large
    #  enough to be compute-bound -- at B=2 a split would be pure overhead.)
    full = pl.pallas_call(
        kernel,
        out_shape=jax.ShapeDtypeStruct((B * S, LOGIT_PAD), jnp.float32),
    )(emb2d, bias_full, *slabs)

    # [CLS] (first token) rows and the real logit columns.
    logits = full.reshape(B, S, LOGIT_PAD)[:, 0, :NUM_CLASSES]
    return logits


# ----------------------------------- main -----------------------------------
if __name__ == "__main__":
    key = jax.random.PRNGKey(0)
    pkey, idkey = jax.random.split(key)

    params = init_params(pkey)

    B, S = 2, 8
    input_ids = jax.random.randint(idkey, (B, S), 0, VOCAB, dtype=jnp.int32)
    attention_mask = jnp.array(
        [[1, 1, 1, 1, 1, 1, 1, 1],
         [1, 1, 1, 1, 1, 0, 0, 0]], dtype=jnp.int32)

    fwd = jax.jit(bert_classifier_forward)
    logits = fwd(params, input_ids, attention_mask)
    logits = jax.block_until_ready(logits)

    assert logits.shape == (B, NUM_CLASSES)
    assert bool(jnp.all(jnp.isfinite(logits)))
    print("KERNEL_OK")
</pallas_src>

<mosaic_0001>
module attributes {stable_mosaic.version = 11 : i64} {
  func.func @_bert_fused_kernel(%arg0: memref<16x32xf32, #tpu.memory_space<vmem>>, %arg1: memref<8x8x8xf32, #tpu.memory_space<vmem>>, %arg2: memref<2x8x128xf32, #tpu.memory_space<vmem>>, %arg3: memref<8x128xf32, #tpu.memory_space<vmem>>, %arg4: memref<2x32x384xbf16, #tpu.memory_space<vmem>>, %arg5: memref<2x64x32xbf16, #tpu.memory_space<vmem>>, %arg6: memref<32x256xbf16, #tpu.memory_space<vmem>>, %arg7: memref<16x128xf32, #tpu.memory_space<vmem>>) attributes {dimension_semantics = [], scalar_prefetch = 0 : i64, scratch_operands = 0 : i64, tpu.core_type = #tpu.core_type<tc>} {
    %c0 = arith.constant 0 : index
    %c0_0 = arith.constant 0 : index
    %c0_1 = arith.constant 0 : index
    %0 = vector.load %arg1[%c0, %c0_0, %c0_1] : memref<8x8x8xf32, #tpu.memory_space<vmem>>, vector<8x8x8xf32>
    %c0_2 = arith.constant 0 : index
    %c0_3 = arith.constant 0 : index
    %1 = vector.load %arg3[%c0_2, %c0_3] : memref<8x128xf32, #tpu.memory_space<vmem>>, vector<8x128xf32>
    %c0_4 = arith.constant 0 : index
    %c0_5 = arith.constant 0 : index
    %2 = vector.load %arg0[%c0_4, %c0_5] : memref<16x32xf32, #tpu.memory_space<vmem>>, vector<16x32xf32>
    %3 = vector.extract_strided_slice %1 {offsets = [0, 0], sizes = [1, 32], strides = [1, 1]} : vector<8x128xf32> to vector<1x32xf32>
    %4 = vector.extract_strided_slice %1 {offsets = [1, 0], sizes = [1, 32], strides = [1, 1]} : vector<8x128xf32> to vector<1x32xf32>
    %cst = arith.constant dense<0.000000e+00> : vector<16xf32>
    %5 = vector.multi_reduction <add>, %2, %cst [1] : vector<16x32xf32> to vector<16xf32>
    %6 = vector.shape_cast %5 : vector<16xf32> to vector<16x1xf32>
    %cst_6 = arith.constant 3.200000e+01 : f32
    %7 = vector.broadcast %cst_6 : f32 to vector<16x1xf32>
    %8 = arith.divf %6, %7 : vector<16x1xf32>
    %9 = vector.broadcast %8 : vector<16x1xf32> to vector<16x32xf32>
    %10 = arith.subf %2, %9 : vector<16x32xf32>
    %11 = arith.mulf %10, %10 : vector<16x32xf32>
    %cst_7 = arith.constant dense<0.000000e+00> : vector<16xf32>
    %12 = vector.multi_reduction <add>, %11, %cst_7 [1] : vector<16x32xf32> to vector<16xf32>
    %13 = vector.shape_cast %12 : vector<16xf32> to vector<16x1xf32>
    %cst_8 = arith.constant 3.200000e+01 : f32
    %14 = vector.broadcast %cst_8 : f32 to vector<16x1xf32>
    %15 = arith.divf %13, %14 : vector<16x1xf32>
    %16 = vector.broadcast %8 : vector<16x1xf32> to vector<16x32xf32>
    %17 = arith.subf %2, %16 : vector<16x32xf32>
    %cst_9 = arith.constant 9.99999996E-13 : f32
    %18 = vector.broadcast %cst_9 : f32 to vector<16x1xf32>
    %19 = arith.addf %15, %18 : vector<16x1xf32>
    %20 = math.rsqrt %19 : vector<16x1xf32>
    %21 = vector.broadcast %20 : vector<16x1xf32> to vector<16x32xf32>
    %22 = arith.mulf %17, %21 : vector<16x32xf32>
    %23 = vector.broadcast %3 : vector<1x32xf32> to vector<16x32xf32>
    %24 = arith.mulf %22, %23 : vector<16x32xf32>
    %25 = vector.broadcast %4 : vector<1x32xf32> to vector<16x32xf32>
    %26 = arith.addf %24, %25 : vector<16x32xf32>
    %c0_10 = arith.constant 0 : index
    %c0_11 = arith.constant 0 : index
    %c0_12 = arith.constant 0 : index
    %27 = vector.load %arg4[%c0_10, %c0_11, %c0_12] : memref<2x32x384xbf16, #tpu.memory_space<vmem>>, vector<1x32x384xbf16>
    %28 = vector.shape_cast %27 : vector<1x32x384xbf16> to vector<32x384xbf16>
    %c0_13 = arith.constant 0 : index
    %c0_14 = arith.constant 0 : index
    %c0_15 = arith.constant 0 : index
    %29 = vector.load %arg5[%c0_13, %c0_14, %c0_15] : memref<2x64x32xbf16, #tpu.memory_space<vmem>>, vector<1x64x32xbf16>
    %30 = vector.shape_cast %29 : vector<1x64x32xbf16> to vector<64x32xbf16>
    %c0_16 = arith.constant 0 : index
    %c0_17 = arith.constant 0 : index
    %c0_18 = arith.constant 0 : index
    %31 = vector.load %arg2[%c0_16, %c0_17, %c0_18] : memref<2x8x128xf32, #tpu.memory_space<vmem>>, vector<1x8x128xf32>
    %32 = vector.shape_cast %31 : vector<1x8x128xf32> to vector<8x128xf32>
    %33 = arith.truncf %26 : vector<16x32xf32> to vector<16x32xbf16>
    %34 = vector.extract_strided_slice %28 {offsets = [0, 0], sizes = [32, 96], strides = [1, 1]} : vector<32x384xbf16> to vector<32x96xbf16>
    %cst_19 = arith.constant dense<0.000000e+00> : vector<16x96xf32>
    %35 = tpu.matmul %33, %34, %cst_19 {dimension_numbers = #tpu.dot_dimension_numbers<[1], [0], [0], [1], [0, 0, 1, 1], [], []>} : vector<16x32xbf16>, vector<32x96xbf16>, vector<16x96xf32> -> vector<16x96xf32>
    %36 = vector.extract_strided_slice %32 {offsets = [0, 0], sizes = [1, 96], strides = [1, 1]} : vector<8x128xf32> to vector<1x96xf32>
    %37 = vector.broadcast %36 : vector<1x96xf32> to vector<16x96xf32>
    %38 = arith.addf %35, %37 : vector<16x96xf32>
    %39 = arith.truncf %38 : vector<16x96xf32> to vector<16x96xbf16>
    %40 = vector.extract_strided_slice %39 {offsets = [0, 0], sizes = [16, 8], strides = [1, 1]} : vector<16x96xbf16> to vector<16x8xbf16>
    %41 = vector.shape_cast %40 : vector<16x8xbf16> to vector<2x8x8xbf16>
    %42 = vector.extract_strided_slice %39 {offsets = [0, 32], sizes = [16, 8], strides = [1, 1]} : vector<16x96xbf16> to vector<16x8xbf16>
    %43 = vector.shape_cast %42 : vector<16x8xbf16> to vector<2x8x8xbf16>
    %44 = vector.extract_strided_slice %39 {offsets = [0, 64], sizes = [16, 8], strides = [1, 1]} : vector<16x96xbf16> to vector<16x8xbf16>
    %45 = vector.shape_cast %44 : vector<16x8xbf16> to vector<2x8x8xbf16>
    %46 = vector.extract_strided_slice %39 {offsets = [0, 8], sizes = [16, 8], strides = [1, 1]} : vector<16x96xbf16> to vector<16x8xbf16>
    %47 = vector.shape_cast %46 : vector<16x8xbf16> to vector<2x8x8xbf16>
    %48 = vector.extract_strided_slice %39 {offsets = [0, 40], sizes = [16, 8], strides = [1, 1]} : vector<16x96xbf16> to vector<16x8xbf16>
    %49 = vector.shape_cast %48 : vector<16x8xbf16> to vector<2x8x8xbf16>
    %50 = vector.extract_strided_slice %39 {offsets = [0, 72], sizes = [16, 8], strides = [1, 1]} : vector<16x96xbf16> to vector<16x8xbf16>
    %51 = vector.shape_cast %50 : vector<16x8xbf16> to vector<2x8x8xbf16>
    %52 = vector.extract_strided_slice %39 {offsets = [0, 16], sizes = [16, 8], strides = [1, 1]} : vector<16x96xbf16> to vector<16x8xbf16>
    %53 = vector.shape_cast %52 : vector<16x8xbf16> to vector<2x8x8xbf16>
    %54 = vector.extract_strided_slice %39 {offsets = [0, 48], sizes = [16, 8], strides = [1, 1]} : vector<16x96xbf16> to vector<16x8xbf16>
    %55 = vector.shape_cast %54 : vector<16x8xbf16> to vector<2x8x8xbf16>
    %56 = vector.extract_strided_slice %39 {offsets = [0, 80], sizes = [16, 8], strides = [1, 1]} : vector<16x96xbf16> to vector<16x8xbf16>
    %57 = vector.shape_cast %56 : vector<16x8xbf16> to vector<2x8x8xbf16>
    %58 = vector.extract_strided_slice %39 {offsets = [0, 24], sizes = [16, 8], strides = [1, 1]} : vector<16x96xbf16> to vector<16x8xbf16>
    %59 = vector.shape_cast %58 : vector<16x8xbf16> to vector<2x8x8xbf16>
    %60 = vector.extract_strided_slice %39 {offsets = [0, 56], sizes = [16, 8], strides = [1, 1]} : vector<16x96xbf16> to vector<16x8xbf16>
    %61 = vector.shape_cast %60 : vector<16x8xbf16> to vector<2x8x8xbf16>
    %62 = vector.extract_strided_slice %39 {offsets = [0, 88], sizes = [16, 8], strides = [1, 1]} : vector<16x96xbf16> to vector<16x8xbf16>
    %63 = vector.shape_cast %62 : vector<16x8xbf16> to vector<2x8x8xbf16>
    %64 = tpu.concatenate %41, %47, %53, %59 in 0 : vector<2x8x8xbf16>, vector<2x8x8xbf16>, vector<2x8x8xbf16>, vector<2x8x8xbf16> -> vector<8x8x8xbf16>
    %65 = tpu.concatenate %43, %49, %55, %61 in 0 : vector<2x8x8xbf16>, vector<2x8x8xbf16>, vector<2x8x8xbf16>, vector<2x8x8xbf16> -> vector<8x8x8xbf16>
    %66 = tpu.concatenate %45, %51, %57, %63 in 0 : vector<2x8x8xbf16>, vector<2x8x8xbf16>, vector<2x8x8xbf16>, vector<2x8x8xbf16> -> vector<8x8x8xbf16>
    "tpu.trace_start"() <{level = 10 : i32, message = "bqd,bkd->bqk"}> : () -> ()
    %cst_20 = arith.constant dense<0.000000e+00> : vector<8x8x8xf32>
    %67 = tpu.matmul %64, %65, %cst_20 {dimension_numbers = #tpu.dot_dimension_numbers<[2], [2], [1], [1], [0, 0, 0, 1, 1, 1], [0], [0]>} : vector<8x8x8xbf16>, vector<8x8x8xbf16>, vector<8x8x8xf32> -> vector<8x8x8xf32>
    "tpu.trace_stop"() : () -> ()
    %68 = arith.addf %67, %0 : vector<8x8x8xf32>
    %cst_21 = arith.constant dense<0xFF800000> : vector<8x8xf32>
    %69 = vector.multi_reduction <maximumf>, %68, %cst_21 [2] : vector<8x8x8xf32> to vector<8x8xf32>
    %70 = vector.shape_cast %69 : vector<8x8xf32> to vector<8x8x1xf32>
    %71 = vector.broadcast %70 : vector<8x8x1xf32> to vector<8x8x8xf32>
    %72 = arith.subf %68, %71 : vector<8x8x8xf32>
    %73 = math.exp %72 : vector<8x8x8xf32>
    %cst_22 = arith.constant dense<0.000000e+00> : vector<8x8xf32>
    %74 = vector.multi_reduction <add>, %73, %cst_22 [2] : vector<8x8x8xf32> to vector<8x8xf32>
    %75 = vector.shape_cast %74 : vector<8x8xf32> to vector<8x8x1xf32>
    %76 = tpu.reciprocal %75 {approx = true} : vector<8x8x1xf32> -> vector<8x8x1xf32>
    %77 = vector.broadcast %76 : vector<8x8x1xf32> to vector<8x8x8xf32>
    %78 = arith.mulf %73, %77 : vector<8x8x8xf32>
    %79 = arith.truncf %78 : vector<8x8x8xf32> to vector<8x8x8xbf16>
    "tpu.trace_start"() <{level = 10 : i32, message = "bqk,bkd->bqd"}> : () -> ()
    %cst_23 = arith.constant dense<0.000000e+00> : vector<8x8x8xf32>
    %80 = tpu.matmul %79, %66, %cst_23 {dimension_numbers = #tpu.dot_dimension_numbers<[2], [1], [1], [2], [0, 0, 0, 1, 1, 2], [0], [0]>} : vector<8x8x8xbf16>, vector<8x8x8xbf16>, vector<8x8x8xf32> -> vector<8x8x8xf32>
    "tpu.trace_stop"() : () -> ()
    %81 = vector.extract_strided_slice %80 {offsets = [0, 0, 0], sizes = [2, 8, 8], strides = [1, 1, 1]} : vector<8x8x8xf32> to vector<2x8x8xf32>
    %82 = vector.extract_strided_slice %80 {offsets = [2, 0, 0], sizes = [2, 8, 8], strides = [1, 1, 1]} : vector<8x8x8xf32> to vector<2x8x8xf32>
    %83 = vector.extract_strided_slice %80 {offsets = [4, 0, 0], sizes = [2, 8, 8], strides = [1, 1, 1]} : vector<8x8x8xf32> to vector<2x8x8xf32>
    %84 = vector.extract_strided_slice %80 {offsets = [6, 0, 0], sizes = [2, 8, 8], strides = [1, 1, 1]} : vector<8x8x8xf32> to vector<2x8x8xf32>
    %85 = tpu.concatenate %81, %82, %83, %84 in 2 : vector<2x8x8xf32>, vector<2x8x8xf32>, vector<2x8x8xf32>, vector<2x8x8xf32> -> vector<2x8x32xf32>
    %86 = vector.shape_cast %85 : vector<2x8x32xf32> to vector<16x32xf32>
    %87 = arith.truncf %86 : vector<16x32xf32> to vector<16x32xbf16>
    %88 = vector.extract_strided_slice %28 {offsets = [0, 128], sizes = [32, 32], strides = [1, 1]} : vector<32x384xbf16> to vector<32x32xbf16>
    %cst_24 = arith.constant dense<0.000000e+00> : vector<16x32xf32>
    %89 = tpu.matmul %87, %88, %cst_24 {dimension_numbers = #tpu.dot_dimension_numbers<[1], [0], [0], [1], [0, 0, 1, 1], [], []>} : vector<16x32xbf16>, vector<32x32xbf16>, vector<16x32xf32> -> vector<16x32xf32>
    %90 = vector.extract_strided_slice %32 {offsets = [1, 0], sizes = [1, 32], strides = [1, 1]} : vector<8x128xf32> to vector<1x32xf32>
    %91 = vector.broadcast %90 : vector<1x32xf32> to vector<16x32xf32>
    %92 = arith.addf %89, %91 : vector<16x32xf32>
    %93 = arith.addf %92, %26 : vector<16x32xf32>
    %94 = vector.extract_strided_slice %32 {offsets = [2, 0], sizes = [1, 32], strides = [1, 1]} : vector<8x128xf32> to vector<1x32xf32>
    %95 = vector.extract_strided_slice %32 {offsets = [3, 0], sizes = [1, 32], strides = [1, 1]} : vector<8x128xf32> to vector<1x32xf32>
    %cst_25 = arith.constant dense<0.000000e+00> : vector<16xf32>
    %96 = vector.multi_reduction <add>, %93, %cst_25 [1] : vector<16x32xf32> to vector<16xf32>
    %97 = vector.shape_cast %96 : vector<16xf32> to vector<16x1xf32>
    %cst_26 = arith.constant 3.200000e+01 : f32
    %98 = vector.broadcast %cst_26 : f32 to vector<16x1xf32>
    %99 = arith.divf %97, %98 : vector<16x1xf32>
    %100 = vector.broadcast %99 : vector<16x1xf32> to vector<16x32xf32>
    %101 = arith.subf %93, %100 : vector<16x32xf32>
    %102 = arith.mulf %101, %101 : vector<16x32xf32>
    %cst_27 = arith.constant dense<0.000000e+00> : vector<16xf32>
    %103 = vector.multi_reduction <add>, %102, %cst_27 [1] : vector<16x32xf32> to vector<16xf32>
    %104 = vector.shape_cast %103 : vector<16xf32> to vector<16x1xf32>
    %cst_28 = arith.constant 3.200000e+01 : f32
    %105 = vector.broadcast %cst_28 : f32 to vector<16x1xf32>
    %106 = arith.divf %104, %105 : vector<16x1xf32>
    %107 = vector.broadcast %99 : vector<16x1xf32> to vector<16x32xf32>
    %108 = arith.subf %93, %107 : vector<16x32xf32>
    %cst_29 = arith.constant 9.99999996E-13 : f32
    %109 = vector.broadcast %cst_29 : f32 to vector<16x1xf32>
    %110 = arith.addf %106, %109 : vector<16x1xf32>
    %111 = math.rsqrt %110 : vector<16x1xf32>
    %112 = vector.broadcast %111 : vector<16x1xf32> to vector<16x32xf32>
    %113 = arith.mulf %108, %112 : vector<16x32xf32>
    %114 = vector.broadcast %94 : vector<1x32xf32> to vector<16x32xf32>
    %115 = arith.mulf %113, %114 : vector<16x32xf32>
    %116 = vector.broadcast %95 : vector<1x32xf32> to vector<16x32xf32>
    %117 = arith.addf %115, %116 : vector<16x32xf32>
    %118 = arith.truncf %117 : vector<16x32xf32> to vector<16x32xbf16>
    %119 = vector.extract_strided_slice %28 {offsets = [0, 256], sizes = [32, 64], strides = [1, 1]} : vector<32x384xbf16> to vector<32x64xbf16>
    %cst_30 = arith.constant dense<0.000000e+00> : vector<16x64xf32>
    %120 = tpu.matmul %118, %119, %cst_30 {dimension_numbers = #tpu.dot_dimension_numbers<[1], [0], [0], [1], [0, 0, 1, 1], [], []>} : vector<16x32xbf16>, vector<32x64xbf16>, vector<16x64xf32> -> vector<16x64xf32>
    %121 = vector.extract_strided_slice %32 {offsets = [4, 0], sizes = [1, 64], strides = [1, 1]} : vector<8x128xf32> to vector<1x64xf32>
    %122 = vector.broadcast %121 : vector<1x64xf32> to vector<16x64xf32>
    %123 = arith.addf %120, %122 : vector<16x64xf32>
    %cst_31 = arith.constant 5.000000e-01 : f32
    %124 = vector.broadcast %cst_31 : f32 to vector<16x64xf32>
    %125 = arith.mulf %124, %123 : vector<16x64xf32>
    %cst_32 = arith.constant 0.707106769 : f32
    %126 = vector.broadcast %cst_32 : f32 to vector<16x64xf32>
    %127 = arith.mulf %123, %126 : vector<16x64xf32>
    %128 = math.erf %127 : vector<16x64xf32>
    %cst_33 = arith.constant 1.000000e+00 : f32
    %129 = vector.broadcast %cst_33 : f32 to vector<16x64xf32>
    %130 = arith.addf %129, %128 : vector<16x64xf32>
    %131 = arith.mulf %125, %130 : vector<16x64xf32>
    %132 = arith.truncf %131 : vector<16x64xf32> to vector<16x64xbf16>
    %cst_34 = arith.constant dense<0.000000e+00> : vector<16x32xf32>
    %133 = tpu.matmul %132, %30, %cst_34 {dimension_numbers = #tpu.dot_dimension_numbers<[1], [0], [0], [1], [0, 0, 1, 1], [], []>} : vector<16x64xbf16>, vector<64x32xbf16>, vector<16x32xf32> -> vector<16x32xf32>
    %134 = vector.extract_strided_slice %32 {offsets = [5, 0], sizes = [1, 32], strides = [1, 1]} : vector<8x128xf32> to vector<1x32xf32>
    %135 = vector.broadcast %134 : vector<1x32xf32> to vector<16x32xf32>
    %136 = arith.addf %133, %135 : vector<16x32xf32>
    %137 = arith.addf %136, %117 : vector<16x32xf32>
    %138 = vector.extract_strided_slice %32 {offsets = [6, 0], sizes = [1, 32], strides = [1, 1]} : vector<8x128xf32> to vector<1x32xf32>
    %139 = vector.extract_strided_slice %32 {offsets = [7, 0], sizes = [1, 32], strides = [1, 1]} : vector<8x128xf32> to vector<1x32xf32>
    %cst_35 = arith.constant dense<0.000000e+00> : vector<16xf32>
    %140 = vector.multi_reduction <add>, %137, %cst_35 [1] : vector<16x32xf32> to vector<16xf32>
    %141 = vector.shape_cast %140 : vector<16xf32> to vector<16x1xf32>
    %cst_36 = arith.constant 3.200000e+01 : f32
    %142 = vector.broadcast %cst_36 : f32 to vector<16x1xf32>
    %143 = arith.divf %141, %142 : vector<16x1xf32>
    %144 = vector.broadcast %143 : vector<16x1xf32> to vector<16x32xf32>
    %145 = arith.subf %137, %144 : vector<16x32xf32>
    %146 = arith.mulf %145, %145 : vector<16x32xf32>
    %cst_37 = arith.constant dense<0.000000e+00> : vector<16xf32>
    %147 = vector.multi_reduction <add>, %146, %cst_37 [1] : vector<16x32xf32> to vector<16xf32>
    %148 = vector.shape_cast %147 : vector<16xf32> to vector<16x1xf32>
    %cst_38 = arith.constant 3.200000e+01 : f32
    %149 = vector.broadcast %cst_38 : f32 to vector<16x1xf32>
    %150 = arith.divf %148, %149 : vector<16x1xf32>
    %151 = vector.broadcast %143 : vector<16x1xf32> to vector<16x32xf32>
    %152 = arith.subf %137, %151 : vector<16x32xf32>
    %cst_39 = arith.constant 9.99999996E-13 : f32
    %153 = vector.broadcast %cst_39 : f32 to vector<16x1xf32>
    %154 = arith.addf %150, %153 : vector<16x1xf32>
    %155 = math.rsqrt %154 : vector<16x1xf32>
    %156 = vector.broadcast %155 : vector<16x1xf32> to vector<16x32xf32>
    %157 = arith.mulf %152, %156 : vector<16x32xf32>
    %158 = vector.broadcast %138 : vector<1x32xf32> to vector<16x32xf32>
    %159 = arith.mulf %157, %158 : vector<16x32xf32>
    %160 = vector.broadcast %139 : vector<1x32xf32> to vector<16x32xf32>
    %161 = arith.addf %159, %160 : vector<16x32xf32>
    %c1 = arith.constant 1 : index
    %c0_40 = arith.constant 0 : index
    %c0_41 = arith.constant 0 : index
    %162 = vector.load %arg4[%c1, %c0_40, %c0_41] : memref<2x32x384xbf16, #tpu.memory_space<vmem>>, vector<1x32x384xbf16>
    %163 = vector.shape_cast %162 : vector<1x32x384xbf16> to vector<32x384xbf16>
    %c1_42 = arith.constant 1 : index
    %c0_43 = arith.constant 0 : index
    %c0_44 = arith.constant 0 : index
    %164 = vector.load %arg5[%c1_42, %c0_43, %c0_44] : memref<2x64x32xbf16, #tpu.memory_space<vmem>>, vector<1x64x32xbf16>
    %165 = vector.shape_cast %164 : vector<1x64x32xbf16> to vector<64x32xbf16>
    %c1_45 = arith.constant 1 : index
    %c0_46 = arith.constant 0 : index
    %c0_47 = arith.constant 0 : index
    %166 = vector.load %arg2[%c1_45, %c0_46, %c0_47] : memref<2x8x128xf32, #tpu.memory_space<vmem>>, vector<1x8x128xf32>
    %167 = vector.shape_cast %166 : vector<1x8x128xf32> to vector<8x128xf32>
    %168 = arith.truncf %161 : vector<16x32xf32> to vector<16x32xbf16>
    %169 = vector.extract_strided_slice %163 {offsets = [0, 0], sizes = [32, 96], strides = [1, 1]} : vector<32x384xbf16> to vector<32x96xbf16>
    %cst_48 = arith.constant dense<0.000000e+00> : vector<16x96xf32>
    %170 = tpu.matmul %168, %169, %cst_48 {dimension_numbers = #tpu.dot_dimension_numbers<[1], [0], [0], [1], [0, 0, 1, 1], [], []>} : vector<16x32xbf16>, vector<32x96xbf16>, vector<16x96xf32> -> vector<16x96xf32>
    %171 = vector.extract_strided_slice %167 {offsets = [0, 0], sizes = [1, 96], strides = [1, 1]} : vector<8x128xf32> to vector<1x96xf32>
    %172 = vector.broadcast %171 : vector<1x96xf32> to vector<16x96xf32>
    %173 = arith.addf %170, %172 : vector<16x96xf32>
    %174 = arith.truncf %173 : vector<16x96xf32> to vector<16x96xbf16>
    %175 = vector.extract_strided_slice %174 {offsets = [0, 0], sizes = [16, 8], strides = [1, 1]} : vector<16x96xbf16> to vector<16x8xbf16>
    %176 = vector.shape_cast %175 : vector<16x8xbf16> to vector<2x8x8xbf16>
    %177 = vector.extract_strided_slice %174 {offsets = [0, 32], sizes = [16, 8], strides = [1, 1]} : vector<16x96xbf16> to vector<16x8xbf16>
    %178 = vector.shape_cast %177 : vector<16x8xbf16> to vector<2x8x8xbf16>
    %179 = vector.extract_strided_slice %174 {offsets = [0, 64], sizes = [16, 8], strides = [1, 1]} : vector<16x96xbf16> to vector<16x8xbf16>
    %180 = vector.shape_cast %179 : vector<16x8xbf16> to vector<2x8x8xbf16>
    %181 = vector.extract_strided_slice %174 {offsets = [0, 8], sizes = [16, 8], strides = [1, 1]} : vector<16x96xbf16> to vector<16x8xbf16>
    %182 = vector.shape_cast %181 : vector<16x8xbf16> to vector<2x8x8xbf16>
    %183 = vector.extract_strided_slice %174 {offsets = [0, 40], sizes = [16, 8], strides = [1, 1]} : vector<16x96xbf16> to vector<16x8xbf16>
    %184 = vector.shape_cast %183 : vector<16x8xbf16> to vector<2x8x8xbf16>
    %185 = vector.extract_strided_slice %174 {offsets = [0, 72], sizes = [16, 8], strides = [1, 1]} : vector<16x96xbf16> to vector<16x8xbf16>
    %186 = vector.shape_cast %185 : vector<16x8xbf16> to vector<2x8x8xbf16>
    %187 = vector.extract_strided_slice %174 {offsets = [0, 16], sizes = [16, 8], strides = [1, 1]} : vector<16x96xbf16> to vector<16x8xbf16>
    %188 = vector.shape_cast %187 : vector<16x8xbf16> to vector<2x8x8xbf16>
    %189 = vector.extract_strided_slice %174 {offsets = [0, 48], sizes = [16, 8], strides = [1, 1]} : vector<16x96xbf16> to vector<16x8xbf16>
    %190 = vector.shape_cast %189 : vector<16x8xbf16> to vector<2x8x8xbf16>
    %191 = vector.extract_strided_slice %174 {offsets = [0, 80], sizes = [16, 8], strides = [1, 1]} : vector<16x96xbf16> to vector<16x8xbf16>
    %192 = vector.shape_cast %191 : vector<16x8xbf16> to vector<2x8x8xbf16>
    %193 = vector.extract_strided_slice %174 {offsets = [0, 24], sizes = [16, 8], strides = [1, 1]} : vector<16x96xbf16> to vector<16x8xbf16>
    %194 = vector.shape_cast %193 : vector<16x8xbf16> to vector<2x8x8xbf16>
    %195 = vector.extract_strided_slice %174 {offsets = [0, 56], sizes = [16, 8], strides = [1, 1]} : vector<16x96xbf16> to vector<16x8xbf16>
    %196 = vector.shape_cast %195 : vector<16x8xbf16> to vector<2x8x8xbf16>
    %197 = vector.extract_strided_slice %174 {offsets = [0, 88], sizes = [16, 8], strides = [1, 1]} : vector<16x96xbf16> to vector<16x8xbf16>
    %198 = vector.shape_cast %197 : vector<16x8xbf16> to vector<2x8x8xbf16>
    %199 = tpu.concatenate %176, %182, %188, %194 in 0 : vector<2x8x8xbf16>, vector<2x8x8xbf16>, vector<2x8x8xbf16>, vector<2x8x8xbf16> -> vector<8x8x8xbf16>
    %200 = tpu.concatenate %178, %184, %190, %196 in 0 : vector<2x8x8xbf16>, vector<2x8x8xbf16>, vector<2x8x8xbf16>, vector<2x8x8xbf16> -> vector<8x8x8xbf16>
    %201 = tpu.concatenate %180, %186, %192, %198 in 0 : vector<2x8x8xbf16>, vector<2x8x8xbf16>, vector<2x8x8xbf16>, vector<2x8x8xbf16> -> vector<8x8x8xbf16>
    "tpu.trace_start"() <{level = 10 : i32, message = "bqd,bkd->bqk"}> : () -> ()
    %cst_49 = arith.constant dense<0.000000e+00> : vector<8x8x8xf32>
    %202 = tpu.matmul %199, %200, %cst_49 {dimension_numbers = #tpu.dot_dimension_numbers<[2], [2], [1], [1], [0, 0, 0, 1, 1, 1], [0], [0]>} : vector<8x8x8xbf16>, vector<8x8x8xbf16>, vector<8x8x8xf32> -> vector<8x8x8xf32>
    "tpu.trace_stop"() : () -> ()
    %203 = arith.addf %202, %0 : vector<8x8x8xf32>
    %cst_50 = arith.constant dense<0xFF800000> : vector<8x8xf32>
    %204 = vector.multi_reduction <maximumf>, %203, %cst_50 [2] : vector<8x8x8xf32> to vector<8x8xf32>
    %205 = vector.shape_cast %204 : vector<8x8xf32> to vector<8x8x1xf32>
    %206 = vector.broadcast %205 : vector<8x8x1xf32> to vector<8x8x8xf32>
    %207 = arith.subf %203, %206 : vector<8x8x8xf32>
    %208 = math.exp %207 : vector<8x8x8xf32>
    %cst_51 = arith.constant dense<0.000000e+00> : vector<8x8xf32>
    %209 = vector.multi_reduction <add>, %208, %cst_51 [2] : vector<8x8x8xf32> to vector<8x8xf32>
    %210 = vector.shape_cast %209 : vector<8x8xf32> to vector<8x8x1xf32>
    %211 = tpu.reciprocal %210 {approx = true} : vector<8x8x1xf32> -> vector<8x8x1xf32>
    %212 = vector.broadcast %211 : vector<8x8x1xf32> to vector<8x8x8xf32>
    %213 = arith.mulf %208, %212 : vector<8x8x8xf32>
    %214 = arith.truncf %213 : vector<8x8x8xf32> to vector<8x8x8xbf16>
    "tpu.trace_start"() <{level = 10 : i32, message = "bqk,bkd->bqd"}> : () -> ()
    %cst_52 = arith.constant dense<0.000000e+00> : vector<8x8x8xf32>
    %215 = tpu.matmul %214, %201, %cst_52 {dimension_numbers = #tpu.dot_dimension_numbers<[2], [1], [1], [2], [0, 0, 0, 1, 1, 2], [0], [0]>} : vector<8x8x8xbf16>, vector<8x8x8xbf16>, vector<8x8x8xf32> -> vector<8x8x8xf32>
    "tpu.trace_stop"() : () -> ()
    %216 = vector.extract_strided_slice %215 {offsets = [0, 0, 0], sizes = [2, 8, 8], strides = [1, 1, 1]} : vector<8x8x8xf32> to vector<2x8x8xf32>
    %217 = vector.extract_strided_slice %215 {offsets = [2, 0, 0], sizes = [2, 8, 8], strides = [1, 1, 1]} : vector<8x8x8xf32> to vector<2x8x8xf32>
    %218 = vector.extract_strided_slice %215 {offsets = [4, 0, 0], sizes = [2, 8, 8], strides = [1, 1, 1]} : vector<8x8x8xf32> to vector<2x8x8xf32>
    %219 = vector.extract_strided_slice %215 {offsets = [6, 0, 0], sizes = [2, 8, 8], strides = [1, 1, 1]} : vector<8x8x8xf32> to vector<2x8x8xf32>
    %220 = tpu.concatenate %216, %217, %218, %219 in 2 : vector<2x8x8xf32>, vector<2x8x8xf32>, vector<2x8x8xf32>, vector<2x8x8xf32> -> vector<2x8x32xf32>
    %221 = vector.shape_cast %220 : vector<2x8x32xf32> to vector<16x32xf32>
    %222 = arith.truncf %221 : vector<16x32xf32> to vector<16x32xbf16>
    %223 = vector.extract_strided_slice %163 {offsets = [0, 128], sizes = [32, 32], strides = [1, 1]} : vector<32x384xbf16> to vector<32x32xbf16>
    %cst_53 = arith.constant dense<0.000000e+00> : vector<16x32xf32>
    %224 = tpu.matmul %222, %223, %cst_53 {dimension_numbers = #tpu.dot_dimension_numbers<[1], [0], [0], [1], [0, 0, 1, 1], [], []>} : vector<16x32xbf16>, vector<32x32xbf16>, vector<16x32xf32> -> vector<16x32xf32>
    %225 = vector.extract_strided_slice %167 {offsets = [1, 0], sizes = [1, 32], strides = [1, 1]} : vector<8x128xf32> to vector<1x32xf32>
    %226 = vector.broadcast %225 : vector<1x32xf32> to vector<16x32xf32>
    %227 = arith.addf %224, %226 : vector<16x32xf32>
    %228 = arith.addf %227, %161 : vector<16x32xf32>
    %229 = vector.extract_strided_slice %167 {offsets = [2, 0], sizes = [1, 32], strides = [1, 1]} : vector<8x128xf32> to vector<1x32xf32>
    %230 = vector.extract_strided_slice %167 {offsets = [3, 0], sizes = [1, 32], strides = [1, 1]} : vector<8x128xf32> to vector<1x32xf32>
    %cst_54 = arith.constant dense<0.000000e+00> : vector<16xf32>
    %231 = vector.multi_reduction <add>, %228, %cst_54 [1] : vector<16x32xf32> to vector<16xf32>
    %232 = vector.shape_cast %231 : vector<16xf32> to vector<16x1xf32>
    %cst_55 = arith.constant 3.200000e+01 : f32
    %233 = vector.broadcast %cst_55 : f32 to vector<16x1xf32>
    %234 = arith.divf %232, %233 : vector<16x1xf32>
    %235 = vector.broadcast %234 : vector<16x1xf32> to vector<16x32xf32>
    %236 = arith.subf %228, %235 : vector<16x32xf32>
    %237 = arith.mulf %236, %236 : vector<16x32xf32>
    %cst_56 = arith.constant dense<0.000000e+00> : vector<16xf32>
    %238 = vector.multi_reduction <add>, %237, %cst_56 [1] : vector<16x32xf32> to vector<16xf32>
    %239 = vector.shape_cast %238 : vector<16xf32> to vector<16x1xf32>
    %cst_57 = arith.constant 3.200000e+01 : f32
    %240 = vector.broadcast %cst_57 : f32 to vector<16x1xf32>
    %241 = arith.divf %239, %240 : vector<16x1xf32>
    %242 = vector.broadcast %234 : vector<16x1xf32> to vector<16x32xf32>
    %243 = arith.subf %228, %242 : vector<16x32xf32>
    %cst_58 = arith.constant 9.99999996E-13 : f32
    %244 = vector.broadcast %cst_58 : f32 to vector<16x1xf32>
    %245 = arith.addf %241, %244 : vector<16x1xf32>
    %246 = math.rsqrt %245 : vector<16x1xf32>
    %247 = vector.broadcast %246 : vector<16x1xf32> to vector<16x32xf32>
    %248 = arith.mulf %243, %247 : vector<16x32xf32>
    %249 = vector.broadcast %229 : vector<1x32xf32> to vector<16x32xf32>
    %250 = arith.mulf %248, %249 : vector<16x32xf32>
    %251 = vector.broadcast %230 : vector<1x32xf32> to vector<16x32xf32>
    %252 = arith.addf %250, %251 : vector<16x32xf32>
    %253 = arith.truncf %252 : vector<16x32xf32> to vector<16x32xbf16>
    %254 = vector.extract_strided_slice %163 {offsets = [0, 256], sizes = [32, 64], strides = [1, 1]} : vector<32x384xbf16> to vector<32x64xbf16>
    %cst_59 = arith.constant dense<0.000000e+00> : vector<16x64xf32>
    %255 = tpu.matmul %253, %254, %cst_59 {dimension_numbers = #tpu.dot_dimension_numbers<[1], [0], [0], [1], [0, 0, 1, 1], [], []>} : vector<16x32xbf16>, vector<32x64xbf16>, vector<16x64xf32> -> vector<16x64xf32>
    %256 = vector.extract_strided_slice %167 {offsets = [4, 0], sizes = [1, 64], strides = [1, 1]} : vector<8x128xf32> to vector<1x64xf32>
    %257 = vector.broadcast %256 : vector<1x64xf32> to vector<16x64xf32>
    %258 = arith.addf %255, %257 : vector<16x64xf32>
    %cst_60 = arith.constant 5.000000e-01 : f32
    %259 = vector.broadcast %cst_60 : f32 to vector<16x64xf32>
    %260 = arith.mulf %259, %258 : vector<16x64xf32>
    %cst_61 = arith.constant 0.707106769 : f32
    %261 = vector.broadcast %cst_61 : f32 to vector<16x64xf32>
    %262 = arith.mulf %258, %261 : vector<16x64xf32>
    %263 = math.erf %262 : vector<16x64xf32>
    %cst_62 = arith.constant 1.000000e+00 : f32
    %264 = vector.broadcast %cst_62 : f32 to vector<16x64xf32>
    %265 = arith.addf %264, %263 : vector<16x64xf32>
    %266 = arith.mulf %260, %265 : vector<16x64xf32>
    %267 = arith.truncf %266 : vector<16x64xf32> to vector<16x64xbf16>
    %cst_63 = arith.constant dense<0.000000e+00> : vector<16x32xf32>
    %268 = tpu.matmul %267, %165, %cst_63 {dimension_numbers = #tpu.dot_dimension_numbers<[1], [0], [0], [1], [0, 0, 1, 1], [], []>} : vector<16x64xbf16>, vector<64x32xbf16>, vector<16x32xf32> -> vector<16x32xf32>
    %269 = vector.extract_strided_slice %167 {offsets = [5, 0], sizes = [1, 32], strides = [1, 1]} : vector<8x128xf32> to vector<1x32xf32>
    %270 = vector.broadcast %269 : vector<1x32xf32> to vector<16x32xf32>
    %271 = arith.addf %268, %270 : vector<16x32xf32>
    %272 = arith.addf %271, %252 : vector<16x32xf32>
    %273 = vector.extract_strided_slice %167 {offsets = [6, 0], sizes = [1, 32], strides = [1, 1]} : vector<8x128xf32> to vector<1x32xf32>
    %274 = vector.extract_strided_slice %167 {offsets = [7, 0], sizes = [1, 32], strides = [1, 1]} : vector<8x128xf32> to vector<1x32xf32>
    %cst_64 = arith.constant dense<0.000000e+00> : vector<16xf32>
    %275 = vector.multi_reduction <add>, %272, %cst_64 [1] : vector<16x32xf32> to vector<16xf32>
    %276 = vector.shape_cast %275 : vector<16xf32> to vector<16x1xf32>
    %cst_65 = arith.constant 3.200000e+01 : f32
    %277 = vector.broadcast %cst_65 : f32 to vector<16x1xf32>
    %278 = arith.divf %276, %277 : vector<16x1xf32>
    %279 = vector.broadcast %278 : vector<16x1xf32> to vector<16x32xf32>
    %280 = arith.subf %272, %279 : vector<16x32xf32>
    %281 = arith.mulf %280, %280 : vector<16x32xf32>
    %cst_66 = arith.constant dense<0.000000e+00> : vector<16xf32>
    %282 = vector.multi_reduction <add>, %281, %cst_66 [1] : vector<16x32xf32> to vector<16xf32>
    %283 = vector.shape_cast %282 : vector<16xf32> to vector<16x1xf32>
    %cst_67 = arith.constant 3.200000e+01 : f32
    %284 = vector.broadcast %cst_67 : f32 to vector<16x1xf32>
    %285 = arith.divf %283, %284 : vector<16x1xf32>
    %286 = vector.broadcast %278 : vector<16x1xf32> to vector<16x32xf32>
    %287 = arith.subf %272, %286 : vector<16x32xf32>
    %cst_68 = arith.constant 9.99999996E-13 : f32
    %288 = vector.broadcast %cst_68 : f32 to vector<16x1xf32>
    %289 = arith.addf %285, %288 : vector<16x1xf32>
    %290 = math.rsqrt %289 : vector<16x1xf32>
    %291 = vector.broadcast %290 : vector<16x1xf32> to vector<16x32xf32>
    %292 = arith.mulf %287, %291 : vector<16x32xf32>
    %293 = vector.broadcast %273 : vector<1x32xf32> to vector<16x32xf32>
    %294 = arith.mulf %292, %293 : vector<16x32xf32>
    %295 = vector.broadcast %274 : vector<1x32xf32> to vector<16x32xf32>
    %296 = arith.addf %294, %295 : vector<16x32xf32>
    %297 = arith.truncf %296 : vector<16x32xf32> to vector<16x32xbf16>
    %c0_69 = arith.constant 0 : index
    %c0_70 = arith.constant 0 : index
    %298 = vector.load %arg6[%c0_69, %c0_70] : memref<32x256xbf16, #tpu.memory_space<vmem>>, vector<32x32xbf16>
    %cst_71 = arith.constant dense<0.000000e+00> : vector<16x32xf32>
    %299 = tpu.matmul %297, %298, %cst_71 {dimension_numbers = #tpu.dot_dimension_numbers<[1], [0], [0], [1], [0, 0, 1, 1], [], []>} : vector<16x32xbf16>, vector<32x32xbf16>, vector<16x32xf32> -> vector<16x32xf32>
    %300 = vector.extract_strided_slice %1 {offsets = [2, 0], sizes = [1, 32], strides = [1, 1]} : vector<8x128xf32> to vector<1x32xf32>
    %301 = vector.broadcast %300 : vector<1x32xf32> to vector<16x32xf32>
    %302 = arith.addf %299, %301 : vector<16x32xf32>
    %303 = math.tanh %302 : vector<16x32xf32>
    %304 = arith.truncf %303 : vector<16x32xf32> to vector<16x32xbf16>
    %c0_72 = arith.constant 0 : index
    %c128 = arith.constant 128 : index
    %305 = vector.load %arg6[%c0_72, %c128] : memref<32x256xbf16, #tpu.memory_space<vmem>>, vector<32x128xbf16>
    %cst_73 = arith.constant dense<0.000000e+00> : vector<16x128xf32>
    %306 = tpu.matmul %304, %305, %cst_73 {dimension_numbers = #tpu.dot_dimension_numbers<[1], [0], [0], [1], [0, 0, 1, 1], [], []>} : vector<16x32xbf16>, vector<32x128xbf16>, vector<16x128xf32> -> vector<16x128xf32>
    %307 = vector.extract_strided_slice %1 {offsets = [3, 0], sizes = [1, 128], strides = [1, 1]} : vector<8x128xf32> to vector<1x128xf32>
    %308 = vector.broadcast %307 : vector<1x128xf32> to vector<16x128xf32>
    %309 = arith.addf %306, %308 : vector<16x128xf32>
    %c0_74 = arith.constant 0 : index
    %c0_75 = arith.constant 0 : index
    %310 = vector.load %arg7[%c0_74, %c0_75] : memref<16x128xf32, #tpu.memory_space<vmem>>, vector<16x128xf32>
    tpu.vector_store %arg7[%c0_74, %c0_75], %309 {strides = array<i32>} : memref<16x128xf32, #tpu.memory_space<vmem>>, vector<16x128xf32>,
    return
  }
}

</mosaic_0001>

<llo_original>
// kernel: bert_classifier_forward.1
$region0: #{bert_classifier_forward.1}
  #allocation0 [shape = 'u32[]', space=smem, size = 0x4, offset = 0x4, fixed_abs, tag = 'smem constant byte address 0x4 - core index']
  #allocation1 [shape = 'u32[144,128]{1,0:T(1,128)}', space=vmem, size = 0x12000, scoped, tag = 'internal scratch']
  %s0 = inlined_call_operand.vmem [shape: f32[16,32], index: 0, kind: input, shape index: {}]
  %s1 = inlined_call_operand.vmem [shape: f32[8,8,8], index: 1, kind: input, shape index: {}]
  %s2 = inlined_call_operand.vmem [shape: f32[2,8,128], index: 2, kind: input, shape index: {}]
  %s3 = inlined_call_operand.vmem [shape: f32[8,128], index: 3, kind: input, shape index: {}]
  %s4 = inlined_call_operand.vmem [shape: bf16[2,32,384], index: 4, kind: input, shape index: {}]
  %s5 = inlined_call_operand.vmem [shape: bf16[2,64,32], index: 5, kind: input, shape index: {}]
  %s6 = inlined_call_operand.vmem [shape: bf16[32,256], index: 6, kind: input, shape index: {}]
  %s7 = inlined_call_operand.vmem [shape: f32[16,128], index: 7, kind: output, shape index: {}]
  %s8 = sld [smem:[#allocation0]]
  $region38: #{bert_classifier_forward.1} parent=0
    _
  %s10 = ssub.s32 1, %s8
  %s11 = scalar_select 0, %s10, %s8
  // Predicated region
  $region2: #{bert_classifier_forward.1} parent=0 // pred_check
    _
  $region3: #{bert_classifier_forward.1} parent=0 // pred_check_branch
    %13 = sbr.rel (0) target = $region5
  $region4: #{bert_classifier_forward.1} parent=0 // pred_region
    _
  $region5: #{bert_classifier_forward.1} parent=0 // pred_fallthru
    _
  // Predicated region
  $region6: #{bert_classifier_forward.1} parent=0 // pred_check
    _
  $region7: #{bert_classifier_forward.1} parent=0 // pred_check_branch
    %15 = sbr.rel (0) target = $region9
  $region8: #{bert_classifier_forward.1} parent=0 // pred_region
    _
  $region9: #{bert_classifier_forward.1} parent=0 // pred_fallthru
    _
  // Predicated region
  $region10: #{bert_classifier_forward.1} parent=0 // pred_check
    _
  $region11: #{bert_classifier_forward.1} parent=0 // pred_check_branch
    %17 = sbr.rel (0) target = $region13
  $region12: #{bert_classifier_forward.1} parent=0 // pred_region
    _
  $region13: #{bert_classifier_forward.1} parent=0 // pred_fallthru
    _
  // Predicated region
  $region14: #{bert_classifier_forward.1} parent=0 // pred_check
    _
  $region15: #{bert_classifier_forward.1} parent=0 // pred_check_branch
    %19 = sbr.rel (0) target = $region17
  $region16: #{bert_classifier_forward.1} parent=0 // pred_region
    _
  $region17: #{bert_classifier_forward.1} parent=0 // pred_fallthru
    _
  // Predicated region
  $region18: #{bert_classifier_forward.1} parent=0 // pred_check
    _
  $region19: #{bert_classifier_forward.1} parent=0 // pred_check_branch
    %21 = sbr.rel (0) target = $region21
  $region20: #{bert_classifier_forward.1} parent=0 // pred_region
    _
  $region21: #{bert_classifier_forward.1} parent=0 // pred_fallthru
    _
  // Predicated region
  $region22: #{bert_classifier_forward.1} parent=0 // pred_check
    _
  $region23: #{bert_classifier_forward.1} parent=0 // pred_check_branch
    %23 = sbr.rel (0) target = $region25
  $region24: #{bert_classifier_forward.1} parent=0 // pred_region
    _
  $region25: #{bert_classifier_forward.1} parent=0 // pred_fallthru
    _
  // Predicated region
  $region26: #{bert_classifier_forward.1} parent=0 // pred_check
    _
  $region27: #{bert_classifier_forward.1} parent=0 // pred_check_branch
    %25 = sbr.rel (0) target = $region29
  $region28: #{bert_classifier_forward.1} parent=0 // pred_region
    _
  $region29: #{bert_classifier_forward.1} parent=0 // pred_fallthru
    _
  %v27 = vld [vmem:[%s1] sm:$0xff]
  %v28 = vld [vmem:[%s1 + $0x8] sm:$0xff]
  %v29 = vld [vmem:[%s1 + $0x10] sm:$0xff]
  %v30 = vld [vmem:[%s1 + $0x18] sm:$0xff]
  %v31 = vld [vmem:[%s1 + $0x20] sm:$0xff]
  %v32 = vld [vmem:[%s1 + $0x28] sm:$0xff]
  %v33 = vld [vmem:[%s1 + $0x30] sm:$0xff]
  %v34 = vld [vmem:[%s1 + $0x38] sm:$0xff]
  %v35 = vld [vmem:[%s3] sm:$0xff]
  %v36 = vld [vmem:[%s0] sm:$0xff]
  %v37 = vld [vmem:[%s0 + $0x8] sm:$0xff]
  %vm38 = vcmask 261120
  %v39 = vsel %vm38, %v36, 0.0
  %40 = vadd.xlane.f32.xlu0 %v39
  %v41 = vpop.xlane.xlu0 %40
  %v42 = vsel %vm38, %v37, 0.0
  %43 = vadd.xlane.f32.xlu0 %v42
  %v44 = vpop.xlane.xlu0 %43
  %v45 = vrcp.pop 32.0
  %v46 = vmul.f32 %v41, %v45
  %v47 = vmul.f32 %v44, %v45
  %v48 = vsub.f32 %v36, %v46
  %v49 = vsub.f32 %v37, %v47
  %v50 = vmul.f32 %v48, %v48
  %v51 = vmul.f32 %v49, %v49
  %v52 = vsel %vm38, %v50, 0.0
  %53 = vadd.xlane.f32.xlu0 %v52
  %v54 = vpop.xlane.xlu0 %53
  %v55 = vsel %vm38, %v51, 0.0
  %56 = vadd.xlane.f32.xlu0 %v55
  %v57 = vpop.xlane.xlu0 %56
  %v58 = vmul.f32 %v54, %v45
  %v59 = vmul.f32 %v57, %v45
  %v60 = vadd.f32 %v58, 1e-12
  %v61 = vadd.f32 %v59, 1e-12
  %v62 = vrsqrt.pop %v60
  %v63 = vrsqrt.pop %v61
  %v64 = vmul.f32 %v48, %v62
  %v65 = vmul.f32 %v49, %v63
  %v66 = vlaneseq
  %v67 = vshrl.u32 %v66, 7
  %v68 = vsub.s32 0, %v67
  %v69 = vrot.slane %v35, %v68
  %v70 = vmul.f32 %v64, %v69
  %v71 = vmul.f32 %v65, %v69
  %v72 = vlaneseq
  %v73 = vshrl.u32 %v72, 7
  %v74 = vsub.s32 1, %v73
  %v75 = vrot.slane %v35, %v74
  %v76 = vadd.f32 %v70, %v75
  %v77 = vadd.f32 %v71, %v75
  %v78 = vld [vmem:[%s4] sm:$0xff]
  %v79 = vld [vmem:[%s4 + $0x8] sm:$0xf]
  %v80 = vld [vmem:[%s4 + $0xc] sm:$0xff]
  %v81 = vld [vmem:[%s4 + $0x14] sm:$0xf]
  %v82 = vld [vmem:[%s4 + $0x18] sm:$0xff]
  %v83 = vld [vmem:[%s4 + $0x20] sm:$0xf]
  %v84 = vld [vmem:[%s4 + $0x24] sm:$0xff]
  %v85 = vld [vmem:[%s4 + $0x2c] sm:$0xf]
  %v86 = vld [vmem:[%s5] sm:$0xf]
  %v87 = vld [vmem:[%s5 + $0x4] sm:$0xf]
  %v88 = vld [vmem:[%s5 + $0x8] sm:$0xf]
  %v89 = vld [vmem:[%s5 + $0xc] sm:$0xf]
  %v90 = vld [vmem:[%s5 + $0x10] sm:$0xf]
  %v91 = vld [vmem:[%s5 + $0x14] sm:$0xf]
  %v92 = vld [vmem:[%s5 + $0x18] sm:$0xf]
  %v93 = vld [vmem:[%s5 + $0x1c] sm:$0xf]
  %v94 = vld [vmem:[%s2] sm:$0xff]
  %v95 = vpack.c.bf16 %v77, %v76
  %v96 = vlaneseq
  %v97 = vshrl.u32 %v96, 7
  %v98 = vsub.s32 0, %v97
  %v99 = vrot.slane %v94, %v98
  %v104 = vunpack.c.l.b16 %v78
  %v105 = vunpack.c.l.b16 %v80
  %v106 = vunpack.c.l.b16 %v82
  %v107 = vunpack.c.l.b16 %v84
  %v108 = vpack.c.b16 %v105, %v104
  %v109 = vpack.c.b16 %v107, %v106
  %v113 = vsel %vm38, %v95, 0
  %115 = vmatprep.subr.bf16.mxu0 0
  %116 = vmatpush1.bf16.msra.mxu0 %v108
  %117 = vmatprep.subr.bf16.mxu0 0
  %118 = vmatpush1.bf16.msra.mxu0 %v109
  %119 = vmatprep.subr.bf16.mxu0 0
  %120 = vmatpush1.bf16.msra.mxu0 0
  %121 = vmatprep.subr.bf16.mxu0 0
  %122 = vmatpush1.bf16.msra.mxu0 0
  %123 = vmatprep.subr.bf16.mxu0 0
  %124 = vmatpush1.bf16.msra.mxu0 0
  %125 = vmatprep.subr.bf16.mxu0 0
  %126 = vmatpush1.bf16.msra.mxu0 0
  %127 = vmatprep.subr.bf16.mxu0 0
  %128 = vmatpush1.bf16.msra.mxu0 0
  %129 = vmatprep.subr.bf16.mxu0 0
  %130 = vmatpush1.bf16.msra.mxu0 0
  %131 = vmatprep.subr.bf16.mxu0 0
  %132 = vmatpush1.bf16.msra.mxu0 0
  %133 = vmatprep.subr.bf16.mxu0 0
  %134 = vmatpush1.bf16.msra.mxu0 0
  %135 = vmatprep.subr.bf16.mxu0 0
  %136 = vmatpush1.bf16.msra.mxu0 0
  %137 = vmatprep.subr.bf16.mxu0 0
  %138 = vmatpush1.bf16.msra.mxu0 0
  %139 = vmatprep.subr.bf16.mxu0 0
  %140 = vmatpush1.bf16.msra.mxu0 0
  %141 = vmatprep.subr.bf16.mxu0 0
  %142 = vmatpush1.bf16.msra.mxu0 0
  %143 = vmatprep.subr.bf16.mxu0 0
  %144 = vmatpush1.bf16.msra.mxu0 0
  %145 = vmatprep.subr.bf16.mxu0 0
  %146 = vmatpush1.bf16.msra.mxu0 0
  %147 = vmatprep.mubr.bf16.mxu0 0
  %148 = vmatmul.mubr.bf16.gmra.mrb[0].mxu0 %v113
  %v149 = vpop.f32.mrb[0].mxu0
  %v150 = vadd.f32 %v99, %v149
  %v151 = vpop.f32.mrb[0].mxu0
  %v152 = vpop.f32.mrb[0].mxu0
  %v153 = vadd.f32 %v99, %v152
  %v154 = vpop.f32.mrb[0].mxu0
  %155 = vdwg.mxu0
  %v156 = vpack.c.bf16 %v153, %v150
  %v158 = vunpack.c.l.b16 %v156
  %v159 = vunpack.c.h.b16 %v156
  %v160 = vpack.c.b16 %v158, %v158
  %v161 = vpack.c.b16 %v159, %v159
  %162 = vrot.lane.b32.xlu0 %v160, 120
  %v163 = vpop.permute.xlu0 %162
  %164 = vrot.lane.b32.xlu0 %v161, 120
  %v165 = vpop.permute.xlu0 %164
  %166 = vrot.lane.b32.xlu0 %v160, 112
  %v167 = vpop.permute.xlu0 %166
  %168 = vrot.lane.b32.xlu0 %v161, 112
  %v169 = vpop.permute.xlu0 %168
  %170 = vrot.lane.b32.xlu0 %v160, 104
  %v171 = vpop.permute.xlu0 %170
  %172 = vrot.lane.b32.xlu0 %v161, 104
  %v173 = vpop.permute.xlu0 %172
  %174 = vrot.lane.b32.xlu0 %v160, 96
  %v175 = vpop.permute.xlu0 %174
  %vm176 = vcmask 64512
  %v178 = vsel %vm176, %v160, 0
  %v181 = vsel %vm176, %v175, 0
  %183 = vmatprep.subr.bf16.mxu0 0
  %184 = vmatpush1.bf16.xpose.msra.mxu0 %v181
  %185 = vmatprep.subr.bf16.mxu0 0
  %186 = vmatpush1.bf16.xpose.msra.mxu0 0
  %187 = vmatprep.subr.bf16.mxu0 0
  %188 = vmatpush1.bf16.xpose.msra.mxu0 0
  %189 = vmatprep.subr.bf16.mxu0 0
  %190 = vmatpush1.bf16.xpose.msra.mxu0 0
  %191 = vmatprep.subr.bf16.mxu0 0
  %192 = vmatpush1.bf16.xpose.msra.mxu0 0
  %193 = vmatprep.subr.bf16.mxu0 0
  %194 = vmatpush1.bf16.xpose.msra.mxu0 0
  %195 = vmatprep.subr.bf16.mxu0 0
  %196 = vmatpush1.bf16.xpose.msra.mxu0 0
  %197 = vmatprep.subr.bf16.mxu0 0
  %198 = vmatpush1.bf16.xpose.msra.mxu0 0
  %199 = vmatprep.subr.bf16.mxu0 0
  %200 = vmatpush1.bf16.xpose.msra.mxu0 0
  %201 = vmatprep.subr.bf16.mxu0 0
  %202 = vmatpush1.bf16.xpose.msra.mxu0 0
  %203 = vmatprep.subr.bf16.mxu0 0
  %204 = vmatpush1.bf16.xpose.msra.mxu0 0
  %205 = vmatprep.subr.bf16.mxu0 0
  %206 = vmatpush1.bf16.xpose.msra.mxu0 0
  %207 = vmatprep.subr.bf16.mxu0 0
  %208 = vmatpush1.bf16.xpose.msra.mxu0 0
  %209 = vmatprep.subr.bf16.mxu0 0
  %210 = vmatpush1.bf16.xpose.msra.mxu0 0
  %211 = vmatprep.subr.bf16.mxu0 0
  %212 = vmatpush1.bf16.xpose.msra.mxu0 0
  %213 = vmatprep.subr.bf16.mxu0 0
  %214 = vmatpush1.bf16.xpose.msra.mxu0 0
  %215 = vmatprep.mubr.bf16.mxu0 0
  %216 = vmatmul.mubr.bf16.gmra.mrb[0].mxu0 %v178
  %v217 = vpop.f32.mrb[0].mxu0
  %v218 = vadd.f32 %v27, %v217
  %v219 = vpop.f32.mrb[0].mxu0
  %v220 = vpop.f32.mrb[0].mxu0
  %v221 = vpop.f32.mrb[0].mxu0
  %222 = vdwg.mxu0
  %223 = vrot.lane.b32.xlu0 %v161, 96
  %v224 = vpop.permute.xlu0 %223
  %v226 = vsel %vm176, %v161, 0
  %v229 = vsel %vm176, %v224, 0
  %231 = vmatprep.subr.bf16.mxu0 0
  %232 = vmatpush1.bf16.xpose.msra.mxu0 %v229
  %233 = vmatprep.subr.bf16.mxu0 0
  %234 = vmatpush1.bf16.xpose.msra.mxu0 0
  %235 = vmatprep.subr.bf16.mxu0 0
  %236 = vmatpush1.bf16.xpose.msra.mxu0 0
  %237 = vmatprep.subr.bf16.mxu0 0
  %238 = vmatpush1.bf16.xpose.msra.mxu0 0
  %239 = vmatprep.subr.bf16.mxu0 0
  %240 = vmatpush1.bf16.xpose.msra.mxu0 0
  %241 = vmatprep.subr.bf16.mxu0 0
  %242 = vmatpush1.bf16.xpose.msra.mxu0 0
  %243 = vmatprep.subr.bf16.mxu0 0
  %244 = vmatpush1.bf16.xpose.msra.mxu0 0
  %245 = vmatprep.subr.bf16.mxu0 0
  %246 = vmatpush1.bf16.xpose.msra.mxu0 0
  %247 = vmatprep.subr.bf16.mxu0 0
  %248 = vmatpush1.bf16.xpose.msra.mxu0 0
  %249 = vmatprep.subr.bf16.mxu0 0
  %250 = vmatpush1.bf16.xpose.msra.mxu0 0
  %251 = vmatprep.subr.bf16.mxu0 0
  %252 = vmatpush1.bf16.xpose.msra.mxu0 0
  %253 = vmatprep.subr.bf16.mxu0 0
  %254 = vmatpush1.bf16.xpose.msra.mxu0 0
  %255 = vmatprep.subr.bf16.mxu0 0
  %256 = vmatpush1.bf16.xpose.msra.mxu0 0
  %257 = vmatprep.subr.bf16.mxu0 0
  %258 = vmatpush1.bf16.xpose.msra.mxu0 0
  %259 = vmatprep.subr.bf16.mxu0 0
  %260 = vmatpush1.bf16.xpose.msra.mxu0 0
  %261 = vmatprep.subr.bf16.mxu0 0
  %262 = vmatpush1.bf16.xpose.msra.mxu0 0
  %263 = vmatprep.mubr.bf16.mxu0 0
  %264 = vmatmul.mubr.bf16.gmra.mrb[0].mxu0 %v226
  %v265 = vpop.f32.mrb[0].mxu0
  %v266 = vadd.f32 %v28, %v265
  %v267 = vpop.f32.mrb[0].mxu0
  %v268 = vpop.f32.mrb[0].mxu0
  %v269 = vpop.f32.mrb[0].mxu0
  %270 = vdwg.mxu0
  %v271 = vunpack.c.l.b16 %v163
  %v272 = vpack.c.b16 %v271, %v271
  %273 = vrot.lane.b32.xlu0 %v272, 96
  %v274 = vpop.permute.xlu0 %273
  %v276 = vsel %vm176, %v163, 0
  %v279 = vsel %vm176, %v274, 0
  %281 = vmatprep.subr.bf16.mxu0 0
  %282 = vmatpush1.bf16.xpose.msra.mxu0 %v279
  %283 = vmatprep.subr.bf16.mxu0 0
  %284 = vmatpush1.bf16.xpose.msra.mxu0 0
  %285 = vmatprep.subr.bf16.mxu0 0
  %286 = vmatpush1.bf16.xpose.msra.mxu0 0
  %287 = vmatprep.subr.bf16.mxu0 0
  %288 = vmatpush1.bf16.xpose.msra.mxu0 0
  %289 = vmatprep.subr.bf16.mxu0 0
  %290 = vmatpush1.bf16.xpose.msra.mxu0 0
  %291 = vmatprep.subr.bf16.mxu0 0
  %292 = vmatpush1.bf16.xpose.msra.mxu0 0
  %293 = vmatprep.subr.bf16.mxu0 0
  %294 = vmatpush1.bf16.xpose.msra.mxu0 0
  %295 = vmatprep.subr.bf16.mxu0 0
  %296 = vmatpush1.bf16.xpose.msra.mxu0 0
  %297 = vmatprep.subr.bf16.mxu0 0
  %298 = vmatpush1.bf16.xpose.msra.mxu0 0
  %299 = vmatprep.subr.bf16.mxu0 0
  %300 = vmatpush1.bf16.xpose.msra.mxu0 0
  %301 = vmatprep.subr.bf16.mxu0 0
  %302 = vmatpush1.bf16.xpose.msra.mxu0 0
  %303 = vmatprep.subr.bf16.mxu0 0
  %304 = vmatpush1.bf16.xpose.msra.mxu0 0
  %305 = vmatprep.subr.bf16.mxu0 0
  %306 = vmatpush1.bf16.xpose.msra.mxu0 0
  %307 = vmatprep.subr.bf16.mxu0 0
  %308 = vmatpush1.bf16.xpose.msra.mxu0 0
  %309 = vmatprep.subr.bf16.mxu0 0
  %310 = vmatpush1.bf16.xpose.msra.mxu0 0
  %311 = vmatprep.subr.bf16.mxu0 0
  %312 = vmatpush1.bf16.xpose.msra.mxu0 0
  %313 = vmatprep.mubr.bf16.mxu0 0
  %314 = vmatmul.mubr.bf16.gmra.mrb[0].mxu0 %v276
  %v315 = vpop.f32.mrb[0].mxu0
  %v316 = vadd.f32 %v29, %v315
  %v317 = vpop.f32.mrb[0].mxu0
  %v318 = vpop.f32.mrb[0].mxu0
  %v319 = vpop.f32.mrb[0].mxu0
  %320 = vdwg.mxu0
  %v321 = vunpack.c.l.b16 %v165
  %v322 = vpack.c.b16 %v321, %v321
  %323 = vrot.lane.b32.xlu0 %v322, 96
  %v324 = vpop.permute.xlu0 %323
  %v326 = vsel %vm176, %v165, 0
  %v329 = vsel %vm176, %v324, 0
  %331 = vmatprep.subr.bf16.mxu0 0
  %332 = vmatpush1.bf16.xpose.msra.mxu0 %v329
  %333 = vmatprep.subr.bf16.mxu0 0
  %334 = vmatpush1.bf16.xpose.msra.mxu0 0
  %335 = vmatprep.subr.bf16.mxu0 0
  %336 = vmatpush1.bf16.xpose.msra.mxu0 0
  %337 = vmatprep.subr.bf16.mxu0 0
  %338 = vmatpush1.bf16.xpose.msra.mxu0 0
  %339 = vmatprep.subr.bf16.mxu0 0
  %340 = vmatpush1.bf16.xpose.msra.mxu0 0
  %341 = vmatprep.subr.bf16.mxu0 0
  %342 = vmatpush1.bf16.xpose.msra.mxu0 0
  %343 = vmatprep.subr.bf16.mxu0 0
  %344 = vmatpush1.bf16.xpose.msra.mxu0 0
  %345 = vmatprep.subr.bf16.mxu0 0
  %346 = vmatpush1.bf16.xpose.msra.mxu0 0
  %347 = vmatprep.subr.bf16.mxu0 0
  %348 = vmatpush1.bf16.xpose.msra.mxu0 0
  %349 = vmatprep.subr.bf16.mxu0 0
  %350 = vmatpush1.bf16.xpose.msra.mxu0 0
  %351 = vmatprep.subr.bf16.mxu0 0
  %352 = vmatpush1.bf16.xpose.msra.mxu0 0
  %353 = vmatprep.subr.bf16.mxu0 0
  %354 = vmatpush1.bf16.xpose.msra.mxu0 0
  %355 = vmatprep.subr.bf16.mxu0 0
  %356 = vmatpush1.bf16.xpose.msra.mxu0 0
  %357 = vmatprep.subr.bf16.mxu0 0
  %358 = vmatpush1.bf16.xpose.msra.mxu0 0
  %359 = vmatprep.subr.bf16.mxu0 0
  %360 = vmatpush1.bf16.xpose.msra.mxu0 0
  %361 = vmatprep.subr.bf16.mxu0 0
  %362 = vmatpush1.bf16.xpose.msra.mxu0 0
  %363 = vmatprep.mubr.bf16.mxu0 0
  %364 = vmatmul.mubr.bf16.gmra.mrb[0].mxu0 %v326
  %v365 = vpop.f32.mrb[0].mxu0
  %v366 = vadd.f32 %v30, %v365
  %v367 = vpop.f32.mrb[0].mxu0
  %v368 = vpop.f32.mrb[0].mxu0
  %v369 = vpop.f32.mrb[0].mxu0
  %370 = vdwg.mxu0
  %v371 = vunpack.c.l.b16 %v167
  %v372 = vpack.c.b16 %v371, %v371
  %373 = vrot.lane.b32.xlu0 %v372, 96
  %v374 = vpop.permute.xlu0 %373
  %v376 = vsel %vm176, %v167, 0
  %v379 = vsel %vm176, %v374, 0
  %381 = vmatprep.subr.bf16.mxu0 0
  %382 = vmatpush1.bf16.xpose.msra.mxu0 %v379
  %383 = vmatprep.subr.bf16.mxu0 0
  %384 = vmatpush1.bf16.xpose.msra.mxu0 0
  %385 = vmatprep.subr.bf16.mxu0 0
  %386 = vmatpush1.bf16.xpose.msra.mxu0 0
  %387 = vmatprep.subr.bf16.mxu0 0
  %388 = vmatpush1.bf16.xpose.msra.mxu0 0
  %389 = vmatprep.subr.bf16.mxu0 0
  %390 = vmatpush1.bf16.xpose.msra.mxu0 0
  %391 = vmatprep.subr.bf16.mxu0 0
  %392 = vmatpush1.bf16.xpose.msra.mxu0 0
  %393 = vmatprep.subr.bf16.mxu0 0
  %394 = vmatpush1.bf16.xpose.msra.mxu0 0
  %395 = vmatprep.subr.bf16.mxu0 0
  %396 = vmatpush1.bf16.xpose.msra.mxu0 0
  %397 = vmatprep.subr.bf16.mxu0 0
  %398 = vmatpush1.bf16.xpose.msra.mxu0 0
  %399 = vmatprep.subr.bf16.mxu0 0
  %400 = vmatpush1.bf16.xpose.msra.mxu0 0
  %401 = vmatprep.subr.bf16.mxu0 0
  %402 = vmatpush1.bf16.xpose.msra.mxu0 0
  %403 = vmatprep.subr.bf16.mxu0 0
  %404 = vmatpush1.bf16.xpose.msra.mxu0 0
  %405 = vmatprep.subr.bf16.mxu0 0
  %406 = vmatpush1.bf16.xpose.msra.mxu0 0
  %407 = vmatprep.subr.bf16.mxu0 0
  %408 = vmatpush1.bf16.xpose.msra.mxu0 0
  %409 = vmatprep.subr.bf16.mxu0 0
  %410 = vmatpush1.bf16.xpose.msra.mxu0 0
  %411 = vmatprep.subr.bf16.mxu0 0
  %412 = vmatpush1.bf16.xpose.msra.mxu0 0
  %413 = vmatprep.mubr.bf16.mxu0 0
  %414 = vmatmul.mubr.bf16.gmra.mrb[0].mxu0 %v376
  %v415 = vpop.f32.mrb[0].mxu0
  %v416 = vadd.f32 %v31, %v415
  %v417 = vpop.f32.mrb[0].mxu0
  %v418 = vpop.f32.mrb[0].mxu0
  %v419 = vpop.f32.mrb[0].mxu0
  %420 = vdwg.mxu0
  %v421 = vunpack.c.l.b16 %v169
  %v422 = vpack.c.b16 %v421, %v421
  %423 = vrot.lane.b32.xlu0 %v422, 96
  %v424 = vpop.permute.xlu0 %423
  %v426 = vsel %vm176, %v169, 0
  %v429 = vsel %vm176, %v424, 0
  %431 = vmatprep.subr.bf16.mxu0 0
  %432 = vmatpush1.bf16.xpose.msra.mxu0 %v429
  %433 = vmatprep.subr.bf16.mxu0 0
  %434 = vmatpush1.bf16.xpose.msra.mxu0 0
  %435 = vmatprep.subr.bf16.mxu0 0
  %436 = vmatpush1.bf16.xpose.msra.mxu0 0
  %437 = vmatprep.subr.bf16.mxu0 0
  %438 = vmatpush1.bf16.xpose.msra.mxu0 0
  %439 = vmatprep.subr.bf16.mxu0 0
  %440 = vmatpush1.bf16.xpose.msra.mxu0 0
  %441 = vmatprep.subr.bf16.mxu0 0
  %442 = vmatpush1.bf16.xpose.msra.mxu0 0
  %443 = vmatprep.subr.bf16.mxu0 0
  %444 = vmatpush1.bf16.xpose.msra.mxu0 0
  %445 = vmatprep.subr.bf16.mxu0 0
  %446 = vmatpush1.bf16.xpose.msra.mxu0 0
  %447 = vmatprep.subr.bf16.mxu0 0
  %448 = vmatpush1.bf16.xpose.msra.mxu0 0
  %449 = vmatprep.subr.bf16.mxu0 0
  %450 = vmatpush1.bf16.xpose.msra.mxu0 0
  %451 = vmatprep.subr.bf16.mxu0 0
  %452 = vmatpush1.bf16.xpose.msra.mxu0 0
  %453 = vmatprep.subr.bf16.mxu0 0
  %454 = vmatpush1.bf16.xpose.msra.mxu0 0
  %455 = vmatprep.subr.bf16.mxu0 0
  %456 = vmatpush1.bf16.xpose.msra.mxu0 0
  %457 = vmatprep.subr.bf16.mxu0 0
  %458 = vmatpush1.bf16.xpose.msra.mxu0 0
  %459 = vmatprep.subr.bf16.mxu0 0
  %460 = vmatpush1.bf16.xpose.msra.mxu0 0
  %461 = vmatprep.subr.bf16.mxu0 0
  %462 = vmatpush1.bf16.xpose.msra.mxu0 0
  %463 = vmatprep.mubr.bf16.mxu0 0
  %464 = vmatmul.mubr.bf16.gmra.mrb[0].mxu0 %v426
  %v465 = vpop.f32.mrb[0].mxu0
  %v466 = vadd.f32 %v32, %v465
  %v467 = vpop.f32.mrb[0].mxu0
  %v468 = vpop.f32.mrb[0].mxu0
  %v469 = vpop.f32.mrb[0].mxu0
  %470 = vdwg.mxu0
  %v471 = vunpack.c.l.b16 %v171
  %v472 = vpack.c.b16 %v471, %v471
  %473 = vrot.lane.b32.xlu0 %v472, 96
  %v474 = vpop.permute.xlu0 %473
  %v476 = vsel %vm176, %v171, 0
  %v479 = vsel %vm176, %v474, 0
  %481 = vmatprep.subr.bf16.mxu0 0
  %482 = vmatpush1.bf16.xpose.msra.mxu0 %v479
  %483 = vmatprep.subr.bf16.mxu0 0
  %484 = vmatpush1.bf16.xpose.msra.mxu0 0
  %485 = vmatprep.subr.bf16.mxu0 0
  %486 = vmatpush1.bf16.xpose.msra.mxu0 0
  %487 = vmatprep.subr.bf16.mxu0 0
  %488 = vmatpush1.bf16.xpose.msra.mxu0 0
  %489 = vmatprep.subr.bf16.mxu0 0
  %490 = vmatpush1.bf16.xpose.msra.mxu0 0
  %491 = vmatprep.subr.bf16.mxu0 0
  %492 = vmatpush1.bf16.xpose.msra.mxu0 0
  %493 = vmatprep.subr.bf16.mxu0 0
  %494 = vmatpush1.bf16.xpose.msra.mxu0 0
  %495 = vmatprep.subr.bf16.mxu0 0
  %496 = vmatpush1.bf16.xpose.msra.mxu0 0
  %497 = vmatprep.subr.bf16.mxu0 0
  %498 = vmatpush1.bf16.xpose.msra.mxu0 0
  %499 = vmatprep.subr.bf16.mxu0 0
  %500 = vmatpush1.bf16.xpose.msra.mxu0 0
  %501 = vmatprep.subr.bf16.mxu0 0
  %502 = vmatpush1.bf16.xpose.msra.mxu0 0
  %503 = vmatprep.subr.bf16.mxu0 0
  %504 = vmatpush1.bf16.xpose.msra.mxu0 0
  %505 = vmatprep.subr.bf16.mxu0 0
  %506 = vmatpush1.bf16.xpose.msra.mxu0 0
  %507 = vmatprep.subr.bf16.mxu0 0
  %508 = vmatpush1.bf16.xpose.msra.mxu0 0
  %509 = vmatprep.subr.bf16.mxu0 0
  %510 = vmatpush1.bf16.xpose.msra.mxu0 0
  %511 = vmatprep.subr.bf16.mxu0 0
  %512 = vmatpush1.bf16.xpose.msra.mxu0 0
  %513 = vmatprep.mubr.bf16.mxu0 0
  %514 = vmatmul.mubr.bf16.gmra.mrb[0].mxu0 %v476
  %v515 = vpop.f32.mrb[0].mxu0
  %v516 = vadd.f32 %v33, %v515
  %v517 = vpop.f32.mrb[0].mxu0
  %v518 = vpop.f32.mrb[0].mxu0
  %v519 = vpop.f32.mrb[0].mxu0
  %520 = vdwg.mxu0
  %v521 = vunpack.c.l.b16 %v173
  %v522 = vpack.c.b16 %v521, %v521
  %523 = vrot.lane.b32.xlu0 %v522, 96
  %v524 = vpop.permute.xlu0 %523
  %v526 = vsel %vm176, %v173, 0
  %v529 = vsel %vm176, %v524, 0
  %531 = vmatprep.subr.bf16.mxu0 0
  %532 = vmatpush1.bf16.xpose.msra.mxu0 %v529
  %533 = vmatprep.subr.bf16.mxu0 0
  %534 = vmatpush1.bf16.xpose.msra.mxu0 0
  %535 = vmatprep.subr.bf16.mxu0 0
  %536 = vmatpush1.bf16.xpose.msra.mxu0 0
  %537 = vmatprep.subr.bf16.mxu0 0
  %538 = vmatpush1.bf16.xpose.msra.mxu0 0
  %539 = vmatprep.subr.bf16.mxu0 0
  %540 = vmatpush1.bf16.xpose.msra.mxu0 0
  %541 = vmatprep.subr.bf16.mxu0 0
  %542 = vmatpush1.bf16.xpose.msra.mxu0 0
  %543 = vmatprep.subr.bf16.mxu0 0
  %544 = vmatpush1.bf16.xpose.msra.mxu0 0
  %545 = vmatprep.subr.bf16.mxu0 0
  %546 = vmatpush1.bf16.xpose.msra.mxu0 0
  %547 = vmatprep.subr.bf16.mxu0 0
  %548 = vmatpush1.bf16.xpose.msra.mxu0 0
  %549 = vmatprep.subr.bf16.mxu0 0
  %550 = vmatpush1.bf16.xpose.msra.mxu0 0
  %551 = vmatprep.subr.bf16.mxu0 0
  %552 = vmatpush1.bf16.xpose.msra.mxu0 0
  %553 = vmatprep.subr.bf16.mxu0 0
  %554 = vmatpush1.bf16.xpose.msra.mxu0 0
  %555 = vmatprep.subr.bf16.mxu0 0
  %556 = vmatpush1.bf16.xpose.msra.mxu0 0
  %557 = vmatprep.subr.bf16.mxu0 0
  %558 = vmatpush1.bf16.xpose.msra.mxu0 0
  %559 = vmatprep.subr.bf16.mxu0 0
  %560 = vmatpush1.bf16.xpose.msra.mxu0 0
  %561 = vmatprep.subr.bf16.mxu0 0
  %562 = vmatpush1.bf16.xpose.msra.mxu0 0
  %563 = vmatprep.mubr.bf16.mxu0 0
  %564 = vmatmul.mubr.bf16.gmra.mrb[0].mxu0 %v526
  %v565 = vpop.f32.mrb[0].mxu0
  %v566 = vadd.f32 %v34, %v565
  %v567 = vpop.f32.mrb[0].mxu0
  %v568 = vpop.f32.mrb[0].mxu0
  %v569 = vpop.f32.mrb[0].mxu0
  %570 = vdwg.mxu0
  %v571 = vsel %vm176, %v218, -inf
  %572 = vmax.xlane.f32.xlu0 %v571
  %v573 = vpop.xlane.xlu0 %572
  %v574 = vsel %vm176, %v266, -inf
  %575 = vmax.xlane.f32.xlu0 %v574
  %v576 = vpop.xlane.xlu0 %575
  %v577 = vsel %vm176, %v316, -inf
  %578 = vmax.xlane.f32.xlu0 %v577
  %v579 = vpop.xlane.xlu0 %578
  %v580 = vsel %vm176, %v366, -inf
  %581 = vmax.xlane.f32.xlu0 %v580
  %v582 = vpop.xlane.xlu0 %581
  %v583 = vsel %vm176, %v416, -inf
  %584 = vmax.xlane.f32.xlu0 %v583
  %v585 = vpop.xlane.xlu0 %584
  %v586 = vsel %vm176, %v466, -inf
  %587 = vmax.xlane.f32.xlu0 %v586
  %v588 = vpop.xlane.xlu0 %587
  %v589 = vsel %vm176, %v516, -inf
  %590 = vmax.xlane.f32.xlu0 %v589
  %v591 = vpop.xlane.xlu0 %590
  %v592 = vsel %vm176, %v566, -inf
  %593 = vmax.xlane.f32.xlu0 %v592
  %v594 = vpop.xlane.xlu0 %593
  %v595 = vsub.f32 %v218, %v573
  %v596 = vsub.f32 %v266, %v576
  %v597 = vsub.f32 %v316, %v579
  %v598 = vsub.f32 %v366, %v582
  %v599 = vsub.f32 %v416, %v585
  %v600 = vsub.f32 %v466, %v588
  %v601 = vsub.f32 %v516, %v591
  %v602 = vsub.f32 %v566, %v594
  %v603 = vmul.f32 %v595, 1.442695
  %v604 = vpow.pop %v603
  %v605 = vmul.f32 %v596, 1.442695
  %v606 = vpow.pop %v605
  %v607 = vmul.f32 %v597, 1.442695
  %v608 = vpow.pop %v607
  %v609 = vmul.f32 %v598, 1.442695
  %v610 = vpow.pop %v609
  %v611 = vmul.f32 %v599, 1.442695
  %v612 = vpow.pop %v611
  %v613 = vmul.f32 %v600, 1.442695
  %v614 = vpow.pop %v613
  %v615 = vmul.f32 %v601, 1.442695
  %v616 = vpow.pop %v615
  %v617 = vmul.f32 %v602, 1.442695
  %v618 = vpow.pop %v617
  %v619 = vsel %vm176, %v604, 0.0
  %620 = vadd.xlane.f32.xlu0 %v619
  %v621 = vpop.xlane.xlu0 %620
  %v622 = vsel %vm176, %v606, 0.0
  %623 = vadd.xlane.f32.xlu0 %v622
  %v624 = vpop.xlane.xlu0 %623
  %v625 = vsel %vm176, %v608, 0.0
  %626 = vadd.xlane.f32.xlu0 %v625
  %v627 = vpop.xlane.xlu0 %626
  %v628 = vsel %vm176, %v610, 0.0
  %629 = vadd.xlane.f32.xlu0 %v628
  %v630 = vpop.xlane.xlu0 %629
  %v631 = vsel %vm176, %v612, 0.0
  %632 = vadd.xlane.f32.xlu0 %v631
  %v633 = vpop.xlane.xlu0 %632
  %v634 = vsel %vm176, %v614, 0.0
  %635 = vadd.xlane.f32.xlu0 %v634
  %v636 = vpop.xlane.xlu0 %635
  %v637 = vsel %vm176, %v616, 0.0
  %638 = vadd.xlane.f32.xlu0 %v637
  %v639 = vpop.xlane.xlu0 %638
  %v640 = vsel %vm176, %v618, 0.0
  %641 = vadd.xlane.f32.xlu0 %v640
  %v642 = vpop.xlane.xlu0 %641
  %v643 = vrcp.pop %v621
  %v644 = vrcp.pop %v624
  %v645 = vrcp.pop %v627
  %v646 = vrcp.pop %v630
  %v647 = vrcp.pop %v633
  %v648 = vrcp.pop %v636
  %v649 = vrcp.pop %v639
  %v650 = vrcp.pop %v642
  %v651 = vmul.f32 %v604, %v643
  %v652 = vmul.f32 %v606, %v644
  %v653 = vmul.f32 %v608, %v645
  %v654 = vmul.f32 %v610, %v646
  %v655 = vmul.f32 %v612, %v647
  %v656 = vmul.f32 %v614, %v648
  %v657 = vmul.f32 %v616, %v649
  %v658 = vmul.f32 %v618, %v650
  %v659 = vpack.c.bf16 %v651, %v651
  %v660 = vpack.c.bf16 %v652, %v652
  %v661 = vpack.c.bf16 %v653, %v653
  %v662 = vpack.c.bf16 %v654, %v654
  %v663 = vpack.c.bf16 %v655, %v655
  %v664 = vpack.c.bf16 %v656, %v656
  %v665 = vpack.c.bf16 %v657, %v657
  %v666 = vpack.c.bf16 %v658, %v658
  %667 = vrot.lane.b32.xlu0 %v160, 64
  %v668 = vpop.permute.xlu0 %667
  %v670 = vsel %vm176, %v659, 0
  %vm672 = vcmask 1043456
  %v674 = vsel %vm672, %v668, 0
  %676 = vmatprep.subr.bf16.mxu0 0
  %677 = vmatpush1.bf16.msra.mxu0 %v674
  %678 = vmatprep.subr.bf16.mxu0 0
  %679 = vmatpush1.bf16.msra.mxu0 0
  %680 = vmatprep.subr.bf16.mxu0 0
  %681 = vmatpush1.bf16.msra.mxu0 0
  %682 = vmatprep.subr.bf16.mxu0 0
  %683 = vmatpush1.bf16.msra.mxu0 0
  %684 = vmatprep.subr.bf16.mxu0 0
  %685 = vmatpush1.bf16.msra.mxu0 0
  %686 = vmatprep.subr.bf16.mxu0 0
  %687 = vmatpush1.bf16.msra.mxu0 0
  %688 = vmatprep.subr.bf16.mxu0 0
  %689 = vmatpush1.bf16.msra.mxu0 0
  %690 = vmatprep.subr.bf16.mxu0 0
  %691 = vmatpush1.bf16.msra.mxu0 0
  %692 = vmatprep.subr.bf16.mxu0 0
  %693 = vmatpush1.bf16.msra.mxu0 0
  %694 = vmatprep.subr.bf16.mxu0 0
  %695 = vmatpush1.bf16.msra.mxu0 0
  %696 = vmatprep.subr.bf16.mxu0 0
  %697 = vmatpush1.bf16.msra.mxu0 0
  %698 = vmatprep.subr.bf16.mxu0 0
  %699 = vmatpush1.bf16.msra.mxu0 0
  %700 = vmatprep.subr.bf16.mxu0 0
  %701 = vmatpush1.bf16.msra.mxu0 0
  %702 = vmatprep.subr.bf16.mxu0 0
  %703 = vmatpush1.bf16.msra.mxu0 0
  %704 = vmatprep.subr.bf16.mxu0 0
  %705 = vmatpush1.bf16.msra.mxu0 0
  %706 = vmatprep.subr.bf16.mxu0 0
  %707 = vmatpush1.bf16.msra.mxu0 0
  %708 = vmatprep.mubr.bf16.mxu0 0
  %709 = vmatmul.mubr.bf16.gmra.mrb[0].mxu0 %v670
  %v710 = vpop.f32.mrb[0].mxu0
  %v711 = vadd.f32 0.0, %v710
  %v712 = vpop.f32.mrb[0].mxu0
  %v713 = vpop.f32.mrb[0].mxu0
  %v714 = vpop.f32.mrb[0].mxu0
  %715 = vdwg.mxu0
  %716 = vrot.lane.b32.xlu0 %v161, 64
  %v717 = vpop.permute.xlu0 %716
  %v719 = vsel %vm176, %v660, 0
  %v722 = vsel %vm672, %v717, 0
  %724 = vmatprep.subr.bf16.mxu0 0
  %725 = vmatpush1.bf16.msra.mxu0 %v722
  %726 = vmatprep.subr.bf16.mxu0 0
  %727 = vmatpush1.bf16.msra.mxu0 0
  %728 = vmatprep.subr.bf16.mxu0 0
  %729 = vmatpush1.bf16.msra.mxu0 0
  %730 = vmatprep.subr.bf16.mxu0 0
  %731 = vmatpush1.bf16.msra.mxu0 0
  %732 = vmatprep.subr.bf16.mxu0 0
  %733 = vmatpush1.bf16.msra.mxu0 0
  %734 = vmatprep.subr.bf16.mxu0 0
  %735 = vmatpush1.bf16.msra.mxu0 0
  %736 = vmatprep.subr.bf16.mxu0 0
  %737 = vmatpush1.bf16.msra.mxu0 0
  %738 = vmatprep.subr.bf16.mxu0 0
  %739 = vmatpush1.bf16.msra.mxu0 0
  %740 = vmatprep.subr.bf16.mxu0 0
  %741 = vmatpush1.bf16.msra.mxu0 0
  %742 = vmatprep.subr.bf16.mxu0 0
  %743 = vmatpush1.bf16.msra.mxu0 0
  %744 = vmatprep.subr.bf16.mxu0 0
  %745 = vmatpush1.bf16.msra.mxu0 0
  %746 = vmatprep.subr.bf16.mxu0 0
  %747 = vmatpush1.bf16.msra.mxu0 0
  %748 = vmatprep.subr.bf16.mxu0 0
  %749 = vmatpush1.bf16.msra.mxu0 0
  %750 = vmatprep.subr.bf16.mxu0 0
  %751 = vmatpush1.bf16.msra.mxu0 0
  %752 = vmatprep.subr.bf16.mxu0 0
  %753 = vmatpush1.bf16.msra.mxu0 0
  %754 = vmatprep.subr.bf16.mxu0 0
  %755 = vmatpush1.bf16.msra.mxu0 0
  %756 = vmatprep.mubr.bf16.mxu0 0
  %757 = vmatmul.mubr.bf16.gmra.mrb[0].mxu0 %v719
  %v758 = vpop.f32.mrb[0].mxu0
  %v759 = vadd.f32 0.0, %v758
  %v760 = vpop.f32.mrb[0].mxu0
  %v761 = vpop.f32.mrb[0].mxu0
  %v762 = vpop.f32.mrb[0].mxu0
  %763 = vdwg.mxu0
  %764 = vrot.lane.b32.xlu0 %v272, 64
  %v765 = vpop.permute.xlu0 %764
  %v767 = vsel %vm176, %v661, 0
  %v770 = vsel %vm672, %v765, 0
  %772 = vmatprep.subr.bf16.mxu0 0
  %773 = vmatpush1.bf16.msra.mxu0 %v770
  %774 = vmatprep.subr.bf16.mxu0 0
  %775 = vmatpush1.bf16.msra.mxu0 0
  %776 = vmatprep.subr.bf16.mxu0 0
  %777 = vmatpush1.bf16.msra.mxu0 0
  %778 = vmatprep.subr.bf16.mxu0 0
  %779 = vmatpush1.bf16.msra.mxu0 0
  %780 = vmatprep.subr.bf16.mxu0 0
  %781 = vmatpush1.bf16.msra.mxu0 0
  %782 = vmatprep.subr.bf16.mxu0 0
  %783 = vmatpush1.bf16.msra.mxu0 0
  %784 = vmatprep.subr.bf16.mxu0 0
  %785 = vmatpush1.bf16.msra.mxu0 0
  %786 = vmatprep.subr.bf16.mxu0 0
  %787 = vmatpush1.bf16.msra.mxu0 0
  %788 = vmatprep.subr.bf16.mxu0 0
  %789 = vmatpush1.bf16.msra.mxu0 0
  %790 = vmatprep.subr.bf16.mxu0 0
  %791 = vmatpush1.bf16.msra.mxu0 0
  %792 = vmatprep.subr.bf16.mxu0 0
  %793 = vmatpush1.bf16.msra.mxu0 0
  %794 = vmatprep.subr.bf16.mxu0 0
  %795 = vmatpush1.bf16.msra.mxu0 0
  %796 = vmatprep.subr.bf16.mxu0 0
  %797 = vmatpush1.bf16.msra.mxu0 0
  %798 = vmatprep.subr.bf16.mxu0 0
  %799 = vmatpush1.bf16.msra.mxu0 0
  %800 = vmatprep.subr.bf16.mxu0 0
  %801 = vmatpush1.bf16.msra.mxu0 0
  %802 = vmatprep.subr.bf16.mxu0 0
  %803 = vmatpush1.bf16.msra.mxu0 0
  %804 = vmatprep.mubr.bf16.mxu0 0
  %805 = vmatmul.mubr.bf16.gmra.mrb[0].mxu0 %v767
  %v806 = vpop.f32.mrb[0].mxu0
  %v807 = vadd.f32 0.0, %v806
  %v808 = vpop.f32.mrb[0].mxu0
  %v809 = vpop.f32.mrb[0].mxu0
  %v810 = vpop.f32.mrb[0].mxu0
  %811 = vdwg.mxu0
  %812 = vrot.lane.b32.xlu0 %v322, 64
  %v813 = vpop.permute.xlu0 %812
  %v815 = vsel %vm176, %v662, 0
  %v818 = vsel %vm672, %v813, 0
  %820 = vmatprep.subr.bf16.mxu0 0
  %821 = vmatpush1.bf16.msra.mxu0 %v818
  %822 = vmatprep.subr.bf16.mxu0 0
  %823 = vmatpush1.bf16.msra.mxu0 0
  %824 = vmatprep.subr.bf16.mxu0 0
  %825 = vmatpush1.bf16.msra.mxu0 0
  %826 = vmatprep.subr.bf16.mxu0 0
  %827 = vmatpush1.bf16.msra.mxu0 0
  %828 = vmatprep.subr.bf16.mxu0 0
  %829 = vmatpush1.bf16.msra.mxu0 0
  %830 = vmatprep.subr.bf16.mxu0 0
  %831 = vmatpush1.bf16.msra.mxu0 0
  %832 = vmatprep.subr.bf16.mxu0 0
  %833 = vmatpush1.bf16.msra.mxu0 0
  %834 = vmatprep.subr.bf16.mxu0 0
  %835 = vmatpush1.bf16.msra.mxu0 0
  %836 = vmatprep.subr.bf16.mxu0 0
  %837 = vmatpush1.bf16.msra.mxu0 0
  %838 = vmatprep.subr.bf16.mxu0 0
  %839 = vmatpush1.bf16.msra.mxu0 0
  %840 = vmatprep.subr.bf16.mxu0 0
  %841 = vmatpush1.bf16.msra.mxu0 0
  %842 = vmatprep.subr.bf16.mxu0 0
  %843 = vmatpush1.bf16.msra.mxu0 0
  %844 = vmatprep.subr.bf16.mxu0 0
  %845 = vmatpush1.bf16.msra.mxu0 0
  %846 = vmatprep.subr.bf16.mxu0 0
  %847 = vmatpush1.bf16.msra.mxu0 0
  %848 = vmatprep.subr.bf16.mxu0 0
  %849 = vmatpush1.bf16.msra.mxu0 0
  %850 = vmatprep.subr.bf16.mxu0 0
  %851 = vmatpush1.bf16.msra.mxu0 0
  %852 = vmatprep.mubr.bf16.mxu0 0
  %853 = vmatmul.mubr.bf16.gmra.mrb[0].mxu0 %v815
  %v854 = vpop.f32.mrb[0].mxu0
  %v855 = vadd.f32 0.0, %v854
  %v856 = vpop.f32.mrb[0].mxu0
  %v857 = vpop.f32.mrb[0].mxu0
  %v858 = vpop.f32.mrb[0].mxu0
  %859 = vdwg.mxu0
  %860 = vrot.lane.b32.xlu0 %v372, 64
  %v861 = vpop.permute.xlu0 %860
  %v863 = vsel %vm176, %v663, 0
  %v866 = vsel %vm672, %v861, 0
  %868 = vmatprep.subr.bf16.mxu0 0
  %869 = vmatpush1.bf16.msra.mxu0 %v866
  %870 = vmatprep.subr.bf16.mxu0 0
  %871 = vmatpush1.bf16.msra.mxu0 0
  %872 = vmatprep.subr.bf16.mxu0 0
  %873 = vmatpush1.bf16.msra.mxu0 0
  %874 = vmatprep.subr.bf16.mxu0 0
  %875 = vmatpush1.bf16.msra.mxu0 0
  %876 = vmatprep.subr.bf16.mxu0 0
  %877 = vmatpush1.bf16.msra.mxu0 0
  %878 = vmatprep.subr.bf16.mxu0 0
  %879 = vmatpush1.bf16.msra.mxu0 0
  %880 = vmatprep.subr.bf16.mxu0 0
  %881 = vmatpush1.bf16.msra.mxu0 0
  %882 = vmatprep.subr.bf16.mxu0 0
  %883 = vmatpush1.bf16.msra.mxu0 0
  %884 = vmatprep.subr.bf16.mxu0 0
  %885 = vmatpush1.bf16.msra.mxu0 0
  %886 = vmatprep.subr.bf16.mxu0 0
  %887 = vmatpush1.bf16.msra.mxu0 0
  %888 = vmatprep.subr.bf16.mxu0 0
  %889 = vmatpush1.bf16.msra.mxu0 0
  %890 = vmatprep.subr.bf16.mxu0 0
  %891 = vmatpush1.bf16.msra.mxu0 0
  %892 = vmatprep.subr.bf16.mxu0 0
  %893 = vmatpush1.bf16.msra.mxu0 0
  %894 = vmatprep.subr.bf16.mxu0 0
  %895 = vmatpush1.bf16.msra.mxu0 0
  %896 = vmatprep.subr.bf16.mxu0 0
  %897 = vmatpush1.bf16.msra.mxu0 0
  %898 = vmatprep.subr.bf16.mxu0 0
  %899 = vmatpush1.bf16.msra.mxu0 0
  %900 = vmatprep.mubr.bf16.mxu0 0
  %901 = vmatmul.mubr.bf16.gmra.mrb[0].mxu0 %v863
  %v902 = vpop.f32.mrb[0].mxu0
  %v903 = vadd.f32 0.0, %v902
  %v904 = vpop.f32.mrb[0].mxu0
  %v905 = vpop.f32.mrb[0].mxu0
  %v906 = vpop.f32.mrb[0].mxu0
  %907 = vdwg.mxu0
  %908 = vrot.lane.b32.xlu0 %v422, 64
  %v909 = vpop.permute.xlu0 %908
  %v911 = vsel %vm176, %v664, 0
  %v914 = vsel %vm672, %v909, 0
  %916 = vmatprep.subr.bf16.mxu0 0
  %917 = vmatpush1.bf16.msra.mxu0 %v914
  %918 = vmatprep.subr.bf16.mxu0 0
  %919 = vmatpush1.bf16.msra.mxu0 0
  %920 = vmatprep.subr.bf16.mxu0 0
  %921 = vmatpush1.bf16.msra.mxu0 0
  %922 = vmatprep.subr.bf16.mxu0 0
  %923 = vmatpush1.bf16.msra.mxu0 0
  %924 = vmatprep.subr.bf16.mxu0 0
  %925 = vmatpush1.bf16.msra.mxu0 0
  %926 = vmatprep.subr.bf16.mxu0 0
  %927 = vmatpush1.bf16.msra.mxu0 0
  %928 = vmatprep.subr.bf16.mxu0 0
  %929 = vmatpush1.bf16.msra.mxu0 0
  %930 = vmatprep.subr.bf16.mxu0 0
  %931 = vmatpush1.bf16.msra.mxu0 0
  %932 = vmatprep.subr.bf16.mxu0 0
  %933 = vmatpush1.bf16.msra.mxu0 0
  %934 = vmatprep.subr.bf16.mxu0 0
  %935 = vmatpush1.bf16.msra.mxu0 0
  %936 = vmatprep.subr.bf16.mxu0 0
  %937 = vmatpush1.bf16.msra.mxu0 0
  %938 = vmatprep.subr.bf16.mxu0 0
  %939 = vmatpush1.bf16.msra.mxu0 0
  %940 = vmatprep.subr.bf16.mxu0 0
  %941 = vmatpush1.bf16.msra.mxu0 0
  %942 = vmatprep.subr.bf16.mxu0 0
  %943 = vmatpush1.bf16.msra.mxu0 0
  %944 = vmatprep.subr.bf16.mxu0 0
  %945 = vmatpush1.bf16.msra.mxu0 0
  %946 = vmatprep.subr.bf16.mxu0 0
  %947 = vmatpush1.bf16.msra.mxu0 0
  %948 = vmatprep.mubr.bf16.mxu0 0
  %949 = vmatmul.mubr.bf16.gmra.mrb[0].mxu0 %v911
  %v950 = vpop.f32.mrb[0].mxu0
  %v951 = vadd.f32 0.0, %v950
  %v952 = vpop.f32.mrb[0].mxu0
  %v953 = vpop.f32.mrb[0].mxu0
  %v954 = vpop.f32.mrb[0].mxu0
  %955 = vdwg.mxu0
  %956 = vrot.lane.b32.xlu0 %v472, 64
  %v957 = vpop.permute.xlu0 %956
  %v959 = vsel %vm176, %v665, 0
  %v962 = vsel %vm672, %v957, 0
  %964 = vmatprep.subr.bf16.mxu0 0
  %965 = vmatpush1.bf16.msra.mxu0 %v962
  %966 = vmatprep.subr.bf16.mxu0 0
  %967 = vmatpush1.bf16.msra.mxu0 0
  %968 = vmatprep.subr.bf16.mxu0 0
  %969 = vmatpush1.bf16.msra.mxu0 0
  %970 = vmatprep.subr.bf16.mxu0 0
  %971 = vmatpush1.bf16.msra.mxu0 0
  %972 = vmatprep.subr.bf16.mxu0 0
  %973 = vmatpush1.bf16.msra.mxu0 0
  %974 = vmatprep.subr.bf16.mxu0 0
  %975 = vmatpush1.bf16.msra.mxu0 0
  %976 = vmatprep.subr.bf16.mxu0 0
  %977 = vmatpush1.bf16.msra.mxu0 0
  %978 = vmatprep.subr.bf16.mxu0 0
  %979 = vmatpush1.bf16.msra.mxu0 0
  %980 = vmatprep.subr.bf16.mxu0 0
  %981 = vmatpush1.bf16.msra.mxu0 0
  %982 = vmatprep.subr.bf16.mxu0 0
  %983 = vmatpush1.bf16.msra.mxu0 0
  %984 = vmatprep.subr.bf16.mxu0 0
  %985 = vmatpush1.bf16.msra.mxu0 0
  %986 = vmatprep.subr.bf16.mxu0 0
  %987 = vmatpush1.bf16.msra.mxu0 0
  %988 = vmatprep.subr.bf16.mxu0 0
  %989 = vmatpush1.bf16.msra.mxu0 0
  %990 = vmatprep.subr.bf16.mxu0 0
  %991 = vmatpush1.bf16.msra.mxu0 0
  %992 = vmatprep.subr.bf16.mxu0 0
  %993 = vmatpush1.bf16.msra.mxu0 0
  %994 = vmatprep.subr.bf16.mxu0 0
  %995 = vmatpush1.bf16.msra.mxu0 0
  %996 = vmatprep.mubr.bf16.mxu0 0
  %997 = vmatmul.mubr.bf16.gmra.mrb[0].mxu0 %v959
  %v998 = vpop.f32.mrb[0].mxu0
  %v999 = vadd.f32 0.0, %v998
  %v1000 = vpop.f32.mrb[0].mxu0
  %v1001 = vpop.f32.mrb[0].mxu0
  %v1002 = vpop.f32.mrb[0].mxu0
  %1003 = vdwg.mxu0
  %1004 = vrot.lane.b32.xlu0 %v522, 64
  %v1005 = vpop.permute.xlu0 %1004
  %v1007 = vsel %vm176, %v666, 0
  %v1010 = vsel %vm672, %v1005, 0
  %1012 = vmatprep.subr.bf16.mxu0 0
  %1013 = vmatpush1.bf16.msra.mxu0 %v1010
  %1014 = vmatprep.subr.bf16.mxu0 0
  %1015 = vmatpush1.bf16.msra.mxu0 0
  %1016 = vmatprep.subr.bf16.mxu0 0
  %1017 = vmatpush1.bf16.msra.mxu0 0
  %1018 = vmatprep.subr.bf16.mxu0 0
  %1019 = vmatpush1.bf16.msra.mxu0 0
  %1020 = vmatprep.subr.bf16.mxu0 0
  %1021 = vmatpush1.bf16.msra.mxu0 0
  %1022 = vmatprep.subr.bf16.mxu0 0
  %1023 = vmatpush1.bf16.msra.mxu0 0
  %1024 = vmatprep.subr.bf16.mxu0 0
  %1025 = vmatpush1.bf16.msra.mxu0 0
  %1026 = vmatprep.subr.bf16.mxu0 0
  %1027 = vmatpush1.bf16.msra.mxu0 0
  %1028 = vmatprep.subr.bf16.mxu0 0
  %1029 = vmatpush1.bf16.msra.mxu0 0
  %1030 = vmatprep.subr.bf16.mxu0 0
  %1031 = vmatpush1.bf16.msra.mxu0 0
  %1032 = vmatprep.subr.bf16.mxu0 0
  %1033 = vmatpush1.bf16.msra.mxu0 0
  %1034 = vmatprep.subr.bf16.mxu0 0
  %1035 = vmatpush1.bf16.msra.mxu0 0
  %1036 = vmatprep.subr.bf16.mxu0 0
  %1037 = vmatpush1.bf16.msra.mxu0 0
  %1038 = vmatprep.subr.bf16.mxu0 0
  %1039 = vmatpush1.bf16.msra.mxu0 0
  %1040 = vmatprep.subr.bf16.mxu0 0
  %1041 = vmatpush1.bf16.msra.mxu0 0
  %1042 = vmatprep.subr.bf16.mxu0 0
  %1043 = vmatpush1.bf16.msra.mxu0 0
  %1044 = vmatprep.mubr.bf16.mxu0 0
  %1045 = vmatmul.mubr.bf16.gmra.mrb[0].mxu0 %v1007
  %v1046 = vpop.f32.mrb[0].mxu0
  %v1047 = vadd.f32 0.0, %v1046
  %v1048 = vpop.f32.mrb[0].mxu0
  %v1049 = vpop.f32.mrb[0].mxu0
  %v1050 = vpop.f32.mrb[0].mxu0
  %1051 = vdwg.mxu0
  %1054 = vrot.lane.b32.xlu0 %v807, 8
  %v1055 = vpop.permute.xlu0 %1054
  %1056 = vrot.lane.b32.xlu0 %v855, 8
  %v1057 = vpop.permute.xlu0 %1056
  %1062 = vrot.lane.b32.xlu0 %v903, 16
  %v1063 = vpop.permute.xlu0 %1062
  %1064 = vrot.lane.b32.xlu0 %v951, 16
  %v1065 = vpop.permute.xlu0 %1064
  %1070 = vrot.lane.b32.xlu0 %v999, 24
  %v1071 = vpop.permute.xlu0 %1070
  %1072 = vrot.lane.b32.xlu0 %v1047, 24
  %v1073 = vpop.permute.xlu0 %1072
  %v1076 = vsel %vm176, %v711, %v1055
  %v1077 = vsel %vm176, %v759, %v1057
  %vm1078 = vcmask 130048
  %v1079 = vsel %vm1078, %v1076, %v1063
  %v1080 = vsel %vm1078, %v1077, %v1065
  %vm1081 = vcmask 195584
  %v1082 = vsel %vm1081, %v1079, %v1071
  %v1083 = vsel %vm1081, %v1080, %v1073
  %v1084 = vpack.c.bf16 %v1083, %v1082
  %v1085 = vlaneseq
  %v1086 = vshrl.u32 %v1085, 7
  %v1087 = vsub.s32 1, %v1086
  %v1088 = vrot.slane %v94, %v1087
  %v1089 = vunpack.c.h.b16 %v78
  %v1090 = vunpack.c.h.b16 %v80
  %v1091 = vunpack.c.h.b16 %v82
  %v1092 = vunpack.c.h.b16 %v84
  %v1093 = vpack.c.b16 %v1090, %v1089
  %v1094 = vpack.c.b16 %v1092, %v1091
  %v1098 = vsel %vm38, %v1084, 0
  %1100 = vmatprep.subr.bf16.mxu0 0
  %1101 = vmatpush1.bf16.msra.mxu0 %v1093
  %1102 = vmatprep.subr.bf16.mxu0 0
  %1103 = vmatpush1.bf16.msra.mxu0 %v1094
  %1104 = vmatprep.subr.bf16.mxu0 0
  %1105 = vmatpush1.bf16.msra.mxu0 0
  %1106 = vmatprep.subr.bf16.mxu0 0
  %1107 = vmatpush1.bf16.msra.mxu0 0
  %1108 = vmatprep.subr.bf16.mxu0 0
  %1109 = vmatpush1.bf16.msra.mxu0 0
  %1110 = vmatprep.subr.bf16.mxu0 0
  %1111 = vmatpush1.bf16.msra.mxu0 0
  %1112 = vmatprep.subr.bf16.mxu0 0
  %1113 = vmatpush1.bf16.msra.mxu0 0
  %1114 = vmatprep.subr.bf16.mxu0 0
  %1115 = vmatpush1.bf16.msra.mxu0 0
  %1116 = vmatprep.subr.bf16.mxu0 0
  %1117 = vmatpush1.bf16.msra.mxu0 0
  %1118 = vmatprep.subr.bf16.mxu0 0
  %1119 = vmatpush1.bf16.msra.mxu0 0
  %1120 = vmatprep.subr.bf16.mxu0 0
  %1121 = vmatpush1.bf16.msra.mxu0 0
  %1122 = vmatprep.subr.bf16.mxu0 0
  %1123 = vmatpush1.bf16.msra.mxu0 0
  %1124 = vmatprep.subr.bf16.mxu0 0
  %1125 = vmatpush1.bf16.msra.mxu0 0
  %1126 = vmatprep.subr.bf16.mxu0 0
  %1127 = vmatpush1.bf16.msra.mxu0 0
  %1128 = vmatprep.subr.bf16.mxu0 0
  %1129 = vmatpush1.bf16.msra.mxu0 0
  %1130 = vmatprep.subr.bf16.mxu0 0
  %1131 = vmatpush1.bf16.msra.mxu0 0
  %1132 = vmatprep.mubr.bf16.mxu0 0
  %1133 = vmatmul.mubr.bf16.gmra.mrb[0].mxu0 %v1098
  %v1134 = vpop.f32.mrb[0].mxu0
  %v1135 = vadd.f32 %v1088, %v1134
  %v1136 = vpop.f32.mrb[0].mxu0
  %v1137 = vpop.f32.mrb[0].mxu0
  %v1138 = vadd.f32 %v1088, %v1137
  %v1139 = vpop.f32.mrb[0].mxu0
  %1140 = vdwg.mxu0
  %v1141 = vadd.f32 %v1135, %v76
  %v1142 = vadd.f32 %v1138, %v77
  %v1143 = vsel %vm38, %v1141, 0.0
  %1144 = vadd.xlane.f32.xlu0 %v1143
  %v1145 = vpop.xlane.xlu0 %1144
  %v1146 = vsel %vm38, %v1142, 0.0
  %1147 = vadd.xlane.f32.xlu0 %v1146
  %v1148 = vpop.xlane.xlu0 %1147
  %v1149 = vmul.f32 %v1145, %v45
  %v1150 = vmul.f32 %v1148, %v45
  %v1151 = vsub.f32 %v1141, %v1149
  %v1152 = vsub.f32 %v1142, %v1150
  %v1153 = vmul.f32 %v1151, %v1151
  %v1154 = vmul.f32 %v1152, %v1152
  %v1155 = vsel %vm38, %v1153, 0.0
  %1156 = vadd.xlane.f32.xlu0 %v1155
  %v1157 = vpop.xlane.xlu0 %1156
  %v1158 = vsel %vm38, %v1154, 0.0
  %1159 = vadd.xlane.f32.xlu0 %v1158
  %v1160 = vpop.xlane.xlu0 %1159
  %v1161 = vmul.f32 %v1157, %v45
  %v1162 = vmul.f32 %v1160, %v45
  %v1163 = vadd.f32 %v1161, 1e-12
  %v1164 = vadd.f32 %v1162, 1e-12
  %v1165 = vrsqrt.pop %v1163
  %v1166 = vrsqrt.pop %v1164
  %v1167 = vmul.f32 %v1151, %v1165
  %v1168 = vmul.f32 %v1152, %v1166
  %v1169 = vlaneseq
  %v1170 = vshrl.u32 %v1169, 7
  %v1171 = vsub.s32 2, %v1170
  %v1172 = vrot.slane %v94, %v1171
  %v1173 = vmul.f32 %v1167, %v1172
  %v1174 = vmul.f32 %v1168, %v1172
  %v1175 = vlaneseq
  %v1176 = vshrl.u32 %v1175, 7
  %v1177 = vsub.s32 3, %v1176
  %v1178 = vrot.slane %v94, %v1177
  %v1179 = vadd.f32 %v1173, %v1178
  %v1180 = vadd.f32 %v1174, %v1178
  %v1181 = vpack.c.bf16 %v1180, %v1179
  %v1182 = vlaneseq
  %v1183 = vshrl.u32 %v1182, 7
  %v1184 = vsub.s32 4, %v1183
  %v1185 = vrot.slane %v94, %v1184
  %v1190 = vunpack.c.l.b16 %v79
  %v1191 = vunpack.c.l.b16 %v81
  %v1192 = vunpack.c.l.b16 %v83
  %v1193 = vunpack.c.l.b16 %v85
  %v1194 = vpack.c.b16 %v1191, %v1190
  %v1195 = vpack.c.b16 %v1193, %v1192
  %v1199 = vsel %vm38, %v1181, 0
  %1201 = vmatprep.subr.bf16.mxu0 0
  %1202 = vmatpush1.bf16.msra.mxu0 %v1194
  %1203 = vmatprep.subr.bf16.mxu0 0
  %1204 = vmatpush1.bf16.msra.mxu0 %v1195
  %1205 = vmatprep.subr.bf16.mxu0 0
  %1206 = vmatpush1.bf16.msra.mxu0 0
  %1207 = vmatprep.subr.bf16.mxu0 0
  %1208 = vmatpush1.bf16.msra.mxu0 0
  %1209 = vmatprep.subr.bf16.mxu0 0
  %1210 = vmatpush1.bf16.msra.mxu0 0
  %1211 = vmatprep.subr.bf16.mxu0 0
  %1212 = vmatpush1.bf16.msra.mxu0 0
  %1213 = vmatprep.subr.bf16.mxu0 0
  %1214 = vmatpush1.bf16.msra.mxu0 0
  %1215 = vmatprep.subr.bf16.mxu0 0
  %1216 = vmatpush1.bf16.msra.mxu0 0
  %1217 = vmatprep.subr.bf16.mxu0 0
  %1218 = vmatpush1.bf16.msra.mxu0 0
  %1219 = vmatprep.subr.bf16.mxu0 0
  %1220 = vmatpush1.bf16.msra.mxu0 0
  %1221 = vmatprep.subr.bf16.mxu0 0
  %1222 = vmatpush1.bf16.msra.mxu0 0
  %1223 = vmatprep.subr.bf16.mxu0 0
  %1224 = vmatpush1.bf16.msra.mxu0 0
  %1225 = vmatprep.subr.bf16.mxu0 0
  %1226 = vmatpush1.bf16.msra.mxu0 0
  %1227 = vmatprep.subr.bf16.mxu0 0
  %1228 = vmatpush1.bf16.msra.mxu0 0
  %1229 = vmatprep.subr.bf16.mxu0 0
  %1230 = vmatpush1.bf16.msra.mxu0 0
  %1231 = vmatprep.subr.bf16.mxu0 0
  %1232 = vmatpush1.bf16.msra.mxu0 0
  %1233 = vmatprep.mubr.bf16.mxu0 0
  %1234 = vmatmul.mubr.bf16.gmra.mrb[0].mxu0 %v1199
  %v1235 = vpop.f32.mrb[0].mxu0
  %v1236 = vadd.f32 %v1185, %v1235
  %v1237 = vpop.f32.mrb[0].mxu0
  %v1238 = vpop.f32.mrb[0].mxu0
  %v1239 = vadd.f32 %v1185, %v1238
  %v1240 = vpop.f32.mrb[0].mxu0
  %1241 = vdwg.mxu0
  %v1242 = vmul.f32 %v1236, 0.5
  %v1243 = vmul.f32 %v1239, 0.5
  %v1244 = vmul.f32 %v1236, 0.70710677
  %v1245 = vmul.f32 %v1239, 0.70710677
  %v1246 = verf.f32.pop %v1244
  %v1247 = verf.f32.pop %v1245
  %v1248 = vadd.f32 %v1246, 1.0
  %v1249 = vadd.f32 %v1247, 1.0
  %v1250 = vmul.f32 %v1242, %v1248
  %v1251 = vmul.f32 %v1243, %v1249
  %v1252 = vpack.c.bf16 %v1251, %v1250
  %v1253 = vlaneseq
  %v1254 = vshrl.u32 %v1253, 7
  %v1255 = vsub.s32 5, %v1254
  %v1256 = vrot.slane %v94, %v1255
  %v1265 = vunpack.c.l.b16 %v86
  %v1266 = vunpack.c.l.b16 %v87
  %v1267 = vunpack.c.l.b16 %v88
  %v1268 = vunpack.c.l.b16 %v89
  %v1269 = vunpack.c.l.b16 %v90
  %v1270 = vunpack.c.l.b16 %v91
  %v1271 = vunpack.c.l.b16 %v92
  %v1272 = vunpack.c.l.b16 %v93
  %v1273 = vpack.c.b16 %v1266, %v1265
  %v1274 = vpack.c.b16 %v1268, %v1267
  %v1275 = vpack.c.b16 %v1270, %v1269
  %v1276 = vpack.c.b16 %v1272, %v1271
  %vm1281 = vcmask 523264
  %v1283 = vsel %vm1281, %v1252, 0
  %1285 = vmatprep.subr.bf16.mxu0 0
  %1286 = vmatpush1.bf16.msra.mxu0 %v1273
  %1287 = vmatprep.subr.bf16.mxu0 0
  %1288 = vmatpush1.bf16.msra.mxu0 %v1274
  %1289 = vmatprep.subr.bf16.mxu0 0
  %1290 = vmatpush1.bf16.msra.mxu0 %v1275
  %1291 = vmatprep.subr.bf16.mxu0 0
  %1292 = vmatpush1.bf16.msra.mxu0 %v1276
  %1293 = vmatprep.subr.bf16.mxu0 0
  %1294 = vmatpush1.bf16.msra.mxu0 0
  %1295 = vmatprep.subr.bf16.mxu0 0
  %1296 = vmatpush1.bf16.msra.mxu0 0
  %1297 = vmatprep.subr.bf16.mxu0 0
  %1298 = vmatpush1.bf16.msra.mxu0 0
  %1299 = vmatprep.subr.bf16.mxu0 0
  %1300 = vmatpush1.bf16.msra.mxu0 0
  %1301 = vmatprep.subr.bf16.mxu0 0
  %1302 = vmatpush1.bf16.msra.mxu0 0
  %1303 = vmatprep.subr.bf16.mxu0 0
  %1304 = vmatpush1.bf16.msra.mxu0 0
  %1305 = vmatprep.subr.bf16.mxu0 0
  %1306 = vmatpush1.bf16.msra.mxu0 0
  %1307 = vmatprep.subr.bf16.mxu0 0
  %1308 = vmatpush1.bf16.msra.mxu0 0
  %1309 = vmatprep.subr.bf16.mxu0 0
  %1310 = vmatpush1.bf16.msra.mxu0 0
  %1311 = vmatprep.subr.bf16.mxu0 0
  %1312 = vmatpush1.bf16.msra.mxu0 0
  %1313 = vmatprep.subr.bf16.mxu0 0
  %1314 = vmatpush1.bf16.msra.mxu0 0
  %1315 = vmatprep.subr.bf16.mxu0 0
  %1316 = vmatpush1.bf16.msra.mxu0 0
  %1317 = vmatprep.mubr.bf16.mxu0 0
  %1318 = vmatmul.mubr.bf16.gmra.mrb[0].mxu0 %v1283
  %v1319 = vpop.f32.mrb[0].mxu0
  %v1320 = vadd.f32 %v1256, %v1319
  %v1321 = vpop.f32.mrb[0].mxu0
  %v1322 = vpop.f32.mrb[0].mxu0
  %v1323 = vadd.f32 %v1256, %v1322
  %v1324 = vpop.f32.mrb[0].mxu0
  %1325 = vdwg.mxu0
  %v1326 = vadd.f32 %v1320, %v1179
  %v1327 = vadd.f32 %v1323, %v1180
  %v1328 = vsel %vm38, %v1326, 0.0
  %1329 = vadd.xlane.f32.xlu0 %v1328
  %v1330 = vpop.xlane.xlu0 %1329
  %v1331 = vsel %vm38, %v1327, 0.0
  %1332 = vadd.xlane.f32.xlu0 %v1331
  %v1333 = vpop.xlane.xlu0 %1332
  %v1334 = vmul.f32 %v1330, %v45
  %v1335 = vmul.f32 %v1333, %v45
  %v1336 = vsub.f32 %v1326, %v1334
  %v1337 = vsub.f32 %v1327, %v1335
  %v1338 = vmul.f32 %v1336, %v1336
  %v1339 = vmul.f32 %v1337, %v1337
  %v1340 = vsel %vm38, %v1338, 0.0
  %1341 = vadd.xlane.f32.xlu0 %v1340
  %v1342 = vpop.xlane.xlu0 %1341
  %v1343 = vsel %vm38, %v1339, 0.0
  %1344 = vadd.xlane.f32.xlu0 %v1343
  %v1345 = vpop.xlane.xlu0 %1344
  %v1346 = vmul.f32 %v1342, %v45
  %v1347 = vmul.f32 %v1345, %v45
  %v1348 = vadd.f32 %v1346, 1e-12
  %v1349 = vadd.f32 %v1347, 1e-12
  %v1350 = vrsqrt.pop %v1348
  %v1351 = vrsqrt.pop %v1349
  %v1352 = vmul.f32 %v1336, %v1350
  %v1353 = vmul.f32 %v1337, %v1351
  %v1354 = vlaneseq
  %v1355 = vshrl.u32 %v1354, 7
  %v1356 = vsub.s32 6, %v1355
  %v1357 = vrot.slane %v94, %v1356
  %v1358 = vmul.f32 %v1352, %v1357
  %v1359 = vmul.f32 %v1353, %v1357
  %v1360 = vlaneseq
  %v1361 = vshrl.u32 %v1360, 7
  %v1362 = vsub.s32 7, %v1361
  %v1363 = vrot.slane %v94, %v1362
  %v1364 = vadd.f32 %v1358, %v1363
  %v1365 = vadd.f32 %v1359, %v1363
  %s1366 = scalar_lea.vmem %s4, 48
  %v1367 = vld [vmem:[%s1366] sm:$0xff]
  %v1368 = vld [vmem:[%s1366 + $0x8] sm:$0xf]
  %v1369 = vld [vmem:[%s1366 + $0xc] sm:$0xff]
  %v1370 = vld [vmem:[%s1366 + $0x14] sm:$0xf]
  %v1371 = vld [vmem:[%s1366 + $0x18] sm:$0xff]
  %v1372 = vld [vmem:[%s1366 + $0x20] sm:$0xf]
  %v1373 = vld [vmem:[%s1366 + $0x24] sm:$0xff]
  %v1374 = vld [vmem:[%s1366 + $0x2c] sm:$0xf]
  %s1375 = scalar_lea.vmem %s5, 32
  %v1376 = vld [vmem:[%s1375] sm:$0xf]
  %v1377 = vld [vmem:[%s1375 + $0x4] sm:$0xf]
  %v1378 = vld [vmem:[%s1375 + $0x8] sm:$0xf]
  %v1379 = vld [vmem:[%s1375 + $0xc] sm:$0xf]
  %v1380 = vld [vmem:[%s1375 + $0x10] sm:$0xf]
  %v1381 = vld [vmem:[%s1375 + $0x14] sm:$0xf]
  %v1382 = vld [vmem:[%s1375 + $0x18] sm:$0xf]
  %v1383 = vld [vmem:[%s1375 + $0x1c] sm:$0xf]
  %s1384 = scalar_lea.vmem %s2, 8
  %v1385 = vld [vmem:[%s1384] sm:$0xff]
  %v1386 = vpack.c.bf16 %v1365, %v1364
  %v1387 = vlaneseq
  %v1388 = vshrl.u32 %v1387, 7
  %v1389 = vsub.s32 0, %v1388
  %v1390 = vrot.slane %v1385, %v1389
  %v1395 = vunpack.c.l.b16 %v1367
  %v1396 = vunpack.c.l.b16 %v1369
  %v1397 = vunpack.c.l.b16 %v1371
  %v1398 = vunpack.c.l.b16 %v1373
  %v1399 = vpack.c.b16 %v1396, %v1395
  %v1400 = vpack.c.b16 %v1398, %v1397
  %v1404 = vsel %vm38, %v1386, 0
  %1406 = vmatprep.subr.bf16.mxu0 0
  %1407 = vmatpush1.bf16.msra.mxu0 %v1399
  %1408 = vmatprep.subr.bf16.mxu0 0
  %1409 = vmatpush1.bf16.msra.mxu0 %v1400
  %1410 = vmatprep.subr.bf16.mxu0 0
  %1411 = vmatpush1.bf16.msra.mxu0 0
  %1412 = vmatprep.subr.bf16.mxu0 0
  %1413 = vmatpush1.bf16.msra.mxu0 0
  %1414 = vmatprep.subr.bf16.mxu0 0
  %1415 = vmatpush1.bf16.msra.mxu0 0
  %1416 = vmatprep.subr.bf16.mxu0 0
  %1417 = vmatpush1.bf16.msra.mxu0 0
  %1418 = vmatprep.subr.bf16.mxu0 0
  %1419 = vmatpush1.bf16.msra.mxu0 0
  %1420 = vmatprep.subr.bf16.mxu0 0
  %1421 = vmatpush1.bf16.msra.mxu0 0
  %1422 = vmatprep.subr.bf16.mxu0 0
  %1423 = vmatpush1.bf16.msra.mxu0 0
  %1424 = vmatprep.subr.bf16.mxu0 0
  %1425 = vmatpush1.bf16.msra.mxu0 0
  %1426 = vmatprep.subr.bf16.mxu0 0
  %1427 = vmatpush1.bf16.msra.mxu0 0
  %1428 = vmatprep.subr.bf16.mxu0 0
  %1429 = vmatpush1.bf16.msra.mxu0 0
  %1430 = vmatprep.subr.bf16.mxu0 0
  %1431 = vmatpush1.bf16.msra.mxu0 0
  %1432 = vmatprep.subr.bf16.mxu0 0
  %1433 = vmatpush1.bf16.msra.mxu0 0
  %1434 = vmatprep.subr.bf16.mxu0 0
  %1435 = vmatpush1.bf16.msra.mxu0 0
  %1436 = vmatprep.subr.bf16.mxu0 0
  %1437 = vmatpush1.bf16.msra.mxu0 0
  %1438 = vmatprep.mubr.bf16.mxu0 0
  %1439 = vmatmul.mubr.bf16.gmra.mrb[0].mxu0 %v1404
  %v1440 = vpop.f32.mrb[0].mxu0
  %v1441 = vadd.f32 %v1390, %v1440
  %v1442 = vpop.f32.mrb[0].mxu0
  %v1443 = vpop.f32.mrb[0].mxu0
  %v1444 = vadd.f32 %v1390, %v1443
  %v1445 = vpop.f32.mrb[0].mxu0
  %1446 = vdwg.mxu0
  %v1447 = vpack.c.bf16 %v1444, %v1441
  %v1449 = vunpack.c.l.b16 %v1447
  %v1450 = vunpack.c.h.b16 %v1447
  %v1451 = vpack.c.b16 %v1449, %v1449
  %v1452 = vpack.c.b16 %v1450, %v1450
  %1453 = vrot.lane.b32.xlu0 %v1451, 120
  %v1454 = vpop.permute.xlu0 %1453
  %1455 = vrot.lane.b32.xlu0 %v1452, 120
  %v1456 = vpop.permute.xlu0 %1455
  %1457 = vrot.lane.b32.xlu0 %v1451, 112
  %v1458 = vpop.permute.xlu0 %1457
  %1459 = vrot.lane.b32.xlu0 %v1452, 112
  %v1460 = vpop.permute.xlu0 %1459
  %1461 = vrot.lane.b32.xlu0 %v1451, 104
  %v1462 = vpop.permute.xlu0 %1461
  %1463 = vrot.lane.b32.xlu0 %v1452, 104
  %v1464 = vpop.permute.xlu0 %1463
  %1465 = vrot.lane.b32.xlu0 %v1451, 96
  %v1466 = vpop.permute.xlu0 %1465
  %v1468 = vsel %vm176, %v1451, 0
  %v1471 = vsel %vm176, %v1466, 0
  %1473 = vmatprep.subr.bf16.mxu0 0
  %1474 = vmatpush1.bf16.xpose.msra.mxu0 %v1471
  %1475 = vmatprep.subr.bf16.mxu0 0
  %1476 = vmatpush1.bf16.xpose.msra.mxu0 0
  %1477 = vmatprep.subr.bf16.mxu0 0
  %1478 = vmatpush1.bf16.xpose.msra.mxu0 0
  %1479 = vmatprep.subr.bf16.mxu0 0
  %1480 = vmatpush1.bf16.xpose.msra.mxu0 0
  %1481 = vmatprep.subr.bf16.mxu0 0
  %1482 = vmatpush1.bf16.xpose.msra.mxu0 0
  %1483 = vmatprep.subr.bf16.mxu0 0
  %1484 = vmatpush1.bf16.xpose.msra.mxu0 0
  %1485 = vmatprep.subr.bf16.mxu0 0
  %1486 = vmatpush1.bf16.xpose.msra.mxu0 0
  %1487 = vmatprep.subr.bf16.mxu0 0
  %1488 = vmatpush1.bf16.xpose.msra.mxu0 0
  %1489 = vmatprep.subr.bf16.mxu0 0
  %1490 = vmatpush1.bf16.xpose.msra.mxu0 0
  %1491 = vmatprep.subr.bf16.mxu0 0
  %1492 = vmatpush1.bf16.xpose.msra.mxu0 0
  %1493 = vmatprep.subr.bf16.mxu0 0
  %1494 = vmatpush1.bf16.xpose.msra.mxu0 0
  %1495 = vmatprep.subr.bf16.mxu0 0
  %1496 = vmatpush1.bf16.xpose.msra.mxu0 0
  %1497 = vmatprep.subr.bf16.mxu0 0
  %1498 = vmatpush1.bf16.xpose.msra.mxu0 0
  %1499 = vmatprep.subr.bf16.mxu0 0
  %1500 = vmatpush1.bf16.xpose.msra.mxu0 0
  %1501 = vmatprep.subr.bf16.mxu0 0
  %1502 = vmatpush1.bf16.xpose.msra.mxu0 0
  %1503 = vmatprep.subr.bf16.mxu0 0
  %1504 = vmatpush1.bf16.xpose.msra.mxu0 0
  %1505 = vmatprep.mubr.bf16.mxu0 0
  %1506 = vmatmul.mubr.bf16.gmra.mrb[0].mxu0 %v1468
  %v1507 = vpop.f32.mrb[0].mxu0
  %v1508 = vadd.f32 %v27, %v1507
  %v1509 = vpop.f32.mrb[0].mxu0
  %v1510 = vpop.f32.mrb[0].mxu0
  %v1511 = vpop.f32.mrb[0].mxu0
  %1512 = vdwg.mxu0
  %1513 = vrot.lane.b32.xlu0 %v1452, 96
  %v1514 = vpop.permute.xlu0 %1513
  %v1516 = vsel %vm176, %v1452, 0
  %v1519 = vsel %vm176, %v1514, 0
  %1521 = vmatprep.subr.bf16.mxu0 0
  %1522 = vmatpush1.bf16.xpose.msra.mxu0 %v1519
  %1523 = vmatprep.subr.bf16.mxu0 0
  %1524 = vmatpush1.bf16.xpose.msra.mxu0 0
  %1525 = vmatprep.subr.bf16.mxu0 0
  %1526 = vmatpush1.bf16.xpose.msra.mxu0 0
  %1527 = vmatprep.subr.bf16.mxu0 0
  %1528 = vmatpush1.bf16.xpose.msra.mxu0 0
  %1529 = vmatprep.subr.bf16.mxu0 0
  %1530 = vmatpush1.bf16.xpose.msra.mxu0 0
  %1531 = vmatprep.subr.bf16.mxu0 0
  %1532 = vmatpush1.bf16.xpose.msra.mxu0 0
  %1533 = vmatprep.subr.bf16.mxu0 0
  %1534 = vmatpush1.bf16.xpose.msra.mxu0 0
  %1535 = vmatprep.subr.bf16.mxu0 0
  %1536 = vmatpush1.bf16.xpose.msra.mxu0 0
  %1537 = vmatprep.subr.bf16.mxu0 0
  %1538 = vmatpush1.bf16.xpose.msra.mxu0 0
  %1539 = vmatprep.subr.bf16.mxu0 0
  %1540 = vmatpush1.bf16.xpose.msra.mxu0 0
  %1541 = vmatprep.subr.bf16.mxu0 0
  %1542 = vmatpush1.bf16.xpose.msra.mxu0 0
  %1543 = vmatprep.subr.bf16.mxu0 0
  %1544 = vmatpush1.bf16.xpose.msra.mxu0 0
  %1545 = vmatprep.subr.bf16.mxu0 0
  %1546 = vmatpush1.bf16.xpose.msra.mxu0 0
  %1547 = vmatprep.subr.bf16.mxu0 0
  %1548 = vmatpush1.bf16.xpose.msra.mxu0 0
  %1549 = vmatprep.subr.bf16.mxu0 0
  %1550 = vmatpush1.bf16.xpose.msra.mxu0 0
  %1551 = vmatprep.subr.bf16.mxu0 0
  %1552 = vmatpush1.bf16.xpose.msra.mxu0 0
  %1553 = vmatprep.mubr.bf16.mxu0 0
  %1554 = vmatmul.mubr.bf16.gmra.mrb[0].mxu0 %v1516
  %v1555 = vpop.f32.mrb[0].mxu0
  %v1556 = vadd.f32 %v28, %v1555
  %v1557 = vpop.f32.mrb[0].mxu0
  %v1558 = vpop.f32.mrb[0].mxu0
  %v1559 = vpop.f32.mrb[0].mxu0
  %1560 = vdwg.mxu0
  %v1561 = vunpack.c.l.b16 %v1454
  %v1562 = vpack.c.b16 %v1561, %v1561
  %1563 = vrot.lane.b32.xlu0 %v1562, 96
  %v1564 = vpop.permute.xlu0 %1563
  %v1566 = vsel %vm176, %v1454, 0
  %v1569 = vsel %vm176, %v1564, 0
  %1571 = vmatprep.subr.bf16.mxu0 0
  %1572 = vmatpush1.bf16.xpose.msra.mxu0 %v1569
  %1573 = vmatprep.subr.bf16.mxu0 0
  %1574 = vmatpush1.bf16.xpose.msra.mxu0 0
  %1575 = vmatprep.subr.bf16.mxu0 0
  %1576 = vmatpush1.bf16.xpose.msra.mxu0 0
  %1577 = vmatprep.subr.bf16.mxu0 0
  %1578 = vmatpush1.bf16.xpose.msra.mxu0 0
  %1579 = vmatprep.subr.bf16.mxu0 0
  %1580 = vmatpush1.bf16.xpose.msra.mxu0 0
  %1581 = vmatprep.subr.bf16.mxu0 0
  %1582 = vmatpush1.bf16.xpose.msra.mxu0 0
  %1583 = vmatprep.subr.bf16.mxu0 0
  %1584 = vmatpush1.bf16.xpose.msra.mxu0 0
  %1585 = vmatprep.subr.bf16.mxu0 0
  %1586 = vmatpush1.bf16.xpose.msra.mxu0 0
  %1587 = vmatprep.subr.bf16.mxu0 0
  %1588 = vmatpush1.bf16.xpose.msra.mxu0 0
  %1589 = vmatprep.subr.bf16.mxu0 0
  %1590 = vmatpush1.bf16.xpose.msra.mxu0 0
  %1591 = vmatprep.subr.bf16.mxu0 0
  %1592 = vmatpush1.bf16.xpose.msra.mxu0 0
  %1593 = vmatprep.subr.bf16.mxu0 0
  %1594 = vmatpush1.bf16.xpose.msra.mxu0 0
  %1595 = vmatprep.subr.bf16.mxu0 0
  %1596 = vmatpush1.bf16.xpose.msra.mxu0 0
  %1597 = vmatprep.subr.bf16.mxu0 0
  %1598 = vmatpush1.bf16.xpose.msra.mxu0 0
  %1599 = vmatprep.subr.bf16.mxu0 0
  %1600 = vmatpush1.bf16.xpose.msra.mxu0 0
  %1601 = vmatprep.subr.bf16.mxu0 0
  %1602 = vmatpush1.bf16.xpose.msra.mxu0 0
  %1603 = vmatprep.mubr.bf16.mxu0 0
  %1604 = vmatmul.mubr.bf16.gmra.mrb[0].mxu0 %v1566
  %v1605 = vpop.f32.mrb[0].mxu0
  %v1606 = vadd.f32 %v29, %v1605
  %v1607 = vpop.f32.mrb[0].mxu0
  %v1608 = vpop.f32.mrb[0].mxu0
  %v1609 = vpop.f32.mrb[0].mxu0
  %1610 = vdwg.mxu0
  %v1611 = vunpack.c.l.b16 %v1456
  %v1612 = vpack.c.b16 %v1611, %v1611
  %1613 = vrot.lane.b32.xlu0 %v1612, 96
  %v1614 = vpop.permute.xlu0 %1613
  %v1616 = vsel %vm176, %v1456, 0
  %v1619 = vsel %vm176, %v1614, 0
  %1621 = vmatprep.subr.bf16.mxu0 0
  %1622 = vmatpush1.bf16.xpose.msra.mxu0 %v1619
  %1623 = vmatprep.subr.bf16.mxu0 0
  %1624 = vmatpush1.bf16.xpose.msra.mxu0 0
  %1625 = vmatprep.subr.bf16.mxu0 0
  %1626 = vmatpush1.bf16.xpose.msra.mxu0 0
  %1627 = vmatprep.subr.bf16.mxu0 0
  %1628 = vmatpush1.bf16.xpose.msra.mxu0 0
  %1629 = vmatprep.subr.bf16.mxu0 0
  %1630 = vmatpush1.bf16.xpose.msra.mxu0 0
  %1631 = vmatprep.subr.bf16.mxu0 0
  %1632 = vmatpush1.bf16.xpose.msra.mxu0 0
  %1633 = vmatprep.subr.bf16.mxu0 0
  %1634 = vmatpush1.bf16.xpose.msra.mxu0 0
  %1635 = vmatprep.subr.bf16.mxu0 0
  %1636 = vmatpush1.bf16.xpose.msra.mxu0 0
  %1637 = vmatprep.subr.bf16.mxu0 0
  %1638 = vmatpush1.bf16.xpose.msra.mxu0 0
  %1639 = vmatprep.subr.bf16.mxu0 0
  %1640 = vmatpush1.bf16.xpose.msra.mxu0 0
  %1641 = vmatprep.subr.bf16.mxu0 0
  %1642 = vmatpush1.bf16.xpose.msra.mxu0 0
  %1643 = vmatprep.subr.bf16.mxu0 0
  %1644 = vmatpush1.bf16.xpose.msra.mxu0 0
  %1645 = vmatprep.subr.bf16.mxu0 0
  %1646 = vmatpush1.bf16.xpose.msra.mxu0 0
  %1647 = vmatprep.subr.bf16.mxu0 0
  %1648 = vmatpush1.bf16.xpose.msra.mxu0 0
  %1649 = vmatprep.subr.bf16.mxu0 0
  %1650 = vmatpush1.bf16.xpose.msra.mxu0 0
  %1651 = vmatprep.subr.bf16.mxu0 0
  %1652 = vmatpush1.bf16.xpose.msra.mxu0 0
  %1653 = vmatprep.mubr.bf16.mxu0 0
  %1654 = vmatmul.mubr.bf16.gmra.mrb[0].mxu0 %v1616
  %v1655 = vpop.f32.mrb[0].mxu0
  %v1656 = vadd.f32 %v30, %v1655
  %v1657 = vpop.f32.mrb[0].mxu0
  %v1658 = vpop.f32.mrb[0].mxu0
  %v1659 = vpop.f32.mrb[0].mxu0
  %1660 = vdwg.mxu0
  %v1661 = vunpack.c.l.b16 %v1458
  %v1662 = vpack.c.b16 %v1661, %v1661
  %1663 = vrot.lane.b32.xlu0 %v1662, 96
  %v1664 = vpop.permute.xlu0 %1663
  %v1666 = vsel %vm176, %v1458, 0
  %v1669 = vsel %vm176, %v1664, 0
  %1671 = vmatprep.subr.bf16.mxu0 0
  %1672 = vmatpush1.bf16.xpose.msra.mxu0 %v1669
  %1673 = vmatprep.subr.bf16.mxu0 0
  %1674 = vmatpush1.bf16.xpose.msra.mxu0 0
  %1675 = vmatprep.subr.bf16.mxu0 0
  %1676 = vmatpush1.bf16.xpose.msra.mxu0 0
  %1677 = vmatprep.subr.bf16.mxu0 0
  %1678 = vmatpush1.bf16.xpose.msra.mxu0 0
  %1679 = vmatprep.subr.bf16.mxu0 0
  %1680 = vmatpush1.bf16.xpose.msra.mxu0 0
  %1681 = vmatprep.subr.bf16.mxu0 0
  %1682 = vmatpush1.bf16.xpose.msra.mxu0 0
  %1683 = vmatprep.subr.bf16.mxu0 0
  %1684 = vmatpush1.bf16.xpose.msra.mxu0 0
  %1685 = vmatprep.subr.bf16.mxu0 0
  %1686 = vmatpush1.bf16.xpose.msra.mxu0 0
  %1687 = vmatprep.subr.bf16.mxu0 0
  %1688 = vmatpush1.bf16.xpose.msra.mxu0 0
  %1689 = vmatprep.subr.bf16.mxu0 0
  %1690 = vmatpush1.bf16.xpose.msra.mxu0 0
  %1691 = vmatprep.subr.bf16.mxu0 0
  %1692 = vmatpush1.bf16.xpose.msra.mxu0 0
  %1693 = vmatprep.subr.bf16.mxu0 0
  %1694 = vmatpush1.bf16.xpose.msra.mxu0 0
  %1695 = vmatprep.subr.bf16.mxu0 0
  %1696 = vmatpush1.bf16.xpose.msra.mxu0 0
  %1697 = vmatprep.subr.bf16.mxu0 0
  %1698 = vmatpush1.bf16.xpose.msra.mxu0 0
  %1699 = vmatprep.subr.bf16.mxu0 0
  %1700 = vmatpush1.bf16.xpose.msra.mxu0 0
  %1701 = vmatprep.subr.bf16.mxu0 0
  %1702 = vmatpush1.bf16.xpose.msra.mxu0 0
  %1703 = vmatprep.mubr.bf16.mxu0 0
  %1704 = vmatmul.mubr.bf16.gmra.mrb[0].mxu0 %v1666
  %v1705 = vpop.f32.mrb[0].mxu0
  %v1706 = vadd.f32 %v31, %v1705
  %v1707 = vpop.f32.mrb[0].mxu0
  %v1708 = vpop.f32.mrb[0].mxu0
  %v1709 = vpop.f32.mrb[0].mxu0
  %1710 = vdwg.mxu0
  %v1711 = vunpack.c.l.b16 %v1460
  %v1712 = vpack.c.b16 %v1711, %v1711
  %1713 = vrot.lane.b32.xlu0 %v1712, 96
  %v1714 = vpop.permute.xlu0 %1713
  %v1716 = vsel %vm176, %v1460, 0
  %v1719 = vsel %vm176, %v1714, 0
  %1721 = vmatprep.subr.bf16.mxu0 0
  %1722 = vmatpush1.bf16.xpose.msra.mxu0 %v1719
  %1723 = vmatprep.subr.bf16.mxu0 0
  %1724 = vmatpush1.bf16.xpose.msra.mxu0 0
  %1725 = vmatprep.subr.bf16.mxu0 0
  %1726 = vmatpush1.bf16.xpose.msra.mxu0 0
  %1727 = vmatprep.subr.bf16.mxu0 0
  %1728 = vmatpush1.bf16.xpose.msra.mxu0 0
  %1729 = vmatprep.subr.bf16.mxu0 0
  %1730 = vmatpush1.bf16.xpose.msra.mxu0 0
  %1731 = vmatprep.subr.bf16.mxu0 0
  %1732 = vmatpush1.bf16.xpose.msra.mxu0 0
  %1733 = vmatprep.subr.bf16.mxu0 0
  %1734 = vmatpush1.bf16.xpose.msra.mxu0 0
  %1735 = vmatprep.subr.bf16.mxu0 0
  %1736 = vmatpush1.bf16.xpose.msra.mxu0 0
  %1737 = vmatprep.subr.bf16.mxu0 0
  %1738 = vmatpush1.bf16.xpose.msra.mxu0 0
  %1739 = vmatprep.subr.bf16.mxu0 0
  %1740 = vmatpush1.bf16.xpose.msra.mxu0 0
  %1741 = vmatprep.subr.bf16.mxu0 0
  %1742 = vmatpush1.bf16.xpose.msra.mxu0 0
  %1743 = vmatprep.subr.bf16.mxu0 0
  %1744 = vmatpush1.bf16.xpose.msra.mxu0 0
  %1745 = vmatprep.subr.bf16.mxu0 0
  %1746 = vmatpush1.bf16.xpose.msra.mxu0 0
  %1747 = vmatprep.subr.bf16.mxu0 0
  %1748 = vmatpush1.bf16.xpose.msra.mxu0 0
  %1749 = vmatprep.subr.bf16.mxu0 0
  %1750 = vmatpush1.bf16.xpose.msra.mxu0 0
  %1751 = vmatprep.subr.bf16.mxu0 0
  %1752 = vmatpush1.bf16.xpose.msra.mxu0 0
  %1753 = vmatprep.mubr.bf16.mxu0 0
  %1754 = vmatmul.mubr.bf16.gmra.mrb[0].mxu0 %v1716
  %v1755 = vpop.f32.mrb[0].mxu0
  %v1756 = vadd.f32 %v32, %v1755
  %v1757 = vpop.f32.mrb[0].mxu0
  %v1758 = vpop.f32.mrb[0].mxu0
  %v1759 = vpop.f32.mrb[0].mxu0
  %1760 = vdwg.mxu0
  %v1761 = vunpack.c.l.b16 %v1462
  %v1762 = vpack.c.b16 %v1761, %v1761
  %1763 = vrot.lane.b32.xlu0 %v1762, 96
  %v1764 = vpop.permute.xlu0 %1763
  %v1766 = vsel %vm176, %v1462, 0
  %v1769 = vsel %vm176, %v1764, 0
  %1771 = vmatprep.subr.bf16.mxu0 0
  %1772 = vmatpush1.bf16.xpose.msra.mxu0 %v1769
  %1773 = vmatprep.subr.bf16.mxu0 0
  %1774 = vmatpush1.bf16.xpose.msra.mxu0 0
  %1775 = vmatprep.subr.bf16.mxu0 0
  %1776 = vmatpush1.bf16.xpose.msra.mxu0 0
  %1777 = vmatprep.subr.bf16.mxu0 0
  %1778 = vmatpush1.bf16.xpose.msra.mxu0 0
  %1779 = vmatprep.subr.bf16.mxu0 0
  %1780 = vmatpush1.bf16.xpose.msra.mxu0 0
  %1781 = vmatprep.subr.bf16.mxu0 0
  %1782 = vmatpush1.bf16.xpose.msra.mxu0 0
  %1783 = vmatprep.subr.bf16.mxu0 0
  %1784 = vmatpush1.bf16.xpose.msra.mxu0 0
  %1785 = vmatprep.subr.bf16.mxu0 0
  %1786 = vmatpush1.bf16.xpose.msra.mxu0 0
  %1787 = vmatprep.subr.bf16.mxu0 0
  %1788 = vmatpush1.bf16.xpose.msra.mxu0 0
  %1789 = vmatprep.subr.bf16.mxu0 0
  %1790 = vmatpush1.bf16.xpose.msra.mxu0 0
  %1791 = vmatprep.subr.bf16.mxu0 0
  %1792 = vmatpush1.bf16.xpose.msra.mxu0 0
  %1793 = vmatprep.subr.bf16.mxu0 0
  %1794 = vmatpush1.bf16.xpose.msra.mxu0 0
  %1795 = vmatprep.subr.bf16.mxu0 0
  %1796 = vmatpush1.bf16.xpose.msra.mxu0 0
  %1797 = vmatprep.subr.bf16.mxu0 0
  %1798 = vmatpush1.bf16.xpose.msra.mxu0 0
  %1799 = vmatprep.subr.bf16.mxu0 0
  %1800 = vmatpush1.bf16.xpose.msra.mxu0 0
  %1801 = vmatprep.subr.bf16.mxu0 0
  %1802 = vmatpush1.bf16.xpose.msra.mxu0 0
  %1803 = vmatprep.mubr.bf16.mxu0 0
  %1804 = vmatmul.mubr.bf16.gmra.mrb[0].mxu0 %v1766
  %v1805 = vpop.f32.mrb[0].mxu0
  %v1806 = vadd.f32 %v33, %v1805
  %v1807 = vpop.f32.mrb[0].mxu0
  %v1808 = vpop.f32.mrb[0].mxu0
  %v1809 = vpop.f32.mrb[0].mxu0
  %1810 = vdwg.mxu0
  %v1811 = vunpack.c.l.b16 %v1464
  %v1812 = vpack.c.b16 %v1811, %v1811
  %1813 = vrot.lane.b32.xlu0 %v1812, 96
  %v1814 = vpop.permute.xlu0 %1813
  %v1816 = vsel %vm176, %v1464, 0
  %v1819 = vsel %vm176, %v1814, 0
  %1821 = vmatprep.subr.bf16.mxu0 0
  %1822 = vmatpush1.bf16.xpose.msra.mxu0 %v1819
  %1823 = vmatprep.subr.bf16.mxu0 0
  %1824 = vmatpush1.bf16.xpose.msra.mxu0 0
  %1825 = vmatprep.subr.bf16.mxu0 0
  %1826 = vmatpush1.bf16.xpose.msra.mxu0 0
  %1827 = vmatprep.subr.bf16.mxu0 0
  %1828 = vmatpush1.bf16.xpose.msra.mxu0 0
  %1829 = vmatprep.subr.bf16.mxu0 0
  %1830 = vmatpush1.bf16.xpose.msra.mxu0 0
  %1831 = vmatprep.subr.bf16.mxu0 0
  %1832 = vmatpush1.bf16.xpose.msra.mxu0 0
  %1833 = vmatprep.subr.bf16.mxu0 0
  %1834 = vmatpush1.bf16.xpose.msra.mxu0 0
  %1835 = vmatprep.subr.bf16.mxu0 0
  %1836 = vmatpush1.bf16.xpose.msra.mxu0 0
  %1837 = vmatprep.subr.bf16.mxu0 0
  %1838 = vmatpush1.bf16.xpose.msra.mxu0 0
  %1839 = vmatprep.subr.bf16.mxu0 0
  %1840 = vmatpush1.bf16.xpose.msra.mxu0 0
  %1841 = vmatprep.subr.bf16.mxu0 0
  %1842 = vmatpush1.bf16.xpose.msra.mxu0 0
  %1843 = vmatprep.subr.bf16.mxu0 0
  %1844 = vmatpush1.bf16.xpose.msra.mxu0 0
  %1845 = vmatprep.subr.bf16.mxu0 0
  %1846 = vmatpush1.bf16.xpose.msra.mxu0 0
  %1847 = vmatprep.subr.bf16.mxu0 0
  %1848 = vmatpush1.bf16.xpose.msra.mxu0 0
  %1849 = vmatprep.subr.bf16.mxu0 0
  %1850 = vmatpush1.bf16.xpose.msra.mxu0 0
  %1851 = vmatprep.subr.bf16.mxu0 0
  %1852 = vmatpush1.bf16.xpose.msra.mxu0 0
  %1853 = vmatprep.mubr.bf16.mxu0 0
  %1854 = vmatmul.mubr.bf16.gmra.mrb[0].mxu0 %v1816
  %v1855 = vpop.f32.mrb[0].mxu0
  %v1856 = vadd.f32 %v34, %v1855
  %v1857 = vpop.f32.mrb[0].mxu0
  %v1858 = vpop.f32.mrb[0].mxu0
  %v1859 = vpop.f32.mrb[0].mxu0
  %1860 = vdwg.mxu0
  %v1861 = vsel %vm176, %v1508, -inf
  %1862 = vmax.xlane.f32.xlu0 %v1861
  %v1863 = vpop.xlane.xlu0 %1862
  %v1864 = vsel %vm176, %v1556, -inf
  %1865 = vmax.xlane.f32.xlu0 %v1864
  %v1866 = vpop.xlane.xlu0 %1865
  %v1867 = vsel %vm176, %v1606, -inf
  %1868 = vmax.xlane.f32.xlu0 %v1867
  %v1869 = vpop.xlane.xlu0 %1868
  %v1870 = vsel %vm176, %v1656, -inf
  %1871 = vmax.xlane.f32.xlu0 %v1870
  %v1872 = vpop.xlane.xlu0 %1871
  %v1873 = vsel %vm176, %v1706, -inf
  %1874 = vmax.xlane.f32.xlu0 %v1873
  %v1875 = vpop.xlane.xlu0 %1874
  %v1876 = vsel %vm176, %v1756, -inf
  %1877 = vmax.xlane.f32.xlu0 %v1876
  %v1878 = vpop.xlane.xlu0 %1877
  %v1879 = vsel %vm176, %v1806, -inf
  %1880 = vmax.xlane.f32.xlu0 %v1879
  %v1881 = vpop.xlane.xlu0 %1880
  %v1882 = vsel %vm176, %v1856, -inf
  %1883 = vmax.xlane.f32.xlu0 %v1882
  %v1884 = vpop.xlane.xlu0 %1883
  %v1885 = vsub.f32 %v1508, %v1863
  %v1886 = vsub.f32 %v1556, %v1866
  %v1887 = vsub.f32 %v1606, %v1869
  %v1888 = vsub.f32 %v1656, %v1872
  %v1889 = vsub.f32 %v1706, %v1875
  %v1890 = vsub.f32 %v1756, %v1878
  %v1891 = vsub.f32 %v1806, %v1881
  %v1892 = vsub.f32 %v1856, %v1884
  %v1893 = vmul.f32 %v1885, 1.442695
  %v1894 = vpow.pop %v1893
  %v1895 = vmul.f32 %v1886, 1.442695
  %v1896 = vpow.pop %v1895
  %v1897 = vmul.f32 %v1887, 1.442695
  %v1898 = vpow.pop %v1897
  %v1899 = vmul.f32 %v1888, 1.442695
  %v1900 = vpow.pop %v1899
  %v1901 = vmul.f32 %v1889, 1.442695
  %v1902 = vpow.pop %v1901
  %v1903 = vmul.f32 %v1890, 1.442695
  %v1904 = vpow.pop %v1903
  %v1905 = vmul.f32 %v1891, 1.442695
  %v1906 = vpow.pop %v1905
  %v1907 = vmul.f32 %v1892, 1.442695
  %v1908 = vpow.pop %v1907
  %v1909 = vsel %vm176, %v1894, 0.0
  %1910 = vadd.xlane.f32.xlu0 %v1909
  %v1911 = vpop.xlane.xlu0 %1910
  %v1912 = vsel %vm176, %v1896, 0.0
  %1913 = vadd.xlane.f32.xlu0 %v1912
  %v1914 = vpop.xlane.xlu0 %1913
  %v1915 = vsel %vm176, %v1898, 0.0
  %1916 = vadd.xlane.f32.xlu0 %v1915
  %v1917 = vpop.xlane.xlu0 %1916
  %v1918 = vsel %vm176, %v1900, 0.0
  %1919 = vadd.xlane.f32.xlu0 %v1918
  %v1920 = vpop.xlane.xlu0 %1919
  %v1921 = vsel %vm176, %v1902, 0.0
  %1922 = vadd.xlane.f32.xlu0 %v1921
  %v1923 = vpop.xlane.xlu0 %1922
  %v1924 = vsel %vm176, %v1904, 0.0
  %1925 = vadd.xlane.f32.xlu0 %v1924
  %v1926 = vpop.xlane.xlu0 %1925
  %v1927 = vsel %vm176, %v1906, 0.0
  %1928 = vadd.xlane.f32.xlu0 %v1927
  %v1929 = vpop.xlane.xlu0 %1928
  %v1930 = vsel %vm176, %v1908, 0.0
  %1931 = vadd.xlane.f32.xlu0 %v1930
  %v1932 = vpop.xlane.xlu0 %1931
  %v1933 = vrcp.pop %v1911
  %v1934 = vrcp.pop %v1914
  %v1935 = vrcp.pop %v1917
  %v1936 = vrcp.pop %v1920
  %v1937 = vrcp.pop %v1923
  %v1938 = vrcp.pop %v1926
  %v1939 = vrcp.pop %v1929
  %v1940 = vrcp.pop %v1932
  %v1941 = vmul.f32 %v1894, %v1933
  %v1942 = vmul.f32 %v1896, %v1934
  %v1943 = vmul.f32 %v1898, %v1935
  %v1944 = vmul.f32 %v1900, %v1936
  %v1945 = vmul.f32 %v1902, %v1937
  %v1946 = vmul.f32 %v1904, %v1938
  %v1947 = vmul.f32 %v1906, %v1939
  %v1948 = vmul.f32 %v1908, %v1940
  %v1949 = vpack.c.bf16 %v1941, %v1941
  %v1950 = vpack.c.bf16 %v1942, %v1942
  %v1951 = vpack.c.bf16 %v1943, %v1943
  %v1952 = vpack.c.bf16 %v1944, %v1944
  %v1953 = vpack.c.bf16 %v1945, %v1945
  %v1954 = vpack.c.bf16 %v1946, %v1946
  %v1955 = vpack.c.bf16 %v1947, %v1947
  %v1956 = vpack.c.bf16 %v1948, %v1948
  %1957 = vrot.lane.b32.xlu0 %v1451, 64
  %v1958 = vpop.permute.xlu0 %1957
  %v1960 = vsel %vm176, %v1949, 0
  %v1963 = vsel %vm672, %v1958, 0
  %1965 = vmatprep.subr.bf16.mxu0 0
  %1966 = vmatpush1.bf16.msra.mxu0 %v1963
  %1967 = vmatprep.subr.bf16.mxu0 0
  %1968 = vmatpush1.bf16.msra.mxu0 0
  %1969 = vmatprep.subr.bf16.mxu0 0
  %1970 = vmatpush1.bf16.msra.mxu0 0
  %1971 = vmatprep.subr.bf16.mxu0 0
  %1972 = vmatpush1.bf16.msra.mxu0 0
  %1973 = vmatprep.subr.bf16.mxu0 0
  %1974 = vmatpush1.bf16.msra.mxu0 0
  %1975 = vmatprep.subr.bf16.mxu0 0
  %1976 = vmatpush1.bf16.msra.mxu0 0
  %1977 = vmatprep.subr.bf16.mxu0 0
  %1978 = vmatpush1.bf16.msra.mxu0 0
  %1979 = vmatprep.subr.bf16.mxu0 0
  %1980 = vmatpush1.bf16.msra.mxu0 0
  %1981 = vmatprep.subr.bf16.mxu0 0
  %1982 = vmatpush1.bf16.msra.mxu0 0
  %1983 = vmatprep.subr.bf16.mxu0 0
  %1984 = vmatpush1.bf16.msra.mxu0 0
  %1985 = vmatprep.subr.bf16.mxu0 0
  %1986 = vmatpush1.bf16.msra.mxu0 0
  %1987 = vmatprep.subr.bf16.mxu0 0
  %1988 = vmatpush1.bf16.msra.mxu0 0
  %1989 = vmatprep.subr.bf16.mxu0 0
  %1990 = vmatpush1.bf16.msra.mxu0 0
  %1991 = vmatprep.subr.bf16.mxu0 0
  %1992 = vmatpush1.bf16.msra.mxu0 0
  %1993 = vmatprep.subr.bf16.mxu0 0
  %1994 = vmatpush1.bf16.msra.mxu0 0
  %1995 = vmatprep.subr.bf16.mxu0 0
  %1996 = vmatpush1.bf16.msra.mxu0 0
  %1997 = vmatprep.mubr.bf16.mxu0 0
  %1998 = vmatmul.mubr.bf16.gmra.mrb[0].mxu0 %v1960
  %v1999 = vpop.f32.mrb[0].mxu0
  %v2000 = vadd.f32 0.0, %v1999
  %v2001 = vpop.f32.mrb[0].mxu0
  %v2002 = vpop.f32.mrb[0].mxu0
  %v2003 = vpop.f32.mrb[0].mxu0
  %2004 = vdwg.mxu0
  %2005 = vrot.lane.b32.xlu0 %v1452, 64
  %v2006 = vpop.permute.xlu0 %2005
  %v2008 = vsel %vm176, %v1950, 0
  %v2011 = vsel %vm672, %v2006, 0
  %2013 = vmatprep.subr.bf16.mxu0 0
  %2014 = vmatpush1.bf16.msra.mxu0 %v2011
  %2015 = vmatprep.subr.bf16.mxu0 0
  %2016 = vmatpush1.bf16.msra.mxu0 0
  %2017 = vmatprep.subr.bf16.mxu0 0
  %2018 = vmatpush1.bf16.msra.mxu0 0
  %2019 = vmatprep.subr.bf16.mxu0 0
  %2020 = vmatpush1.bf16.msra.mxu0 0
  %2021 = vmatprep.subr.bf16.mxu0 0
  %2022 = vmatpush1.bf16.msra.mxu0 0
  %2023 = vmatprep.subr.bf16.mxu0 0
  %2024 = vmatpush1.bf16.msra.mxu0 0
  %2025 = vmatprep.subr.bf16.mxu0 0
  %2026 = vmatpush1.bf16.msra.mxu0 0
  %2027 = vmatprep.subr.bf16.mxu0 0
  %2028 = vmatpush1.bf16.msra.mxu0 0
  %2029 = vmatprep.subr.bf16.mxu0 0
  %2030 = vmatpush1.bf16.msra.mxu0 0
  %2031 = vmatprep.subr.bf16.mxu0 0
  %2032 = vmatpush1.bf16.msra.mxu0 0
  %2033 = vmatprep.subr.bf16.mxu0 0
  %2034 = vmatpush1.bf16.msra.mxu0 0
  %2035 = vmatprep.subr.bf16.mxu0 0
  %2036 = vmatpush1.bf16.msra.mxu0 0
  %2037 = vmatprep.subr.bf16.mxu0 0
  %2038 = vmatpush1.bf16.msra.mxu0 0
  %2039 = vmatprep.subr.bf16.mxu0 0
  %2040 = vmatpush1.bf16.msra.mxu0 0
  %2041 = vmatprep.subr.bf16.mxu0 0
  %2042 = vmatpush1.bf16.msra.mxu0 0
  %2043 = vmatprep.subr.bf16.mxu0 0
  %2044 = vmatpush1.bf16.msra.mxu0 0
  %2045 = vmatprep.mubr.bf16.mxu0 0
  %2046 = vmatmul.mubr.bf16.gmra.mrb[0].mxu0 %v2008
  %v2047 = vpop.f32.mrb[0].mxu0
  %v2048 = vadd.f32 0.0, %v2047
  %v2049 = vpop.f32.mrb[0].mxu0
  %v2050 = vpop.f32.mrb[0].mxu0
  %v2051 = vpop.f32.mrb[0].mxu0
  %2052 = vdwg.mxu0
  %2053 = vrot.lane.b32.xlu0 %v1562, 64
  %v2054 = vpop.permute.xlu0 %2053
  %v2056 = vsel %vm176, %v1951, 0
  %v2059 = vsel %vm672, %v2054, 0
  %2061 = vmatprep.subr.bf16.mxu0 0
  %2062 = vmatpush1.bf16.msra.mxu0 %v2059
  %2063 = vmatprep.subr.bf16.mxu0 0
  %2064 = vmatpush1.bf16.msra.mxu0 0
  %2065 = vmatprep.subr.bf16.mxu0 0
  %2066 = vmatpush1.bf16.msra.mxu0 0
  %2067 = vmatprep.subr.bf16.mxu0 0
  %2068 = vmatpush1.bf16.msra.mxu0 0
  %2069 = vmatprep.subr.bf16.mxu0 0
  %2070 = vmatpush1.bf16.msra.mxu0 0
  %2071 = vmatprep.subr.bf16.mxu0 0
  %2072 = vmatpush1.bf16.msra.mxu0 0
  %2073 = vmatprep.subr.bf16.mxu0 0
  %2074 = vmatpush1.bf16.msra.mxu0 0
  %2075 = vmatprep.subr.bf16.mxu0 0
  %2076 = vmatpush1.bf16.msra.mxu0 0
  %2077 = vmatprep.subr.bf16.mxu0 0
  %2078 = vmatpush1.bf16.msra.mxu0 0
  %2079 = vmatprep.subr.bf16.mxu0 0
  %2080 = vmatpush1.bf16.msra.mxu0 0
  %2081 = vmatprep.subr.bf16.mxu0 0
  %2082 = vmatpush1.bf16.msra.mxu0 0
  %2083 = vmatprep.subr.bf16.mxu0 0
  %2084 = vmatpush1.bf16.msra.mxu0 0
  %2085 = vmatprep.subr.bf16.mxu0 0
  %2086 = vmatpush1.bf16.msra.mxu0 0
  %2087 = vmatprep.subr.bf16.mxu0 0
  %2088 = vmatpush1.bf16.msra.mxu0 0
  %2089 = vmatprep.subr.bf16.mxu0 0
  %2090 = vmatpush1.bf16.msra.mxu0 0
  %2091 = vmatprep.subr.bf16.mxu0 0
  %2092 = vmatpush1.bf16.msra.mxu0 0
  %2093 = vmatprep.mubr.bf16.mxu0 0
  %2094 = vmatmul.mubr.bf16.gmra.mrb[0].mxu0 %v2056
  %v2095 = vpop.f32.mrb[0].mxu0
  %v2096 = vadd.f32 0.0, %v2095
  %v2097 = vpop.f32.mrb[0].mxu0
  %v2098 = vpop.f32.mrb[0].mxu0
  %v2099 = vpop.f32.mrb[0].mxu0
  %2100 = vdwg.mxu0
  %2101 = vrot.lane.b32.xlu0 %v1612, 64
  %v2102 = vpop.permute.xlu0 %2101
  %v2104 = vsel %vm176, %v1952, 0
  %v2107 = vsel %vm672, %v2102, 0
  %2109 = vmatprep.subr.bf16.mxu0 0
  %2110 = vmatpush1.bf16.msra.mxu0 %v2107
  %2111 = vmatprep.subr.bf16.mxu0 0
  %2112 = vmatpush1.bf16.msra.mxu0 0
  %2113 = vmatprep.subr.bf16.mxu0 0
  %2114 = vmatpush1.bf16.msra.mxu0 0
  %2115 = vmatprep.subr.bf16.mxu0 0
  %2116 = vmatpush1.bf16.msra.mxu0 0
  %2117 = vmatprep.subr.bf16.mxu0 0
  %2118 = vmatpush1.bf16.msra.mxu0 0
  %2119 = vmatprep.subr.bf16.mxu0 0
  %2120 = vmatpush1.bf16.msra.mxu0 0
  %2121 = vmatprep.subr.bf16.mxu0 0
  %2122 = vmatpush1.bf16.msra.mxu0 0
  %2123 = vmatprep.subr.bf16.mxu0 0
  %2124 = vmatpush1.bf16.msra.mxu0 0
  %2125 = vmatprep.subr.bf16.mxu0 0
  %2126 = vmatpush1.bf16.msra.mxu0 0
  %2127 = vmatprep.subr.bf16.mxu0 0
  %2128 = vmatpush1.bf16.msra.mxu0 0
  %2129 = vmatprep.subr.bf16.mxu0 0
  %2130 = vmatpush1.bf16.msra.mxu0 0
  %2131 = vmatprep.subr.bf16.mxu0 0
  %2132 = vmatpush1.bf16.msra.mxu0 0
  %2133 = vmatprep.subr.bf16.mxu0 0
  %2134 = vmatpush1.bf16.msra.mxu0 0
  %2135 = vmatprep.subr.bf16.mxu0 0
  %2136 = vmatpush1.bf16.msra.mxu0 0
  %2137 = vmatprep.subr.bf16.mxu0 0
  %2138 = vmatpush1.bf16.msra.mxu0 0
  %2139 = vmatprep.subr.bf16.mxu0 0
  %2140 = vmatpush1.bf16.msra.mxu0 0
  %2141 = vmatprep.mubr.bf16.mxu0 0
  %2142 = vmatmul.mubr.bf16.gmra.mrb[0].mxu0 %v2104
  %v2143 = vpop.f32.mrb[0].mxu0
  %v2144 = vadd.f32 0.0, %v2143
  %v2145 = vpop.f32.mrb[0].mxu0
  %v2146 = vpop.f32.mrb[0].mxu0
  %v2147 = vpop.f32.mrb[0].mxu0
  %2148 = vdwg.mxu0
  %2149 = vrot.lane.b32.xlu0 %v1662, 64
  %v2150 = vpop.permute.xlu0 %2149
  %v2152 = vsel %vm176, %v1953, 0
  %v2155 = vsel %vm672, %v2150, 0
  %2157 = vmatprep.subr.bf16.mxu0 0
  %2158 = vmatpush1.bf16.msra.mxu0 %v2155
  %2159 = vmatprep.subr.bf16.mxu0 0
  %2160 = vmatpush1.bf16.msra.mxu0 0
  %2161 = vmatprep.subr.bf16.mxu0 0
  %2162 = vmatpush1.bf16.msra.mxu0 0
  %2163 = vmatprep.subr.bf16.mxu0 0
  %2164 = vmatpush1.bf16.msra.mxu0 0
  %2165 = vmatprep.subr.bf16.mxu0 0
  %2166 = vmatpush1.bf16.msra.mxu0 0
  %2167 = vmatprep.subr.bf16.mxu0 0
  %2168 = vmatpush1.bf16.msra.mxu0 0
  %2169 = vmatprep.subr.bf16.mxu0 0
  %2170 = vmatpush1.bf16.msra.mxu0 0
  %2171 = vmatprep.subr.bf16.mxu0 0
  %2172 = vmatpush1.bf16.msra.mxu0 0
  %2173 = vmatprep.subr.bf16.mxu0 0
  %2174 = vmatpush1.bf16.msra.mxu0 0
  %2175 = vmatprep.subr.bf16.mxu0 0
  %2176 = vmatpush1.bf16.msra.mxu0 0
  %2177 = vmatprep.subr.bf16.mxu0 0
  %2178 = vmatpush1.bf16.msra.mxu0 0
  %2179 = vmatprep.subr.bf16.mxu0 0
  %2180 = vmatpush1.bf16.msra.mxu0 0
  %2181 = vmatprep.subr.bf16.mxu0 0
  %2182 = vmatpush1.bf16.msra.mxu0 0
  %2183 = vmatprep.subr.bf16.mxu0 0
  %2184 = vmatpush1.bf16.msra.mxu0 0
  %2185 = vmatprep.subr.bf16.mxu0 0
  %2186 = vmatpush1.bf16.msra.mxu0 0
  %2187 = vmatprep.subr.bf16.mxu0 0
  %2188 = vmatpush1.bf16.msra.mxu0 0
  %2189 = vmatprep.mubr.bf16.mxu0 0
  %2190 = vmatmul.mubr.bf16.gmra.mrb[0].mxu0 %v2152
  %v2191 = vpop.f32.mrb[0].mxu0
  %v2192 = vadd.f32 0.0, %v2191
  %v2193 = vpop.f32.mrb[0].mxu0
  %v2194 = vpop.f32.mrb[0].mxu0
  %v2195 = vpop.f32.mrb[0].mxu0
  %2196 = vdwg.mxu0
  %2197 = vrot.lane.b32.xlu0 %v1712, 64
  %v2198 = vpop.permute.xlu0 %2197
  %v2200 = vsel %vm176, %v1954, 0
  %v2203 = vsel %vm672, %v2198, 0
  %2205 = vmatprep.subr.bf16.mxu0 0
  %2206 = vmatpush1.bf16.msra.mxu0 %v2203
  %2207 = vmatprep.subr.bf16.mxu0 0
  %2208 = vmatpush1.bf16.msra.mxu0 0
  %2209 = vmatprep.subr.bf16.mxu0 0
  %2210 = vmatpush1.bf16.msra.mxu0 0
  %2211 = vmatprep.subr.bf16.mxu0 0
  %2212 = vmatpush1.bf16.msra.mxu0 0
  %2213 = vmatprep.subr.bf16.mxu0 0
  %2214 = vmatpush1.bf16.msra.mxu0 0
  %2215 = vmatprep.subr.bf16.mxu0 0
  %2216 = vmatpush1.bf16.msra.mxu0 0
  %2217 = vmatprep.subr.bf16.mxu0 0
  %2218 = vmatpush1.bf16.msra.mxu0 0
  %2219 = vmatprep.subr.bf16.mxu0 0
  %2220 = vmatpush1.bf16.msra.mxu0 0
  %2221 = vmatprep.subr.bf16.mxu0 0
  %2222 = vmatpush1.bf16.msra.mxu0 0
  %2223 = vmatprep.subr.bf16.mxu0 0
  %2224 = vmatpush1.bf16.msra.mxu0 0
  %2225 = vmatprep.subr.bf16.mxu0 0
  %2226 = vmatpush1.bf16.msra.mxu0 0
  %2227 = vmatprep.subr.bf16.mxu0 0
  %2228 = vmatpush1.bf16.msra.mxu0 0
  %2229 = vmatprep.subr.bf16.mxu0 0
  %2230 = vmatpush1.bf16.msra.mxu0 0
  %2231 = vmatprep.subr.bf16.mxu0 0
  %2232 = vmatpush1.bf16.msra.mxu0 0
  %2233 = vmatprep.subr.bf16.mxu0 0
  %2234 = vmatpush1.bf16.msra.mxu0 0
  %2235 = vmatprep.subr.bf16.mxu0 0
  %2236 = vmatpush1.bf16.msra.mxu0 0
  %2237 = vmatprep.mubr.bf16.mxu0 0
  %2238 = vmatmul.mubr.bf16.gmra.mrb[0].mxu0 %v2200
  %v2239 = vpop.f32.mrb[0].mxu0
  %v2240 = vadd.f32 0.0, %v2239
  %v2241 = vpop.f32.mrb[0].mxu0
  %v2242 = vpop.f32.mrb[0].mxu0
  %v2243 = vpop.f32.mrb[0].mxu0
  %2244 = vdwg.mxu0
  %2245 = vrot.lane.b32.xlu0 %v1762, 64
  %v2246 = vpop.permute.xlu0 %2245
  %v2248 = vsel %vm176, %v1955, 0
  %v2251 = vsel %vm672, %v2246, 0
  %2253 = vmatprep.subr.bf16.mxu0 0
  %2254 = vmatpush1.bf16.msra.mxu0 %v2251
  %2255 = vmatprep.subr.bf16.mxu0 0
  %2256 = vmatpush1.bf16.msra.mxu0 0
  %2257 = vmatprep.subr.bf16.mxu0 0
  %2258 = vmatpush1.bf16.msra.mxu0 0
  %2259 = vmatprep.subr.bf16.mxu0 0
  %2260 = vmatpush1.bf16.msra.mxu0 0
  %2261 = vmatprep.subr.bf16.mxu0 0
  %2262 = vmatpush1.bf16.msra.mxu0 0
  %2263 = vmatprep.subr.bf16.mxu0 0
  %2264 = vmatpush1.bf16.msra.mxu0 0
  %2265 = vmatprep.subr.bf16.mxu0 0
  %2266 = vmatpush1.bf16.msra.mxu0 0
  %2267 = vmatprep.subr.bf16.mxu0 0
  %2268 = vmatpush1.bf16.msra.mxu0 0
  %2269 = vmatprep.subr.bf16.mxu0 0
  %2270 = vmatpush1.bf16.msra.mxu0 0
  %2271 = vmatprep.subr.bf16.mxu0 0
  %2272 = vmatpush1.bf16.msra.mxu0 0
  %2273 = vmatprep.subr.bf16.mxu0 0
  %2274 = vmatpush1.bf16.msra.mxu0 0
  %2275 = vmatprep.subr.bf16.mxu0 0
  %2276 = vmatpush1.bf16.msra.mxu0 0
  %2277 = vmatprep.subr.bf16.mxu0 0
  %2278 = vmatpush1.bf16.msra.mxu0 0
  %2279 = vmatprep.subr.bf16.mxu0 0
  %2280 = vmatpush1.bf16.msra.mxu0 0
  %2281 = vmatprep.subr.bf16.mxu0 0
  %2282 = vmatpush1.bf16.msra.mxu0 0
  %2283 = vmatprep.subr.bf16.mxu0 0
  %2284 = vmatpush1.bf16.msra.mxu0 0
  %2285 = vmatprep.mubr.bf16.mxu0 0
  %2286 = vmatmul.mubr.bf16.gmra.mrb[0].mxu0 %v2248
  %v2287 = vpop.f32.mrb[0].mxu0
  %v2288 = vadd.f32 0.0, %v2287
  %v2289 = vpop.f32.mrb[0].mxu0
  %v2290 = vpop.f32.mrb[0].mxu0
  %v2291 = vpop.f32.mrb[0].mxu0
  %2292 = vdwg.mxu0
  %2293 = vrot.lane.b32.xlu0 %v1812, 64
  %v2294 = vpop.permute.xlu0 %2293
  %v2296 = vsel %vm176, %v1956, 0
  %v2299 = vsel %vm672, %v2294, 0
  %2301 = vmatprep.subr.bf16.mxu0 0
  %2302 = vmatpush1.bf16.msra.mxu0 %v2299
  %2303 = vmatprep.subr.bf16.mxu0 0
  %2304 = vmatpush1.bf16.msra.mxu0 0
  %2305 = vmatprep.subr.bf16.mxu0 0
  %2306 = vmatpush1.bf16.msra.mxu0 0
  %2307 = vmatprep.subr.bf16.mxu0 0
  %2308 = vmatpush1.bf16.msra.mxu0 0
  %2309 = vmatprep.subr.bf16.mxu0 0
  %2310 = vmatpush1.bf16.msra.mxu0 0
  %2311 = vmatprep.subr.bf16.mxu0 0
  %2312 = vmatpush1.bf16.msra.mxu0 0
  %2313 = vmatprep.subr.bf16.mxu0 0
  %2314 = vmatpush1.bf16.msra.mxu0 0
  %2315 = vmatprep.subr.bf16.mxu0 0
  %2316 = vmatpush1.bf16.msra.mxu0 0
  %2317 = vmatprep.subr.bf16.mxu0 0
  %2318 = vmatpush1.bf16.msra.mxu0 0
  %2319 = vmatprep.subr.bf16.mxu0 0
  %2320 = vmatpush1.bf16.msra.mxu0 0
  %2321 = vmatprep.subr.bf16.mxu0 0
  %2322 = vmatpush1.bf16.msra.mxu0 0
  %2323 = vmatprep.subr.bf16.mxu0 0
  %2324 = vmatpush1.bf16.msra.mxu0 0
  %2325 = vmatprep.subr.bf16.mxu0 0
  %2326 = vmatpush1.bf16.msra.mxu0 0
  %2327 = vmatprep.subr.bf16.mxu0 0
  %2328 = vmatpush1.bf16.msra.mxu0 0
  %2329 = vmatprep.subr.bf16.mxu0 0
  %2330 = vmatpush1.bf16.msra.mxu0 0
  %2331 = vmatprep.subr.bf16.mxu0 0
  %2332 = vmatpush1.bf16.msra.mxu0 0
  %2333 = vmatprep.mubr.bf16.mxu0 0
  %2334 = vmatmul.mubr.bf16.gmra.mrb[0].mxu0 %v2296
  %v2335 = vpop.f32.mrb[0].mxu0
  %v2336 = vadd.f32 0.0, %v2335
  %v2337 = vpop.f32.mrb[0].mxu0
  %v2338 = vpop.f32.mrb[0].mxu0
  %v2339 = vpop.f32.mrb[0].mxu0
  %2340 = vdwg.mxu0
  %2343 = vrot.lane.b32.xlu0 %v2096, 8
  %v2344 = vpop.permute.xlu0 %2343
  %2345 = vrot.lane.b32.xlu0 %v2144, 8
  %v2346 = vpop.permute.xlu0 %2345
  %2351 = vrot.lane.b32.xlu0 %v2192, 16
  %v2352 = vpop.permute.xlu0 %2351
  %2353 = vrot.lane.b32.xlu0 %v2240, 16
  %v2354 = vpop.permute.xlu0 %2353
  %2359 = vrot.lane.b32.xlu0 %v2288, 24
  %v2360 = vpop.permute.xlu0 %2359
  %2361 = vrot.lane.b32.xlu0 %v2336, 24
  %v2362 = vpop.permute.xlu0 %2361
  %v2365 = vsel %vm176, %v2000, %v2344
  %v2366 = vsel %vm176, %v2048, %v2346
  %v2367 = vsel %vm1078, %v2365, %v2352
  %v2368 = vsel %vm1078, %v2366, %v2354
  %v2369 = vsel %vm1081, %v2367, %v2360
  %v2370 = vsel %vm1081, %v2368, %v2362
  %v2371 = vpack.c.bf16 %v2370, %v2369
  %v2372 = vlaneseq
  %v2373 = vshrl.u32 %v2372, 7
  %v2374 = vsub.s32 1, %v2373
  %v2375 = vrot.slane %v1385, %v2374
  %v2376 = vunpack.c.h.b16 %v1367
  %v2377 = vunpack.c.h.b16 %v1369
  %v2378 = vunpack.c.h.b16 %v1371
  %v2379 = vunpack.c.h.b16 %v1373
  %v2380 = vpack.c.b16 %v2377, %v2376
  %v2381 = vpack.c.b16 %v2379, %v2378
  %v2385 = vsel %vm38, %v2371, 0
  %2387 = vmatprep.subr.bf16.mxu0 0
  %2388 = vmatpush1.bf16.msra.mxu0 %v2380
  %2389 = vmatprep.subr.bf16.mxu0 0
  %2390 = vmatpush1.bf16.msra.mxu0 %v2381
  %2391 = vmatprep.subr.bf16.mxu0 0
  %2392 = vmatpush1.bf16.msra.mxu0 0
  %2393 = vmatprep.subr.bf16.mxu0 0
  %2394 = vmatpush1.bf16.msra.mxu0 0
  %2395 = vmatprep.subr.bf16.mxu0 0
  %2396 = vmatpush1.bf16.msra.mxu0 0
  %2397 = vmatprep.subr.bf16.mxu0 0
  %2398 = vmatpush1.bf16.msra.mxu0 0
  %2399 = vmatprep.subr.bf16.mxu0 0
  %2400 = vmatpush1.bf16.msra.mxu0 0
  %2401 = vmatprep.subr.bf16.mxu0 0
  %2402 = vmatpush1.bf16.msra.mxu0 0
  %2403 = vmatprep.subr.bf16.mxu0 0
  %2404 = vmatpush1.bf16.msra.mxu0 0
  %2405 = vmatprep.subr.bf16.mxu0 0
  %2406 = vmatpush1.bf16.msra.mxu0 0
  %2407 = vmatprep.subr.bf16.mxu0 0
  %2408 = vmatpush1.bf16.msra.mxu0 0
  %2409 = vmatprep.subr.bf16.mxu0 0
  %2410 = vmatpush1.bf16.msra.mxu0 0
  %2411 = vmatprep.subr.bf16.mxu0 0
  %2412 = vmatpush1.bf16.msra.mxu0 0
  %2413 = vmatprep.subr.bf16.mxu0 0
  %2414 = vmatpush1.bf16.msra.mxu0 0
  %2415 = vmatprep.subr.bf16.mxu0 0
  %2416 = vmatpush1.bf16.msra.mxu0 0
  %2417 = vmatprep.subr.bf16.mxu0 0
  %2418 = vmatpush1.bf16.msra.mxu0 0
  %2419 = vmatprep.mubr.bf16.mxu0 0
  %2420 = vmatmul.mubr.bf16.gmra.mrb[0].mxu0 %v2385
  %v2421 = vpop.f32.mrb[0].mxu0
  %v2422 = vadd.f32 %v2375, %v2421
  %v2423 = vpop.f32.mrb[0].mxu0
  %v2424 = vpop.f32.mrb[0].mxu0
  %v2425 = vadd.f32 %v2375, %v2424
  %v2426 = vpop.f32.mrb[0].mxu0
  %2427 = vdwg.mxu0
  %v2428 = vadd.f32 %v2422, %v1364
  %v2429 = vadd.f32 %v2425, %v1365
  %v2430 = vsel %vm38, %v2428, 0.0
  %2431 = vadd.xlane.f32.xlu0 %v2430
  %v2432 = vpop.xlane.xlu0 %2431
  %v2433 = vsel %vm38, %v2429, 0.0
  %2434 = vadd.xlane.f32.xlu0 %v2433
  %v2435 = vpop.xlane.xlu0 %2434
  %v2436 = vmul.f32 %v2432, %v45
  %v2437 = vmul.f32 %v2435, %v45
  %v2438 = vsub.f32 %v2428, %v2436
  %v2439 = vsub.f32 %v2429, %v2437
  %v2440 = vmul.f32 %v2438, %v2438
  %v2441 = vmul.f32 %v2439, %v2439
  %v2442 = vsel %vm38, %v2440, 0.0
  %2443 = vadd.xlane.f32.xlu0 %v2442
  %v2444 = vpop.xlane.xlu0 %2443
  %v2445 = vsel %vm38, %v2441, 0.0
  %2446 = vadd.xlane.f32.xlu0 %v2445
  %v2447 = vpop.xlane.xlu0 %2446
  %v2448 = vmul.f32 %v2444, %v45
  %v2449 = vmul.f32 %v2447, %v45
  %v2450 = vadd.f32 %v2448, 1e-12
  %v2451 = vadd.f32 %v2449, 1e-12
  %v2452 = vrsqrt.pop %v2450
  %v2453 = vrsqrt.pop %v2451
  %v2454 = vmul.f32 %v2438, %v2452
  %v2455 = vmul.f32 %v2439, %v2453
  %v2456 = vlaneseq
  %v2457 = vshrl.u32 %v2456, 7
  %v2458 = vsub.s32 2, %v2457
  %v2459 = vrot.slane %v1385, %v2458
  %v2460 = vmul.f32 %v2454, %v2459
  %v2461 = vmul.f32 %v2455, %v2459
  %v2462 = vlaneseq
  %v2463 = vshrl.u32 %v2462, 7
  %v2464 = vsub.s32 3, %v2463
  %v2465 = vrot.slane %v1385, %v2464
  %v2466 = vadd.f32 %v2460, %v2465
  %v2467 = vadd.f32 %v2461, %v2465
  %v2468 = vpack.c.bf16 %v2467, %v2466
  %v2469 = vlaneseq
  %v2470 = vshrl.u32 %v2469, 7
  %v2471 = vsub.s32 4, %v2470
  %v2472 = vrot.slane %v1385, %v2471
  %v2477 = vunpack.c.l.b16 %v1368
  %v2478 = vunpack.c.l.b16 %v1370
  %v2479 = vunpack.c.l.b16 %v1372
  %v2480 = vunpack.c.l.b16 %v1374
  %v2481 = vpack.c.b16 %v2478, %v2477
  %v2482 = vpack.c.b16 %v2480, %v2479
  %v2486 = vsel %vm38, %v2468, 0
  %2488 = vmatprep.subr.bf16.mxu0 0
  %2489 = vmatpush1.bf16.msra.mxu0 %v2481
  %2490 = vmatprep.subr.bf16.mxu0 0
  %2491 = vmatpush1.bf16.msra.mxu0 %v2482
  %2492 = vmatprep.subr.bf16.mxu0 0
  %2493 = vmatpush1.bf16.msra.mxu0 0
  %2494 = vmatprep.subr.bf16.mxu0 0
  %2495 = vmatpush1.bf16.msra.mxu0 0
  %2496 = vmatprep.subr.bf16.mxu0 0
  %2497 = vmatpush1.bf16.msra.mxu0 0
  %2498 = vmatprep.subr.bf16.mxu0 0
  %2499 = vmatpush1.bf16.msra.mxu0 0
  %2500 = vmatprep.subr.bf16.mxu0 0
  %2501 = vmatpush1.bf16.msra.mxu0 0
  %2502 = vmatprep.subr.bf16.mxu0 0
  %2503 = vmatpush1.bf16.msra.mxu0 0
  %2504 = vmatprep.subr.bf16.mxu0 0
  %2505 = vmatpush1.bf16.msra.mxu0 0
  %2506 = vmatprep.subr.bf16.mxu0 0
  %2507 = vmatpush1.bf16.msra.mxu0 0
  %2508 = vmatprep.subr.bf16.mxu0 0
  %2509 = vmatpush1.bf16.msra.mxu0 0
  %2510 = vmatprep.subr.bf16.mxu0 0
  %2511 = vmatpush1.bf16.msra.mxu0 0
  %2512 = vmatprep.subr.bf16.mxu0 0
  %2513 = vmatpush1.bf16.msra.mxu0 0
  %2514 = vmatprep.subr.bf16.mxu0 0
  %2515 = vmatpush1.bf16.msra.mxu0 0
  %2516 = vmatprep.subr.bf16.mxu0 0
  %2517 = vmatpush1.bf16.msra.mxu0 0
  %2518 = vmatprep.subr.bf16.mxu0 0
  %2519 = vmatpush1.bf16.msra.mxu0 0
  %2520 = vmatprep.mubr.bf16.mxu0 0
  %2521 = vmatmul.mubr.bf16.gmra.mrb[0].mxu0 %v2486
  %v2522 = vpop.f32.mrb[0].mxu0
  %v2523 = vadd.f32 %v2472, %v2522
  %v2524 = vpop.f32.mrb[0].mxu0
  %v2525 = vpop.f32.mrb[0].mxu0
  %v2526 = vadd.f32 %v2472, %v2525
  %v2527 = vpop.f32.mrb[0].mxu0
  %2528 = vdwg.mxu0
  %v2529 = vmul.f32 %v2523, 0.5
  %v2530 = vmul.f32 %v2526, 0.5
  %v2531 = vmul.f32 %v2523, 0.70710677
  %v2532 = vmul.f32 %v2526, 0.70710677
  %v2533 = verf.f32.pop %v2531
  %v2534 = verf.f32.pop %v2532
  %v2535 = vadd.f32 %v2533, 1.0
  %v2536 = vadd.f32 %v2534, 1.0
  %v2537 = vmul.f32 %v2529, %v2535
  %v2538 = vmul.f32 %v2530, %v2536
  %v2539 = vpack.c.bf16 %v2538, %v2537
  %v2540 = vlaneseq
  %v2541 = vshrl.u32 %v2540, 7
  %v2542 = vsub.s32 5, %v2541
  %v2543 = vrot.slane %v1385, %v2542
  %v2552 = vunpack.c.l.b16 %v1376
  %v2553 = vunpack.c.l.b16 %v1377
  %v2554 = vunpack.c.l.b16 %v1378
  %v2555 = vunpack.c.l.b16 %v1379
  %v2556 = vunpack.c.l.b16 %v1380
  %v2557 = vunpack.c.l.b16 %v1381
  %v2558 = vunpack.c.l.b16 %v1382
  %v2559 = vunpack.c.l.b16 %v1383
  %v2560 = vpack.c.b16 %v2553, %v2552
  %v2561 = vpack.c.b16 %v2555, %v2554
  %v2562 = vpack.c.b16 %v2557, %v2556
  %v2563 = vpack.c.b16 %v2559, %v2558
  %v2569 = vsel %vm1281, %v2539, 0
  %2571 = vmatprep.subr.bf16.mxu0 0
  %2572 = vmatpush1.bf16.msra.mxu0 %v2560
  %2573 = vmatprep.subr.bf16.mxu0 0
  %2574 = vmatpush1.bf16.msra.mxu0 %v2561
  %2575 = vmatprep.subr.bf16.mxu0 0
  %2576 = vmatpush1.bf16.msra.mxu0 %v2562
  %2577 = vmatprep.subr.bf16.mxu0 0
  %2578 = vmatpush1.bf16.msra.mxu0 %v2563
  %2579 = vmatprep.subr.bf16.mxu0 0
  %2580 = vmatpush1.bf16.msra.mxu0 0
  %2581 = vmatprep.subr.bf16.mxu0 0
  %2582 = vmatpush1.bf16.msra.mxu0 0
  %2583 = vmatprep.subr.bf16.mxu0 0
  %2584 = vmatpush1.bf16.msra.mxu0 0
  %2585 = vmatprep.subr.bf16.mxu0 0
  %2586 = vmatpush1.bf16.msra.mxu0 0
  %2587 = vmatprep.subr.bf16.mxu0 0
  %2588 = vmatpush1.bf16.msra.mxu0 0
  %2589 = vmatprep.subr.bf16.mxu0 0
  %2590 = vmatpush1.bf16.msra.mxu0 0
  %2591 = vmatprep.subr.bf16.mxu0 0
  %2592 = vmatpush1.bf16.msra.mxu0 0
  %2593 = vmatprep.subr.bf16.mxu0 0
  %2594 = vmatpush1.bf16.msra.mxu0 0
  %2595 = vmatprep.subr.bf16.mxu0 0
  %2596 = vmatpush1.bf16.msra.mxu0 0
  %2597 = vmatprep.subr.bf16.mxu0 0
  %2598 = vmatpush1.bf16.msra.mxu0 0
  %2599 = vmatprep.subr.bf16.mxu0 0
  %2600 = vmatpush1.bf16.msra.mxu0 0
  %2601 = vmatprep.subr.bf16.mxu0 0
  %2602 = vmatpush1.bf16.msra.mxu0 0
  %2603 = vmatprep.mubr.bf16.mxu0 0
  %2604 = vmatmul.mubr.bf16.gmra.mrb[0].mxu0 %v2569
  %v2605 = vpop.f32.mrb[0].mxu0
  %v2606 = vadd.f32 %v2543, %v2605
  %v2607 = vpop.f32.mrb[0].mxu0
  %v2608 = vpop.f32.mrb[0].mxu0
  %v2609 = vadd.f32 %v2543, %v2608
  %v2610 = vpop.f32.mrb[0].mxu0
  %2611 = vdwg.mxu0
  %v2612 = vadd.f32 %v2606, %v2466
  %v2613 = vadd.f32 %v2609, %v2467
  %v2614 = vsel %vm38, %v2612, 0.0
  %2615 = vadd.xlane.f32.xlu0 %v2614
  %v2616 = vpop.xlane.xlu0 %2615
  %v2617 = vsel %vm38, %v2613, 0.0
  %2618 = vadd.xlane.f32.xlu0 %v2617
  %v2619 = vpop.xlane.xlu0 %2618
  %v2620 = vmul.f32 %v2616, %v45
  %v2621 = vmul.f32 %v2619, %v45
  %v2622 = vsub.f32 %v2612, %v2620
  %v2623 = vsub.f32 %v2613, %v2621
  %v2624 = vmul.f32 %v2622, %v2622
  %v2625 = vmul.f32 %v2623, %v2623
  %v2626 = vsel %vm38, %v2624, 0.0
  %2627 = vadd.xlane.f32.xlu0 %v2626
  %v2628 = vpop.xlane.xlu0 %2627
  %v2629 = vsel %vm38, %v2625, 0.0
  %2630 = vadd.xlane.f32.xlu0 %v2629
  %v2631 = vpop.xlane.xlu0 %2630
  %v2632 = vmul.f32 %v2628, %v45
  %v2633 = vmul.f32 %v2631, %v45
  %v2634 = vadd.f32 %v2632, 1e-12
  %v2635 = vadd.f32 %v2633, 1e-12
  %v2636 = vrsqrt.pop %v2634
  %v2637 = vrsqrt.pop %v2635
  %v2638 = vmul.f32 %v2622, %v2636
  %v2639 = vmul.f32 %v2623, %v2637
  %v2640 = vlaneseq
  %v2641 = vshrl.u32 %v2640, 7
  %v2642 = vsub.s32 6, %v2641
  %v2643 = vrot.slane %v1385, %v2642
  %v2644 = vmul.f32 %v2638, %v2643
  %v2645 = vmul.f32 %v2639, %v2643
  %v2646 = vlaneseq
  %v2647 = vshrl.u32 %v2646, 7
  %v2648 = vsub.s32 7, %v2647
  %v2649 = vrot.slane %v1385, %v2648
  %v2650 = vadd.f32 %v2644, %v2649
  %v2651 = vadd.f32 %v2645, %v2649
  %v2652 = vpack.c.bf16 %v2651, %v2650
  %v2653 = vld [vmem:[%s6] sm:$0xf]
  %v2654 = vld [vmem:[%s6 + $0x8] sm:$0xf]
  %v2655 = vld [vmem:[%s6 + $0x10] sm:$0xf]
  %v2656 = vld [vmem:[%s6 + $0x18] sm:$0xf]
  %v2657 = vlaneseq
  %v2658 = vshrl.u32 %v2657, 7
  %v2659 = vsub.s32 2, %v2658
  %v2660 = vrot.slane %v35, %v2659
  %v2665 = vunpack.c.l.b16 %v2653
  %v2666 = vunpack.c.l.b16 %v2654
  %v2667 = vunpack.c.l.b16 %v2655
  %v2668 = vunpack.c.l.b16 %v2656
  %v2669 = vpack.c.b16 %v2666, %v2665
  %v2670 = vpack.c.b16 %v2668, %v2667
  %v2674 = vsel %vm38, %v2652, 0
  %2676 = vmatprep.subr.bf16.mxu0 0
  %2677 = vmatpush1.bf16.msra.mxu0 %v2669
  %2678 = vmatprep.subr.bf16.mxu0 0
  %2679 = vmatpush1.bf16.msra.mxu0 %v2670
  %2680 = vmatprep.subr.bf16.mxu0 0
  %2681 = vmatpush1.bf16.msra.mxu0 0
  %2682 = vmatprep.subr.bf16.mxu0 0
  %2683 = vmatpush1.bf16.msra.mxu0 0
  %2684 = vmatprep.subr.bf16.mxu0 0
  %2685 = vmatpush1.bf16.msra.mxu0 0
  %2686 = vmatprep.subr.bf16.mxu0 0
  %2687 = vmatpush1.bf16.msra.mxu0 0
  %2688 = vmatprep.subr.bf16.mxu0 0
  %2689 = vmatpush1.bf16.msra.mxu0 0
  %2690 = vmatprep.subr.bf16.mxu0 0
  %2691 = vmatpush1.bf16.msra.mxu0 0
  %2692 = vmatprep.subr.bf16.mxu0 0
  %2693 = vmatpush1.bf16.msra.mxu0 0
  %2694 = vmatprep.subr.bf16.mxu0 0
  %2695 = vmatpush1.bf16.msra.mxu0 0
  %2696 = vmatprep.subr.bf16.mxu0 0
  %2697 = vmatpush1.bf16.msra.mxu0 0
  %2698 = vmatprep.subr.bf16.mxu0 0
  %2699 = vmatpush1.bf16.msra.mxu0 0
  %2700 = vmatprep.subr.bf16.mxu0 0
  %2701 = vmatpush1.bf16.msra.mxu0 0
  %2702 = vmatprep.subr.bf16.mxu0 0
  %2703 = vmatpush1.bf16.msra.mxu0 0
  %2704 = vmatprep.subr.bf16.mxu0 0
  %2705 = vmatpush1.bf16.msra.mxu0 0
  %2706 = vmatprep.subr.bf16.mxu0 0
  %2707 = vmatpush1.bf16.msra.mxu0 0
  %2708 = vmatprep.mubr.bf16.mxu0 0
  %2709 = vmatmul.mubr.bf16.gmra.mrb[0].mxu0 %v2674
  %v2710 = vpop.f32.mrb[0].mxu0
  %v2711 = vadd.f32 %v2660, %v2710
  %v2712 = vpop.f32.mrb[0].mxu0
  %v2713 = vpop.f32.mrb[0].mxu0
  %v2714 = vadd.f32 %v2660, %v2713
  %v2715 = vpop.f32.mrb[0].mxu0
  %2716 = vdwg.mxu0
  %v2717 = vtanh.pop %v2711
  %v2718 = vtanh.pop %v2714
  %v2719 = vpack.c.bf16 %v2718, %v2717
  %v2720 = vld [vmem:[%s6 + $0x4] sm:$0xf]
  %v2721 = vld [vmem:[%s6 + $0xc] sm:$0xf]
  %v2722 = vld [vmem:[%s6 + $0x14] sm:$0xf]
  %v2723 = vld [vmem:[%s6 + $0x1c] sm:$0xf]
  %v2724 = vlaneseq
  %v2725 = vshrl.u32 %v2724, 7
  %v2726 = vsub.s32 3, %v2725
  %v2727 = vrot.slane %v35, %v2726
  %v2732 = vunpack.c.l.b16 %v2720
  %v2733 = vunpack.c.l.b16 %v2721
  %v2734 = vunpack.c.l.b16 %v2722
  %v2735 = vunpack.c.l.b16 %v2723
  %v2736 = vpack.c.b16 %v2733, %v2732
  %v2737 = vpack.c.b16 %v2735, %v2734
  %v2741 = vsel %vm38, %v2719, 0
  %2743 = vmatprep.subr.bf16.mxu0 0
  %2744 = vmatpush1.bf16.msra.mxu0 %v2736
  %2745 = vmatprep.subr.bf16.mxu0 0
  %2746 = vmatpush1.bf16.msra.mxu0 %v2737
  %2747 = vmatprep.subr.bf16.mxu0 0
  %2748 = vmatpush1.bf16.msra.mxu0 0
  %2749 = vmatprep.subr.bf16.mxu0 0
  %2750 = vmatpush1.bf16.msra.mxu0 0
  %2751 = vmatprep.subr.bf16.mxu0 0
  %2752 = vmatpush1.bf16.msra.mxu0 0
  %2753 = vmatprep.subr.bf16.mxu0 0
  %2754 = vmatpush1.bf16.msra.mxu0 0
  %2755 = vmatprep.subr.bf16.mxu0 0
  %2756 = vmatpush1.bf16.msra.mxu0 0
  %2757 = vmatprep.subr.bf16.mxu0 0
  %2758 = vmatpush1.bf16.msra.mxu0 0
  %2759 = vmatprep.subr.bf16.mxu0 0
  %2760 = vmatpush1.bf16.msra.mxu0 0
  %2761 = vmatprep.subr.bf16.mxu0 0
  %2762 = vmatpush1.bf16.msra.mxu0 0
  %2763 = vmatprep.subr.bf16.mxu0 0
  %2764 = vmatpush1.bf16.msra.mxu0 0
  %2765 = vmatprep.subr.bf16.mxu0 0
  %2766 = vmatpush1.bf16.msra.mxu0 0
  %2767 = vmatprep.subr.bf16.mxu0 0
  %2768 = vmatpush1.bf16.msra.mxu0 0
  %2769 = vmatprep.subr.bf16.mxu0 0
  %2770 = vmatpush1.bf16.msra.mxu0 0
  %2771 = vmatprep.subr.bf16.mxu0 0
  %2772 = vmatpush1.bf16.msra.mxu0 0
  %2773 = vmatprep.subr.bf16.mxu0 0
  %2774 = vmatpush1.bf16.msra.mxu0 0
  %2775 = vmatprep.mubr.bf16.mxu0 0
  %2776 = vmatmul.mubr.bf16.gmra.mrb[0].mxu0 %v2741
  %v2777 = vpop.f32.mrb[0].mxu0
  %v2778 = vadd.f32 %v2727, %v2777
  %v2779 = vpop.f32.mrb[0].mxu0
  %v2780 = vpop.f32.mrb[0].mxu0
  %v2781 = vadd.f32 %v2727, %v2780
  %v2782 = vpop.f32.mrb[0].mxu0
  %2783 = vdwg.mxu0
  %2784 = vst [vmem:[%s7] sm:$0xff] %v2778
  %2785 = vst [vmem:[%s7 + $0x8] sm:$0xff] %v2781
  // Predicated region
  $region30: #{bert_classifier_forward.1} parent=0 // pred_check
    _
  $region31: #{bert_classifier_forward.1} parent=0 // pred_check_branch
    %2787 = sbr.rel (0) target = $region33
  $region32: #{bert_classifier_forward.1} parent=0 // pred_region
    _
  $region33: #{bert_classifier_forward.1} parent=0 // pred_fallthru
    _
  // Predicated region
  $region34: #{bert_classifier_forward.1} parent=0 // pred_check
    _
  $region35: #{bert_classifier_forward.1} parent=0 // pred_check_branch
    %2789 = sbr.rel (0) target = $region37
  $region36: #{bert_classifier_forward.1} parent=0 // pred_region
    _
  $region37: #{bert_classifier_forward.1} parent=0 // pred_fallthru
    _

</llo_original>
